<compile_context>
chip_gen: v7x
topology: tpu7x:2x2x1
jax: 0.10.0
libtpu: 0.0.40
codegen_flags: <defaults>
</compile_context>

<pallas_src>
import functools

import jax
import jax.numpy as jnp
from jax import lax
from jax.experimental import pallas as pl
from jax.experimental.pallas import tpu as pltpu


def _sigmoid_via_tanh(x):
    # One EUP push (tanh) instead of exp + reciprocal.
    return 0.5 * jnp.tanh(0.5 * x) + 0.5


def _fused_bilstm_kernel(xf_ref, xb_ref, wih_f_ref, wih_b_ref,
                         whh_f_ref, whh_b_ref, bf_ref, bb_ref,
                         of_ref, ob_ref,
                         gf_scr, gb_scr, hf_scr, cf_scr, hb_scr, cb_scr,
                         *, seq_len, num_chunks, batch, unroll):
    """Fused bidirectional LSTM over one time chunk (both directions).

    xf_ref/xb_ref : (tc*B, D) layer-input rows; fwd chunk i / bwd chunk
                    (num_chunks-1-i). Row r = (time r//B, batch r%B).
    wih_*         : (4, D, H) input->gate weights, gate-major (i, f, g, o).
    whh_*         : (4, H, H) hidden->gate weights, gate-major.
    b*_ref        : (4, 1, H) f32 bias (b_ih + b_hh), gate-major.
    of/ob_ref     : (tc*B, H) hidden-state outputs.
    g*_scr        : (4*tc*B, H) f32 gate pre-activations (gate-major blocks).
    h*/c*_scr     : (B, H) f32 recurrent state; persists across grid steps.
    """
    TCB, D = xf_ref.shape
    B = batch
    TC = TCB // B
    H = whh_f_ref.shape[1]
    f32 = jnp.float32

    i = pl.program_id(0)
    padded = (num_chunks * TC != seq_len)      # trace-time flag

    @pl.when(i == 0)
    def _():
        hf_scr[...] = jnp.zeros_like(hf_scr)
        cf_scr[...] = jnp.zeros_like(cf_scr)
        hb_scr[...] = jnp.zeros_like(hb_scr)
        cb_scr[...] = jnp.zeros_like(cb_scr)

    # ---- chunk-level input projection (hoisted out of the serial loop) -----
    def project(x, wih_ref, b_ref, g_scr, chunk_idx):
        if padded:
            # Zero the gate pre-activations of padded time steps so that, with
            # zero initial state, padded steps keep (h, c) exactly zero.  This
            # is what makes the reverse direction's leading padded steps
            # harmless.  Only traced in when padding actually exists.
            rows = lax.broadcasted_iota(jnp.int32, (TCB, 1), 0)
            t_global = chunk_idx * TC + rows // B
            valid = (t_global < seq_len).astype(f32)
        for k in range(4):
            g = jnp.dot(x, wih_ref[k], preferred_element_type=f32)
            g = g + b_ref[k]
            if padded:
                g = g * valid
            g_scr[k * TCB:(k + 1) * TCB, :] = g

    project(xf_ref[...], wih_f_ref, bf_ref, gf_scr, i)
    project(xb_ref[...], wih_b_ref, bb_ref, gb_scr, num_chunks - 1 - i)

    # ---- serial recurrence: h/c live in vregs (fori_loop carry) ------------
    def cell(g_scr, t_row, h, c, whh_ref):
        hw = h.astype(whh_ref.dtype)

        def gate(k):
            r = pl.multiple_of(k * TCB + t_row, 8)
            pre = g_scr[pl.ds(r, B), :]
            return pre + jnp.dot(hw, whh_ref[k], preferred_element_type=f32)

        i_g = _sigmoid_via_tanh(gate(0))
        f_g = _sigmoid_via_tanh(gate(1))
        g_g = jnp.tanh(gate(2))
        o_g = _sigmoid_via_tanh(gate(3))
        c_new = f_g * c + i_g * g_g
        h_new = o_g * jnp.tanh(c_new)
        return h_new, c_new

    def step(s, carry):
        # Two independent dependency chains per iteration (fwd step s, bwd
        # step TC-1-s); the unrolled loop lets the scheduler interleave their
        # matmul / EUP / store latency across timesteps.
        h_f, c_f, h_b, c_b = carry
        rf = pl.multiple_of(s * B, 8)
        h_f, c_f = cell(gf_scr, rf, h_f, c_f, whh_f_ref)
        of_ref[pl.ds(rf, B), :] = h_f.astype(of_ref.dtype)
        rb = pl.multiple_of((TC - 1 - s) * B, 8)
        h_b, c_b = cell(gb_scr, rb, h_b, c_b, whh_b_ref)
        ob_ref[pl.ds(rb, B), :] = h_b.astype(ob_ref.dtype)
        return h_f, c_f, h_b, c_b

    carry0 = (hf_scr[...], cf_scr[...], hb_scr[...], cb_scr[...])
    h_f, c_f, h_b, c_b = lax.fori_loop(0, TC, step, carry0, unroll=unroll)
    hf_scr[...] = h_f
    cf_scr[...] = c_f
    hb_scr[...] = h_b
    cb_scr[...] = c_b


def _arrange_ih(w, hidden):
    # (4H, D) -> (4, D, H), gate-major; w_arr[k] = W_ih[k*H:(k+1)*H, :].T
    four_h, d = w.shape
    return jnp.transpose(w.reshape(4, hidden, d), (0, 2, 1))


def _arrange_hh(w, hidden):
    # (4H, H) -> (4, H, H), gate-major; w_arr[k] = W_hh[k*H:(k+1)*H, :].T
    return jnp.transpose(w.reshape(4, hidden, hidden), (0, 2, 1))


def _bilstm_layer_tm(x_tm, layer_params, *, storage_dtype, time_chunk):
    """One bidirectional LSTM layer. x_tm: (T, B, D) time-major -> (fwd, bwd)."""
    (w_ih_f, w_hh_f, b_ih_f, b_hh_f), (w_ih_b, w_hh_b, b_ih_b, b_hh_b) = layer_params
    T, B, D = x_tm.shape
    H = w_hh_f.shape[1]
    elt = jnp.dtype(storage_dtype).itemsize

    wih_f = _arrange_ih(w_ih_f, H).astype(storage_dtype)
    wih_b = _arrange_ih(w_ih_b, H).astype(storage_dtype)
    whh_f = _arrange_hh(w_hh_f, H).astype(storage_dtype)
    whh_b = _arrange_hh(w_hh_b, H).astype(storage_dtype)
    bias_f = (b_ih_f + b_hh_f).reshape(4, 1, H).astype(jnp.float32)
    bias_b = (b_ih_b + b_hh_b).reshape(4, 1, H).astype(jnp.float32)

    # ---- derive time chunk & VMEM limit from actual VMEM capacity ----------
    try:
        vmem_cap = int(pltpu.get_tpu_info().vmem_capacity_bytes)
    except Exception:
        vmem_cap = 64 << 20            # conservative (v7x per-core VMEM)
    # Per-time-step VMEM: x chunks (2 dirs x dbl-buf) + out chunks (2 x dbl-buf)
    # + f32 gate scratch (2 dirs x 4 gates).
    per_t = B * (4 * D + 4 * H) * elt + 2 * 4 * B * H * 4
    # Resident weights (double-buffered by the pipeline), biases, state scratch.
    fixed = 2 * 2 * 4 * (D * H + H * H) * elt + 2 * 2 * 4 * H * 4 + 4 * B * H * 4
    if time_chunk is None:
        budget = int(0.55 * vmem_cap)
        tc = (budget - fixed) // max(per_t, 1)
        tc = int(max(1, min(tc, 256)))
    else:
        tc = int(time_chunk)
    tc = max(1, min(tc, T))

    n_chunks = pl.cdiv(T, tc)
    Tp = n_chunks * tc

    xs = x_tm.astype(storage_dtype)
    if Tp != T:
        xs = jnp.pad(xs, ((0, Tp - T), (0, 0), (0, 0)))
    x2d = xs.reshape(Tp * B, D)          # row r = (time r//B, batch r%B)

    # Unroll factor: divisor of tc, capped by per-step vreg footprint.
    if B * H <= 2048:
        max_unroll = 8
    elif B * H <= 8192:
        max_unroll = 4
    else:
        max_unroll = 2
    if tc <= max_unroll:
        unroll = tc
    else:
        unroll = next(u for u in (8, 4, 2, 1) if u <= max_unroll and tc % u == 0)

    need = fixed + per_t * tc
    vmem_limit = int(min(max(int(need * 1.4), 16 << 20), int(0.9 * vmem_cap)))

    cost = pl.CostEstimate(
        flops=int(16 * Tp * B * H * (H + D)),
        transcendentals=int(10 * Tp * B * H),
        bytes_accessed=int((2 * Tp * B * D + 2 * Tp * B * H) * elt
                           + 2 * 4 * (D * H + H * H) * elt),
    )

    grid_spec = pltpu.PrefetchScalarGridSpec(
        num_scalar_prefetch=0,
        grid=(n_chunks,),
        in_specs=[
            pl.BlockSpec((tc * B, D), lambda i: (i, 0)),                 # x, fwd order
            pl.BlockSpec((tc * B, D), lambda i: (n_chunks - 1 - i, 0)),  # x, bwd order
            pl.BlockSpec((4, D, H), lambda i: (0, 0, 0)),                # W_ih fwd (resident)
            pl.BlockSpec((4, D, H), lambda i: (0, 0, 0)),                # W_ih bwd
            pl.BlockSpec((4, H, H), lambda i: (0, 0, 0)),                # W_hh fwd
            pl.BlockSpec((4, H, H), lambda i: (0, 0, 0)),                # W_hh bwd
            pl.BlockSpec((4, 1, H), lambda i: (0, 0, 0)),                # bias fwd
            pl.BlockSpec((4, 1, H), lambda i: (0, 0, 0)),                # bias bwd
        ],
        out_specs=[
            pl.BlockSpec((tc * B, H), lambda i: (i, 0)),
            pl.BlockSpec((tc * B, H), lambda i: (n_chunks - 1 - i, 0)),
        ],
        scratch_shapes=[
            pltpu.VMEM((4 * tc * B, H), jnp.float32),   # fwd gate pre-activations
            pltpu.VMEM((4 * tc * B, H), jnp.float32),   # bwd gate pre-activations
            pltpu.VMEM((B, H), jnp.float32),            # h fwd
            pltpu.VMEM((B, H), jnp.float32),            # c fwd
            pltpu.VMEM((B, H), jnp.float32),            # h bwd
            pltpu.VMEM((B, H), jnp.float32),            # c bwd
        ],
    )

    kernel = functools.partial(
        _fused_bilstm_kernel,
        seq_len=T, num_chunks=n_chunks, batch=B, unroll=unroll)

    # NOTE: for production H >= 128 the (tc*B, H) output blocks are lane-dense;
    # for the tiny demo H the stores are masked but correctness is unaffected.
    of, ob = pl.pallas_call(
        kernel,
        out_shape=(jax.ShapeDtypeStruct((Tp * B, H), storage_dtype),
                   jax.ShapeDtypeStruct((Tp * B, H), storage_dtype)),
        grid_spec=grid_spec,
        compiler_params=pltpu.CompilerParams(
            dimension_semantics=("arbitrary",),   # time chunks carry the recurrence
            vmem_limit_bytes=vmem_limit),
        cost_estimate=cost,
    )(x2d, x2d, wih_f, wih_b, whh_f, whh_b, bias_f, bias_b)

    of = of.reshape(Tp, B, H)[:T]
    ob = ob.reshape(Tp, B, H)[:T]
    return of, ob


def pblstm_forward(x, params, *, storage_dtype=jnp.bfloat16, time_chunk=None):
    """pBLSTMLayer forward: (batch, dur, feat) -> (batch, dur//2, 2*hidden)."""
    batch, dur, feat = x.shape
    time_reduc = dur // 2
    # TODO(synk): PyTorch's .view raises for odd dur; we truncate the last frame.
    xr = x[:, :2 * time_reduc, :].reshape(batch, time_reduc, 2 * feat)

    # Keep the whole stack time-major: one transpose in, one out.
    x_tm = jnp.transpose(xr, (1, 0, 2))                   # (T, B, 2*feat)

    # Pad batch once to the dtype's sublane multiple (8 f32 / 16 bf16).
    sub = {4: 8, 2: 16, 1: 32}.get(jnp.dtype(storage_dtype).itemsize, 8)
    b_pad = ((batch + sub - 1) // sub) * sub
    if b_pad != batch:
        x_tm = jnp.pad(x_tm, ((0, 0), (0, b_pad - batch), (0, 0)))

    layer_in = x_tm
    for layer_params in params:
        fwd, bwd = _bilstm_layer_tm(layer_in, layer_params,
                                    storage_dtype=storage_dtype,
                                    time_chunk=time_chunk)
        # TODO(synk): nn.LSTM inter-layer dropout is train-only; eval semantics here.
        layer_in = jnp.concatenate([fwd, bwd], axis=-1)   # (T, Bp, 2H)

    return jnp.transpose(layer_in, (1, 0, 2))[:batch]     # (B, T, 2H)


def init_pblstm_params(key, input_size, hidden_size, num_layers):
    """Deterministic init matching nn.LSTM parameter shapes (bidirectional)."""
    k = 1.0 / jnp.sqrt(jnp.float32(hidden_size))
    params = []
    for l in range(num_layers):
        layer_in = input_size * 2 if l == 0 else hidden_size * 2
        dirs = []
        for _d in range(2):
            key, k1, k2, k3, k4 = jax.random.split(key, 5)
            w_ih = jax.random.uniform(k1, (4 * hidden_size, layer_in),
                                      minval=-k, maxval=k, dtype=jnp.float32)
            w_hh = jax.random.uniform(k2, (4 * hidden_size, hidden_size),
                                      minval=-k, maxval=k, dtype=jnp.float32)
            b_ih = jax.random.uniform(k3, (4 * hidden_size,),
                                      minval=-k, maxval=k, dtype=jnp.float32)
            b_hh = jax.random.uniform(k4, (4 * hidden_size,),
                                      minval=-k, maxval=k, dtype=jnp.float32)
            dirs.append((w_ih, w_hh, b_ih, b_hh))
        params.append(dirs)
    return params


# ----------------------------- pure-JAX reference ---------------------------

def _lstm_dir_reference(x_btd, w_ih, w_hh, b_ih, b_hh, *, reverse):
    B, T, _ = x_btd.shape
    H = w_hh.shape[1]
    xs = jnp.transpose(x_btd, (1, 0, 2))
    if reverse:
        xs = xs[::-1]
    b = (b_ih + b_hh)[None, :]

    def step(carry, x_t):
        h, c = carry
        gates = x_t @ w_ih.T + h @ w_hh.T + b
        i_g = jax.nn.sigmoid(gates[:, 0 * H:1 * H])
        f_g = jax.nn.sigmoid(gates[:, 1 * H:2 * H])
        g_g = jnp.tanh(gates[:, 2 * H:3 * H])
        o_g = jax.nn.sigmoid(gates[:, 3 * H:4 * H])
        c_n = f_g * c + i_g * g_g
        h_n = o_g * jnp.tanh(c_n)
        return (h_n, c_n), h_n

    init = (jnp.zeros((B, H), jnp.float32), jnp.zeros((B, H), jnp.float32))
    _, hs = lax.scan(step, init, xs)
    if reverse:
        hs = hs[::-1]
    return jnp.transpose(hs, (1, 0, 2))


def pblstm_forward_reference(x, params):
    batch, dur, feat = x.shape
    layer_in = x.reshape(batch, dur // 2, feat * 2)
    for dirs in params:
        fwd = _lstm_dir_reference(layer_in, *dirs[0], reverse=False)
        bwd = _lstm_dir_reference(layer_in, *dirs[1], reverse=True)
        layer_in = jnp.concatenate([fwd, bwd], axis=-1)
    return layer_in


if __name__ == "__main__":
    # Small shapes consistent with the module's forward:
    #   batch=2, dur=8 (halved to T=4), feat=16, hidden=32, num_layers=1
    batch, dur, feat = 2, 8, 16
    hidden_size, num_layers = 32, 1

    key = jax.random.PRNGKey(0)
    kx, kp = jax.random.split(key)
    x = jax.random.normal(kx, (batch, dur, feat), dtype=jnp.float32)
    params = init_pblstm_params(kp, feat, hidden_size, num_layers)

    ref = jax.block_until_ready(pblstm_forward_reference(x, params))

    fwd_fn = jax.jit(pblstm_forward, static_argnames=("storage_dtype", "time_chunk"))

    # f32 storage path: tight check against the pure-JAX reference.
    out_f32 = jax.block_until_ready(
        fwd_fn(x, params, storage_dtype=jnp.float32, time_chunk=4))
    assert out_f32.shape == (batch, dur // 2, 2 * hidden_size), out_f32.shape
    if not jnp.allclose(out_f32, ref, atol=5e-3, rtol=5e-3):
        raise AssertionError("Pallas pBLSTM (f32) mismatch vs JAX reference")

    # f32 path exercising time-chunked streaming with padding (tc=3 -> 2 chunks).
    out_chunked = jax.block_until_ready(
        fwd_fn(x, params, storage_dtype=jnp.float32, time_chunk=3))
    if not jnp.allclose(out_chunked, ref, atol=5e-3, rtol=5e-3):
        raise AssertionError("Pallas pBLSTM (chunked) mismatch vs JAX reference")

    # bf16 storage path with auto-derived time_chunk; f32 gate/state accumulation.
    out_bf16 = jax.block_until_ready(
        fwd_fn(x, params, storage_dtype=jnp.bfloat16))
    if not jnp.allclose(out_bf16.astype(jnp.float32), ref, atol=5e-2, rtol=5e-2):
        raise AssertionError("Pallas pBLSTM (bf16) mismatch vs JAX reference")

    print("KERNEL_OK")
</pallas_src>

<mosaic_0001>
module attributes {stable_mosaic.version = 11 : i64} {
  func.func @_fused_bilstm_kernel(%arg0: i32, %arg1: memref<32x32xf32, #tpu.memory_space<vmem>>, %arg2: memref<32x32xf32, #tpu.memory_space<vmem>>, %arg3: memref<4x32x32xf32, #tpu.memory_space<vmem>>, %arg4: memref<4x32x32xf32, #tpu.memory_space<vmem>>, %arg5: memref<4x32x32xf32, #tpu.memory_space<vmem>>, %arg6: memref<4x32x32xf32, #tpu.memory_space<vmem>>, %arg7: memref<4x1x32xf32, #tpu.memory_space<vmem>>, %arg8: memref<4x1x32xf32, #tpu.memory_space<vmem>>, %arg9: memref<32x32xf32, #tpu.memory_space<vmem>>, %arg10: memref<32x32xf32, #tpu.memory_space<vmem>>, %arg11: memref<128x32xf32, #tpu.memory_space<vmem>>, %arg12: memref<128x32xf32, #tpu.memory_space<vmem>>, %arg13: memref<8x32xf32, #tpu.memory_space<vmem>>, %arg14: memref<8x32xf32, #tpu.memory_space<vmem>>, %arg15: memref<8x32xf32, #tpu.memory_space<vmem>>, %arg16: memref<8x32xf32, #tpu.memory_space<vmem>>) attributes {dimension_semantics = [#tpu.dimension_semantics<arbitrary>], iteration_bounds = array<i64: 1>, scalar_prefetch = 0 : i64, scratch_operands = 6 : i64, tpu.core_type = #tpu.core_type<tc>, window_params = [{transform_indices = @transform_0, window_bounds = array<i64: 32, 32>}, {transform_indices = @transform_1, window_bounds = array<i64: 32, 32>}, {pipeline_mode = #tpu.pipeline_mode<synchronous>, transform_indices = @transform_2, window_bounds = array<i64: 4, 32, 32>}, {pipeline_mode = #tpu.pipeline_mode<synchronous>, transform_indices = @transform_3, window_bounds = array<i64: 4, 32, 32>}, {pipeline_mode = #tpu.pipeline_mode<synchronous>, transform_indices = @transform_4, window_bounds = array<i64: 4, 32, 32>}, {pipeline_mode = #tpu.pipeline_mode<synchronous>, transform_indices = @transform_5, window_bounds = array<i64: 4, 32, 32>}, {pipeline_mode = #tpu.pipeline_mode<synchronous>, transform_indices = @transform_6, window_bounds = array<i64: 4, 1, 32>}, {pipeline_mode = #tpu.pipeline_mode<synchronous>, transform_indices = @transform_7, window_bounds = array<i64: 4, 1, 32>}, {transform_indices = @transform_8, window_bounds = array<i64: 32, 32>}, {transform_indices = @transform_9, window_bounds = array<i64: 32, 32>}]} {
    %c0_i32 = arith.constant 0 : i32
    %0 = arith.cmpi eq, %arg0, %c0_i32 : i32
    %1 = arith.extui %0 : i1 to i32
    %c0_i32_0 = arith.constant 0 : i32
    %2 = arith.cmpi ne, %1, %c0_i32_0 : i32
    scf.if %2 {
      %cst_366 = arith.constant 0.000000e+00 : f32
      %585 = vector.broadcast %cst_366 : f32 to vector<8x32xf32>
      %c0_367 = arith.constant 0 : index
      %c0_368 = arith.constant 0 : index
      %586 = vector.load %arg13[%c0_367, %c0_368] : memref<8x32xf32, #tpu.memory_space<vmem>>, vector<8x32xf32>
      tpu.vector_store %arg13[%c0_367, %c0_368], %585 {strides = array<i32>} : memref<8x32xf32, #tpu.memory_space<vmem>>, vector<8x32xf32>,
      %cst_369 = arith.constant 0.000000e+00 : f32
      %587 = vector.broadcast %cst_369 : f32 to vector<8x32xf32>
      %c0_370 = arith.constant 0 : index
      %c0_371 = arith.constant 0 : index
      %588 = vector.load %arg14[%c0_370, %c0_371] : memref<8x32xf32, #tpu.memory_space<vmem>>, vector<8x32xf32>
      tpu.vector_store %arg14[%c0_370, %c0_371], %587 {strides = array<i32>} : memref<8x32xf32, #tpu.memory_space<vmem>>, vector<8x32xf32>,
      %cst_372 = arith.constant 0.000000e+00 : f32
      %589 = vector.broadcast %cst_372 : f32 to vector<8x32xf32>
      %c0_373 = arith.constant 0 : index
      %c0_374 = arith.constant 0 : index
      %590 = vector.load %arg15[%c0_373, %c0_374] : memref<8x32xf32, #tpu.memory_space<vmem>>, vector<8x32xf32>
      tpu.vector_store %arg15[%c0_373, %c0_374], %589 {strides = array<i32>} : memref<8x32xf32, #tpu.memory_space<vmem>>, vector<8x32xf32>,
      %cst_375 = arith.constant 0.000000e+00 : f32
      %591 = vector.broadcast %cst_375 : f32 to vector<8x32xf32>
      %c0_376 = arith.constant 0 : index
      %c0_377 = arith.constant 0 : index
      %592 = vector.load %arg16[%c0_376, %c0_377] : memref<8x32xf32, #tpu.memory_space<vmem>>, vector<8x32xf32>
      tpu.vector_store %arg16[%c0_376, %c0_377], %591 {strides = array<i32>} : memref<8x32xf32, #tpu.memory_space<vmem>>, vector<8x32xf32>,
    } else {
    }
    %c0 = arith.constant 0 : index
    %c0_1 = arith.constant 0 : index
    %3 = vector.load %arg1[%c0, %c0_1] : memref<32x32xf32, #tpu.memory_space<vmem>>, vector<32x32xf32>
    %c0_2 = arith.constant 0 : index
    %c0_3 = arith.constant 0 : index
    %c0_4 = arith.constant 0 : index
    %4 = vector.load %arg3[%c0_2, %c0_3, %c0_4] : memref<4x32x32xf32, #tpu.memory_space<vmem>>, vector<1x32x32xf32>
    %5 = vector.shape_cast %4 : vector<1x32x32xf32> to vector<32x32xf32>
    %cst = arith.constant dense<0.000000e+00> : vector<32x32xf32>
    %6 = tpu.matmul %3, %5, %cst {dimension_numbers = #tpu.dot_dimension_numbers<[1], [0], [0], [1], [0, 0, 1, 1], [], []>} : vector<32x32xf32>, vector<32x32xf32>, vector<32x32xf32> -> vector<32x32xf32>
    %c0_5 = arith.constant 0 : index
    %c0_6 = arith.constant 0 : index
    %c0_7 = arith.constant 0 : index
    %7 = vector.load %arg7[%c0_5, %c0_6, %c0_7] : memref<4x1x32xf32, #tpu.memory_space<vmem>>, vector<1x1x32xf32>
    %8 = vector.shape_cast %7 : vector<1x1x32xf32> to vector<1x32xf32>
    %9 = vector.broadcast %8 : vector<1x32xf32> to vector<32x32xf32>
    %10 = arith.addf %6, %9 : vector<32x32xf32>
    %c0_8 = arith.constant 0 : index
    %c0_9 = arith.constant 0 : index
    %11 = vector.load %arg11[%c0_8, %c0_9] : memref<128x32xf32, #tpu.memory_space<vmem>>, vector<32x32xf32>
    tpu.vector_store %arg11[%c0_8, %c0_9], %10 {strides = array<i32>} : memref<128x32xf32, #tpu.memory_space<vmem>>, vector<32x32xf32>,
    %c1 = arith.constant 1 : index
    %c0_10 = arith.constant 0 : index
    %c0_11 = arith.constant 0 : index
    %12 = vector.load %arg3[%c1, %c0_10, %c0_11] : memref<4x32x32xf32, #tpu.memory_space<vmem>>, vector<1x32x32xf32>
    %13 = vector.shape_cast %12 : vector<1x32x32xf32> to vector<32x32xf32>
    %cst_12 = arith.constant dense<0.000000e+00> : vector<32x32xf32>
    %14 = tpu.matmul %3, %13, %cst_12 {dimension_numbers = #tpu.dot_dimension_numbers<[1], [0], [0], [1], [0, 0, 1, 1], [], []>} : vector<32x32xf32>, vector<32x32xf32>, vector<32x32xf32> -> vector<32x32xf32>
    %c1_13 = arith.constant 1 : index
    %c0_14 = arith.constant 0 : index
    %c0_15 = arith.constant 0 : index
    %15 = vector.load %arg7[%c1_13, %c0_14, %c0_15] : memref<4x1x32xf32, #tpu.memory_space<vmem>>, vector<1x1x32xf32>
    %16 = vector.shape_cast %15 : vector<1x1x32xf32> to vector<1x32xf32>
    %17 = vector.broadcast %16 : vector<1x32xf32> to vector<32x32xf32>
    %18 = arith.addf %14, %17 : vector<32x32xf32>
    %c32 = arith.constant 32 : index
    %c0_16 = arith.constant 0 : index
    %19 = vector.load %arg11[%c32, %c0_16] : memref<128x32xf32, #tpu.memory_space<vmem>>, vector<32x32xf32>
    tpu.vector_store %arg11[%c32, %c0_16], %18 {strides = array<i32>} : memref<128x32xf32, #tpu.memory_space<vmem>>, vector<32x32xf32>,
    %c2 = arith.constant 2 : index
    %c0_17 = arith.constant 0 : index
    %c0_18 = arith.constant 0 : index
    %20 = vector.load %arg3[%c2, %c0_17, %c0_18] : memref<4x32x32xf32, #tpu.memory_space<vmem>>, vector<1x32x32xf32>
    %21 = vector.shape_cast %20 : vector<1x32x32xf32> to vector<32x32xf32>
    %cst_19 = arith.constant dense<0.000000e+00> : vector<32x32xf32>
    %22 = tpu.matmul %3, %21, %cst_19 {dimension_numbers = #tpu.dot_dimension_numbers<[1], [0], [0], [1], [0, 0, 1, 1], [], []>} : vector<32x32xf32>, vector<32x32xf32>, vector<32x32xf32> -> vector<32x32xf32>
    %c2_20 = arith.constant 2 : index
    %c0_21 = arith.constant 0 : index
    %c0_22 = arith.constant 0 : index
    %23 = vector.load %arg7[%c2_20, %c0_21, %c0_22] : memref<4x1x32xf32, #tpu.memory_space<vmem>>, vector<1x1x32xf32>
    %24 = vector.shape_cast %23 : vector<1x1x32xf32> to vector<1x32xf32>
    %25 = vector.broadcast %24 : vector<1x32xf32> to vector<32x32xf32>
    %26 = arith.addf %22, %25 : vector<32x32xf32>
    %c64 = arith.constant 64 : index
    %c0_23 = arith.constant 0 : index
    %27 = vector.load %arg11[%c64, %c0_23] : memref<128x32xf32, #tpu.memory_space<vmem>>, vector<32x32xf32>
    tpu.vector_store %arg11[%c64, %c0_23], %26 {strides = array<i32>} : memref<128x32xf32, #tpu.memory_space<vmem>>, vector<32x32xf32>,
    %c3 = arith.constant 3 : index
    %c0_24 = arith.constant 0 : index
    %c0_25 = arith.constant 0 : index
    %28 = vector.load %arg3[%c3, %c0_24, %c0_25] : memref<4x32x32xf32, #tpu.memory_space<vmem>>, vector<1x32x32xf32>
    %29 = vector.shape_cast %28 : vector<1x32x32xf32> to vector<32x32xf32>
    %cst_26 = arith.constant dense<0.000000e+00> : vector<32x32xf32>
    %30 = tpu.matmul %3, %29, %cst_26 {dimension_numbers = #tpu.dot_dimension_numbers<[1], [0], [0], [1], [0, 0, 1, 1], [], []>} : vector<32x32xf32>, vector<32x32xf32>, vector<32x32xf32> -> vector<32x32xf32>
    %c3_27 = arith.constant 3 : index
    %c0_28 = arith.constant 0 : index
    %c0_29 = arith.constant 0 : index
    %31 = vector.load %arg7[%c3_27, %c0_28, %c0_29] : memref<4x1x32xf32, #tpu.memory_space<vmem>>, vector<1x1x32xf32>
    %32 = vector.shape_cast %31 : vector<1x1x32xf32> to vector<1x32xf32>
    %33 = vector.broadcast %32 : vector<1x32xf32> to vector<32x32xf32>
    %34 = arith.addf %30, %33 : vector<32x32xf32>
    %c96 = arith.constant 96 : index
    %c0_30 = arith.constant 0 : index
    %35 = vector.load %arg11[%c96, %c0_30] : memref<128x32xf32, #tpu.memory_space<vmem>>, vector<32x32xf32>
    tpu.vector_store %arg11[%c96, %c0_30], %34 {strides = array<i32>} : memref<128x32xf32, #tpu.memory_space<vmem>>, vector<32x32xf32>,
    %c0_31 = arith.constant 0 : index
    %c0_32 = arith.constant 0 : index
    %36 = vector.load %arg2[%c0_31, %c0_32] : memref<32x32xf32, #tpu.memory_space<vmem>>, vector<32x32xf32>
    %c0_33 = arith.constant 0 : index
    %c0_34 = arith.constant 0 : index
    %c0_35 = arith.constant 0 : index
    %37 = vector.load %arg4[%c0_33, %c0_34, %c0_35] : memref<4x32x32xf32, #tpu.memory_space<vmem>>, vector<1x32x32xf32>
    %38 = vector.shape_cast %37 : vector<1x32x32xf32> to vector<32x32xf32>
    %cst_36 = arith.constant dense<0.000000e+00> : vector<32x32xf32>
    %39 = tpu.matmul %36, %38, %cst_36 {dimension_numbers = #tpu.dot_dimension_numbers<[1], [0], [0], [1], [0, 0, 1, 1], [], []>} : vector<32x32xf32>, vector<32x32xf32>, vector<32x32xf32> -> vector<32x32xf32>
    %c0_37 = arith.constant 0 : index
    %c0_38 = arith.constant 0 : index
    %c0_39 = arith.constant 0 : index
    %40 = vector.load %arg8[%c0_37, %c0_38, %c0_39] : memref<4x1x32xf32, #tpu.memory_space<vmem>>, vector<1x1x32xf32>
    %41 = vector.shape_cast %40 : vector<1x1x32xf32> to vector<1x32xf32>
    %42 = vector.broadcast %41 : vector<1x32xf32> to vector<32x32xf32>
    %43 = arith.addf %39, %42 : vector<32x32xf32>
    %c0_40 = arith.constant 0 : index
    %c0_41 = arith.constant 0 : index
    %44 = vector.load %arg12[%c0_40, %c0_41] : memref<128x32xf32, #tpu.memory_space<vmem>>, vector<32x32xf32>
    tpu.vector_store %arg12[%c0_40, %c0_41], %43 {strides = array<i32>} : memref<128x32xf32, #tpu.memory_space<vmem>>, vector<32x32xf32>,
    %c1_42 = arith.constant 1 : index
    %c0_43 = arith.constant 0 : index
    %c0_44 = arith.constant 0 : index
    %45 = vector.load %arg4[%c1_42, %c0_43, %c0_44] : memref<4x32x32xf32, #tpu.memory_space<vmem>>, vector<1x32x32xf32>
    %46 = vector.shape_cast %45 : vector<1x32x32xf32> to vector<32x32xf32>
    %cst_45 = arith.constant dense<0.000000e+00> : vector<32x32xf32>
    %47 = tpu.matmul %36, %46, %cst_45 {dimension_numbers = #tpu.dot_dimension_numbers<[1], [0], [0], [1], [0, 0, 1, 1], [], []>} : vector<32x32xf32>, vector<32x32xf32>, vector<32x32xf32> -> vector<32x32xf32>
    %c1_46 = arith.constant 1 : index
    %c0_47 = arith.constant 0 : index
    %c0_48 = arith.constant 0 : index
    %48 = vector.load %arg8[%c1_46, %c0_47, %c0_48] : memref<4x1x32xf32, #tpu.memory_space<vmem>>, vector<1x1x32xf32>
    %49 = vector.shape_cast %48 : vector<1x1x32xf32> to vector<1x32xf32>
    %50 = vector.broadcast %49 : vector<1x32xf32> to vector<32x32xf32>
    %51 = arith.addf %47, %50 : vector<32x32xf32>
    %c32_49 = arith.constant 32 : index
    %c0_50 = arith.constant 0 : index
    %52 = vector.load %arg12[%c32_49, %c0_50] : memref<128x32xf32, #tpu.memory_space<vmem>>, vector<32x32xf32>
    tpu.vector_store %arg12[%c32_49, %c0_50], %51 {strides = array<i32>} : memref<128x32xf32, #tpu.memory_space<vmem>>, vector<32x32xf32>,
    %c2_51 = arith.constant 2 : index
    %c0_52 = arith.constant 0 : index
    %c0_53 = arith.constant 0 : index
    %53 = vector.load %arg4[%c2_51, %c0_52, %c0_53] : memref<4x32x32xf32, #tpu.memory_space<vmem>>, vector<1x32x32xf32>
    %54 = vector.shape_cast %53 : vector<1x32x32xf32> to vector<32x32xf32>
    %cst_54 = arith.constant dense<0.000000e+00> : vector<32x32xf32>
    %55 = tpu.matmul %36, %54, %cst_54 {dimension_numbers = #tpu.dot_dimension_numbers<[1], [0], [0], [1], [0, 0, 1, 1], [], []>} : vector<32x32xf32>, vector<32x32xf32>, vector<32x32xf32> -> vector<32x32xf32>
    %c2_55 = arith.constant 2 : index
    %c0_56 = arith.constant 0 : index
    %c0_57 = arith.constant 0 : index
    %56 = vector.load %arg8[%c2_55, %c0_56, %c0_57] : memref<4x1x32xf32, #tpu.memory_space<vmem>>, vector<1x1x32xf32>
    %57 = vector.shape_cast %56 : vector<1x1x32xf32> to vector<1x32xf32>
    %58 = vector.broadcast %57 : vector<1x32xf32> to vector<32x32xf32>
    %59 = arith.addf %55, %58 : vector<32x32xf32>
    %c64_58 = arith.constant 64 : index
    %c0_59 = arith.constant 0 : index
    %60 = vector.load %arg12[%c64_58, %c0_59] : memref<128x32xf32, #tpu.memory_space<vmem>>, vector<32x32xf32>
    tpu.vector_store %arg12[%c64_58, %c0_59], %59 {strides = array<i32>} : memref<128x32xf32, #tpu.memory_space<vmem>>, vector<32x32xf32>,
    %c3_60 = arith.constant 3 : index
    %c0_61 = arith.constant 0 : index
    %c0_62 = arith.constant 0 : index
    %61 = vector.load %arg4[%c3_60, %c0_61, %c0_62] : memref<4x32x32xf32, #tpu.memory_space<vmem>>, vector<1x32x32xf32>
    %62 = vector.shape_cast %61 : vector<1x32x32xf32> to vector<32x32xf32>
    %cst_63 = arith.constant dense<0.000000e+00> : vector<32x32xf32>
    %63 = tpu.matmul %36, %62, %cst_63 {dimension_numbers = #tpu.dot_dimension_numbers<[1], [0], [0], [1], [0, 0, 1, 1], [], []>} : vector<32x32xf32>, vector<32x32xf32>, vector<32x32xf32> -> vector<32x32xf32>
    %c3_64 = arith.constant 3 : index
    %c0_65 = arith.constant 0 : index
    %c0_66 = arith.constant 0 : index
    %64 = vector.load %arg8[%c3_64, %c0_65, %c0_66] : memref<4x1x32xf32, #tpu.memory_space<vmem>>, vector<1x1x32xf32>
    %65 = vector.shape_cast %64 : vector<1x1x32xf32> to vector<1x32xf32>
    %66 = vector.broadcast %65 : vector<1x32xf32> to vector<32x32xf32>
    %67 = arith.addf %63, %66 : vector<32x32xf32>
    %c96_67 = arith.constant 96 : index
    %c0_68 = arith.constant 0 : index
    %68 = vector.load %arg12[%c96_67, %c0_68] : memref<128x32xf32, #tpu.memory_space<vmem>>, vector<32x32xf32>
    tpu.vector_store %arg12[%c96_67, %c0_68], %67 {strides = array<i32>} : memref<128x32xf32, #tpu.memory_space<vmem>>, vector<32x32xf32>,
    %c0_69 = arith.constant 0 : index
    %c0_70 = arith.constant 0 : index
    %69 = vector.load %arg13[%c0_69, %c0_70] : memref<8x32xf32, #tpu.memory_space<vmem>>, vector<8x32xf32>
    %c0_71 = arith.constant 0 : index
    %c0_72 = arith.constant 0 : index
    %70 = vector.load %arg14[%c0_71, %c0_72] : memref<8x32xf32, #tpu.memory_space<vmem>>, vector<8x32xf32>
    %c0_73 = arith.constant 0 : index
    %c0_74 = arith.constant 0 : index
    %71 = vector.load %arg15[%c0_73, %c0_74] : memref<8x32xf32, #tpu.memory_space<vmem>>, vector<8x32xf32>
    %c0_75 = arith.constant 0 : index
    %c0_76 = arith.constant 0 : index
    %72 = vector.load %arg16[%c0_75, %c0_76] : memref<8x32xf32, #tpu.memory_space<vmem>>, vector<8x32xf32>
    %c0_i32_77 = arith.constant 0 : i32
    %c8_i32 = arith.constant 8 : i32
    %73 = arith.muli %c0_i32_77, %c8_i32 : i32
    %74 = tpu.assume_multiple %73, 8 : i32
    %c0_i32_78 = arith.constant 0 : i32
    %75 = arith.addi %c0_i32_78, %74 : i32
    %76 = tpu.assume_multiple %75, 8 : i32
    %77 = arith.index_cast %76 : i32 to index
    %c0_79 = arith.constant 0 : index
    %78 = vector.load %arg11[%77, %c0_79] : memref<128x32xf32, #tpu.memory_space<vmem>>, vector<8x32xf32>
    %c0_80 = arith.constant 0 : index
    %c0_81 = arith.constant 0 : index
    %c0_82 = arith.constant 0 : index
    %79 = vector.load %arg5[%c0_80, %c0_81, %c0_82] : memref<4x32x32xf32, #tpu.memory_space<vmem>>, vector<1x32x32xf32>
    %80 = vector.shape_cast %79 : vector<1x32x32xf32> to vector<32x32xf32>
    %cst_83 = arith.constant dense<0.000000e+00> : vector<8x32xf32>
    %81 = tpu.matmul %69, %80, %cst_83 {dimension_numbers = #tpu.dot_dimension_numbers<[1], [0], [0], [1], [0, 0, 1, 1], [], []>} : vector<8x32xf32>, vector<32x32xf32>, vector<8x32xf32> -> vector<8x32xf32>
    %82 = arith.addf %78, %81 : vector<8x32xf32>
    %cst_84 = arith.constant 5.000000e-01 : f32
    %83 = vector.broadcast %cst_84 : f32 to vector<8x32xf32>
    %84 = arith.mulf %83, %82 : vector<8x32xf32>
    %85 = math.tanh %84 : vector<8x32xf32>
    %cst_85 = arith.constant 5.000000e-01 : f32
    %86 = vector.broadcast %cst_85 : f32 to vector<8x32xf32>
    %87 = arith.mulf %86, %85 : vector<8x32xf32>
    %cst_86 = arith.constant 5.000000e-01 : f32
    %88 = vector.broadcast %cst_86 : f32 to vector<8x32xf32>
    %89 = arith.addf %87, %88 : vector<8x32xf32>
    %c32_i32 = arith.constant 32 : i32
    %90 = arith.addi %c32_i32, %74 : i32
    %91 = tpu.assume_multiple %90, 8 : i32
    %92 = arith.index_cast %91 : i32 to index
    %c0_87 = arith.constant 0 : index
    %93 = vector.load %arg11[%92, %c0_87] : memref<128x32xf32, #tpu.memory_space<vmem>>, vector<8x32xf32>
    %c1_88 = arith.constant 1 : index
    %c0_89 = arith.constant 0 : index
    %c0_90 = arith.constant 0 : index
    %94 = vector.load %arg5[%c1_88, %c0_89, %c0_90] : memref<4x32x32xf32, #tpu.memory_space<vmem>>, vector<1x32x32xf32>
    %95 = vector.shape_cast %94 : vector<1x32x32xf32> to vector<32x32xf32>
    %cst_91 = arith.constant dense<0.000000e+00> : vector<8x32xf32>
    %96 = tpu.matmul %69, %95, %cst_91 {dimension_numbers = #tpu.dot_dimension_numbers<[1], [0], [0], [1], [0, 0, 1, 1], [], []>} : vector<8x32xf32>, vector<32x32xf32>, vector<8x32xf32> -> vector<8x32xf32>
    %97 = arith.addf %93, %96 : vector<8x32xf32>
    %cst_92 = arith.constant 5.000000e-01 : f32
    %98 = vector.broadcast %cst_92 : f32 to vector<8x32xf32>
    %99 = arith.mulf %98, %97 : vector<8x32xf32>
    %100 = math.tanh %99 : vector<8x32xf32>
    %cst_93 = arith.constant 5.000000e-01 : f32
    %101 = vector.broadcast %cst_93 : f32 to vector<8x32xf32>
    %102 = arith.mulf %101, %100 : vector<8x32xf32>
    %cst_94 = arith.constant 5.000000e-01 : f32
    %103 = vector.broadcast %cst_94 : f32 to vector<8x32xf32>
    %104 = arith.addf %102, %103 : vector<8x32xf32>
    %c64_i32 = arith.constant 64 : i32
    %105 = arith.addi %c64_i32, %74 : i32
    %106 = tpu.assume_multiple %105, 8 : i32
    %107 = arith.index_cast %106 : i32 to index
    %c0_95 = arith.constant 0 : index
    %108 = vector.load %arg11[%107, %c0_95] : memref<128x32xf32, #tpu.memory_space<vmem>>, vector<8x32xf32>
    %c2_96 = arith.constant 2 : index
    %c0_97 = arith.constant 0 : index
    %c0_98 = arith.constant 0 : index
    %109 = vector.load %arg5[%c2_96, %c0_97, %c0_98] : memref<4x32x32xf32, #tpu.memory_space<vmem>>, vector<1x32x32xf32>
    %110 = vector.shape_cast %109 : vector<1x32x32xf32> to vector<32x32xf32>
    %cst_99 = arith.constant dense<0.000000e+00> : vector<8x32xf32>
    %111 = tpu.matmul %69, %110, %cst_99 {dimension_numbers = #tpu.dot_dimension_numbers<[1], [0], [0], [1], [0, 0, 1, 1], [], []>} : vector<8x32xf32>, vector<32x32xf32>, vector<8x32xf32> -> vector<8x32xf32>
    %112 = arith.addf %108, %111 : vector<8x32xf32>
    %113 = math.tanh %112 : vector<8x32xf32>
    %c96_i32 = arith.constant 96 : i32
    %114 = arith.addi %c96_i32, %74 : i32
    %115 = tpu.assume_multiple %114, 8 : i32
    %116 = arith.index_cast %115 : i32 to index
    %c0_100 = arith.constant 0 : index
    %117 = vector.load %arg11[%116, %c0_100] : memref<128x32xf32, #tpu.memory_space<vmem>>, vector<8x32xf32>
    %c3_101 = arith.constant 3 : index
    %c0_102 = arith.constant 0 : index
    %c0_103 = arith.constant 0 : index
    %118 = vector.load %arg5[%c3_101, %c0_102, %c0_103] : memref<4x32x32xf32, #tpu.memory_space<vmem>>, vector<1x32x32xf32>
    %119 = vector.shape_cast %118 : vector<1x32x32xf32> to vector<32x32xf32>
    %cst_104 = arith.constant dense<0.000000e+00> : vector<8x32xf32>
    %120 = tpu.matmul %69, %119, %cst_104 {dimension_numbers = #tpu.dot_dimension_numbers<[1], [0], [0], [1], [0, 0, 1, 1], [], []>} : vector<8x32xf32>, vector<32x32xf32>, vector<8x32xf32> -> vector<8x32xf32>
    %121 = arith.addf %117, %120 : vector<8x32xf32>
    %cst_105 = arith.constant 5.000000e-01 : f32
    %122 = vector.broadcast %cst_105 : f32 to vector<8x32xf32>
    %123 = arith.mulf %122, %121 : vector<8x32xf32>
    %124 = math.tanh %123 : vector<8x32xf32>
    %cst_106 = arith.constant 5.000000e-01 : f32
    %125 = vector.broadcast %cst_106 : f32 to vector<8x32xf32>
    %126 = arith.mulf %125, %124 : vector<8x32xf32>
    %cst_107 = arith.constant 5.000000e-01 : f32
    %127 = vector.broadcast %cst_107 : f32 to vector<8x32xf32>
    %128 = arith.addf %126, %127 : vector<8x32xf32>
    %129 = arith.mulf %104, %70 : vector<8x32xf32>
    %130 = arith.mulf %89, %113 : vector<8x32xf32>
    %131 = arith.addf %129, %130 : vector<8x32xf32>
    %132 = math.tanh %131 : vector<8x32xf32>
    %133 = arith.mulf %128, %132 : vector<8x32xf32>
    %134 = arith.index_cast %74 : i32 to index
    %c0_108 = arith.constant 0 : index
    %135 = vector.load %arg9[%134, %c0_108] : memref<32x32xf32, #tpu.memory_space<vmem>>, vector<8x32xf32>
    tpu.vector_store %arg9[%134, %c0_108], %133 {strides = array<i32>} : memref<32x32xf32, #tpu.memory_space<vmem>>, vector<8x32xf32>,
    %c3_i32 = arith.constant 3 : i32
    %136 = arith.subi %c3_i32, %c0_i32_77 : i32
    %c8_i32_109 = arith.constant 8 : i32
    %137 = arith.muli %136, %c8_i32_109 : i32
    %138 = tpu.assume_multiple %137, 8 : i32
    %c0_i32_110 = arith.constant 0 : i32
    %139 = arith.addi %c0_i32_110, %138 : i32
    %140 = tpu.assume_multiple %139, 8 : i32
    %141 = arith.index_cast %140 : i32 to index
    %c0_111 = arith.constant 0 : index
    %142 = vector.load %arg12[%141, %c0_111] : memref<128x32xf32, #tpu.memory_space<vmem>>, vector<8x32xf32>
    %c0_112 = arith.constant 0 : index
    %c0_113 = arith.constant 0 : index
    %c0_114 = arith.constant 0 : index
    %143 = vector.load %arg6[%c0_112, %c0_113, %c0_114] : memref<4x32x32xf32, #tpu.memory_space<vmem>>, vector<1x32x32xf32>
    %144 = vector.shape_cast %143 : vector<1x32x32xf32> to vector<32x32xf32>
    %cst_115 = arith.constant dense<0.000000e+00> : vector<8x32xf32>
    %145 = tpu.matmul %71, %144, %cst_115 {dimension_numbers = #tpu.dot_dimension_numbers<[1], [0], [0], [1], [0, 0, 1, 1], [], []>} : vector<8x32xf32>, vector<32x32xf32>, vector<8x32xf32> -> vector<8x32xf32>
    %146 = arith.addf %142, %145 : vector<8x32xf32>
    %cst_116 = arith.constant 5.000000e-01 : f32
    %147 = vector.broadcast %cst_116 : f32 to vector<8x32xf32>
    %148 = arith.mulf %147, %146 : vector<8x32xf32>
    %149 = math.tanh %148 : vector<8x32xf32>
    %cst_117 = arith.constant 5.000000e-01 : f32
    %150 = vector.broadcast %cst_117 : f32 to vector<8x32xf32>
    %151 = arith.mulf %150, %149 : vector<8x32xf32>
    %cst_118 = arith.constant 5.000000e-01 : f32
    %152 = vector.broadcast %cst_118 : f32 to vector<8x32xf32>
    %153 = arith.addf %151, %152 : vector<8x32xf32>
    %c32_i32_119 = arith.constant 32 : i32
    %154 = arith.addi %c32_i32_119, %138 : i32
    %155 = tpu.assume_multiple %154, 8 : i32
    %156 = arith.index_cast %155 : i32 to index
    %c0_120 = arith.constant 0 : index
    %157 = vector.load %arg12[%156, %c0_120] : memref<128x32xf32, #tpu.memory_space<vmem>>, vector<8x32xf32>
    %c1_121 = arith.constant 1 : index
    %c0_122 = arith.constant 0 : index
    %c0_123 = arith.constant 0 : index
    %158 = vector.load %arg6[%c1_121, %c0_122, %c0_123] : memref<4x32x32xf32, #tpu.memory_space<vmem>>, vector<1x32x32xf32>
    %159 = vector.shape_cast %158 : vector<1x32x32xf32> to vector<32x32xf32>
    %cst_124 = arith.constant dense<0.000000e+00> : vector<8x32xf32>
    %160 = tpu.matmul %71, %159, %cst_124 {dimension_numbers = #tpu.dot_dimension_numbers<[1], [0], [0], [1], [0, 0, 1, 1], [], []>} : vector<8x32xf32>, vector<32x32xf32>, vector<8x32xf32> -> vector<8x32xf32>
    %161 = arith.addf %157, %160 : vector<8x32xf32>
    %cst_125 = arith.constant 5.000000e-01 : f32
    %162 = vector.broadcast %cst_125 : f32 to vector<8x32xf32>
    %163 = arith.mulf %162, %161 : vector<8x32xf32>
    %164 = math.tanh %163 : vector<8x32xf32>
    %cst_126 = arith.constant 5.000000e-01 : f32
    %165 = vector.broadcast %cst_126 : f32 to vector<8x32xf32>
    %166 = arith.mulf %165, %164 : vector<8x32xf32>
    %cst_127 = arith.constant 5.000000e-01 : f32
    %167 = vector.broadcast %cst_127 : f32 to vector<8x32xf32>
    %168 = arith.addf %166, %167 : vector<8x32xf32>
    %c64_i32_128 = arith.constant 64 : i32
    %169 = arith.addi %c64_i32_128, %138 : i32
    %170 = tpu.assume_multiple %169, 8 : i32
    %171 = arith.index_cast %170 : i32 to index
    %c0_129 = arith.constant 0 : index
    %172 = vector.load %arg12[%171, %c0_129] : memref<128x32xf32, #tpu.memory_space<vmem>>, vector<8x32xf32>
    %c2_130 = arith.constant 2 : index
    %c0_131 = arith.constant 0 : index
    %c0_132 = arith.constant 0 : index
    %173 = vector.load %arg6[%c2_130, %c0_131, %c0_132] : memref<4x32x32xf32, #tpu.memory_space<vmem>>, vector<1x32x32xf32>
    %174 = vector.shape_cast %173 : vector<1x32x32xf32> to vector<32x32xf32>
    %cst_133 = arith.constant dense<0.000000e+00> : vector<8x32xf32>
    %175 = tpu.matmul %71, %174, %cst_133 {dimension_numbers = #tpu.dot_dimension_numbers<[1], [0], [0], [1], [0, 0, 1, 1], [], []>} : vector<8x32xf32>, vector<32x32xf32>, vector<8x32xf32> -> vector<8x32xf32>
    %176 = arith.addf %172, %175 : vector<8x32xf32>
    %177 = math.tanh %176 : vector<8x32xf32>
    %c96_i32_134 = arith.constant 96 : i32
    %178 = arith.addi %c96_i32_134, %138 : i32
    %179 = tpu.assume_multiple %178, 8 : i32
    %180 = arith.index_cast %179 : i32 to index
    %c0_135 = arith.constant 0 : index
    %181 = vector.load %arg12[%180, %c0_135] : memref<128x32xf32, #tpu.memory_space<vmem>>, vector<8x32xf32>
    %c3_136 = arith.constant 3 : index
    %c0_137 = arith.constant 0 : index
    %c0_138 = arith.constant 0 : index
    %182 = vector.load %arg6[%c3_136, %c0_137, %c0_138] : memref<4x32x32xf32, #tpu.memory_space<vmem>>, vector<1x32x32xf32>
    %183 = vector.shape_cast %182 : vector<1x32x32xf32> to vector<32x32xf32>
    %cst_139 = arith.constant dense<0.000000e+00> : vector<8x32xf32>
    %184 = tpu.matmul %71, %183, %cst_139 {dimension_numbers = #tpu.dot_dimension_numbers<[1], [0], [0], [1], [0, 0, 1, 1], [], []>} : vector<8x32xf32>, vector<32x32xf32>, vector<8x32xf32> -> vector<8x32xf32>
    %185 = arith.addf %181, %184 : vector<8x32xf32>
    %cst_140 = arith.constant 5.000000e-01 : f32
    %186 = vector.broadcast %cst_140 : f32 to vector<8x32xf32>
    %187 = arith.mulf %186, %185 : vector<8x32xf32>
    %188 = math.tanh %187 : vector<8x32xf32>
    %cst_141 = arith.constant 5.000000e-01 : f32
    %189 = vector.broadcast %cst_141 : f32 to vector<8x32xf32>
    %190 = arith.mulf %189, %188 : vector<8x32xf32>
    %cst_142 = arith.constant 5.000000e-01 : f32
    %191 = vector.broadcast %cst_142 : f32 to vector<8x32xf32>
    %192 = arith.addf %190, %191 : vector<8x32xf32>
    %193 = arith.mulf %168, %72 : vector<8x32xf32>
    %194 = arith.mulf %153, %177 : vector<8x32xf32>
    %195 = arith.addf %193, %194 : vector<8x32xf32>
    %196 = math.tanh %195 : vector<8x32xf32>
    %197 = arith.mulf %192, %196 : vector<8x32xf32>
    %198 = arith.index_cast %138 : i32 to index
    %c0_143 = arith.constant 0 : index
    %199 = vector.load %arg10[%198, %c0_143] : memref<32x32xf32, #tpu.memory_space<vmem>>, vector<8x32xf32>
    tpu.vector_store %arg10[%198, %c0_143], %197 {strides = array<i32>} : memref<32x32xf32, #tpu.memory_space<vmem>>, vector<8x32xf32>,
    %c1_i32 = arith.constant 1 : i32
    %c8_i32_144 = arith.constant 8 : i32
    %200 = arith.muli %c1_i32, %c8_i32_144 : i32
    %201 = tpu.assume_multiple %200, 8 : i32
    %c0_i32_145 = arith.constant 0 : i32
    %202 = arith.addi %c0_i32_145, %201 : i32
    %203 = tpu.assume_multiple %202, 8 : i32
    %204 = arith.index_cast %203 : i32 to index
    %c0_146 = arith.constant 0 : index
    %205 = vector.load %arg11[%204, %c0_146] : memref<128x32xf32, #tpu.memory_space<vmem>>, vector<8x32xf32>
    %c0_147 = arith.constant 0 : index
    %c0_148 = arith.constant 0 : index
    %c0_149 = arith.constant 0 : index
    %206 = vector.load %arg5[%c0_147, %c0_148, %c0_149] : memref<4x32x32xf32, #tpu.memory_space<vmem>>, vector<1x32x32xf32>
    %207 = vector.shape_cast %206 : vector<1x32x32xf32> to vector<32x32xf32>
    %cst_150 = arith.constant dense<0.000000e+00> : vector<8x32xf32>
    %208 = tpu.matmul %133, %207, %cst_150 {dimension_numbers = #tpu.dot_dimension_numbers<[1], [0], [0], [1], [0, 0, 1, 1], [], []>} : vector<8x32xf32>, vector<32x32xf32>, vector<8x32xf32> -> vector<8x32xf32>
    %209 = arith.addf %205, %208 : vector<8x32xf32>
    %cst_151 = arith.constant 5.000000e-01 : f32
    %210 = vector.broadcast %cst_151 : f32 to vector<8x32xf32>
    %211 = arith.mulf %210, %209 : vector<8x32xf32>
    %212 = math.tanh %211 : vector<8x32xf32>
    %cst_152 = arith.constant 5.000000e-01 : f32
    %213 = vector.broadcast %cst_152 : f32 to vector<8x32xf32>
    %214 = arith.mulf %213, %212 : vector<8x32xf32>
    %cst_153 = arith.constant 5.000000e-01 : f32
    %215 = vector.broadcast %cst_153 : f32 to vector<8x32xf32>
    %216 = arith.addf %214, %215 : vector<8x32xf32>
    %c32_i32_154 = arith.constant 32 : i32
    %217 = arith.addi %c32_i32_154, %201 : i32
    %218 = tpu.assume_multiple %217, 8 : i32
    %219 = arith.index_cast %218 : i32 to index
    %c0_155 = arith.constant 0 : index
    %220 = vector.load %arg11[%219, %c0_155] : memref<128x32xf32, #tpu.memory_space<vmem>>, vector<8x32xf32>
    %c1_156 = arith.constant 1 : index
    %c0_157 = arith.constant 0 : index
    %c0_158 = arith.constant 0 : index
    %221 = vector.load %arg5[%c1_156, %c0_157, %c0_158] : memref<4x32x32xf32, #tpu.memory_space<vmem>>, vector<1x32x32xf32>
    %222 = vector.shape_cast %221 : vector<1x32x32xf32> to vector<32x32xf32>
    %cst_159 = arith.constant dense<0.000000e+00> : vector<8x32xf32>
    %223 = tpu.matmul %133, %222, %cst_159 {dimension_numbers = #tpu.dot_dimension_numbers<[1], [0], [0], [1], [0, 0, 1, 1], [], []>} : vector<8x32xf32>, vector<32x32xf32>, vector<8x32xf32> -> vector<8x32xf32>
    %224 = arith.addf %220, %223 : vector<8x32xf32>
    %cst_160 = arith.constant 5.000000e-01 : f32
    %225 = vector.broadcast %cst_160 : f32 to vector<8x32xf32>
    %226 = arith.mulf %225, %224 : vector<8x32xf32>
    %227 = math.tanh %226 : vector<8x32xf32>
    %cst_161 = arith.constant 5.000000e-01 : f32
    %228 = vector.broadcast %cst_161 : f32 to vector<8x32xf32>
    %229 = arith.mulf %228, %227 : vector<8x32xf32>
    %cst_162 = arith.constant 5.000000e-01 : f32
    %230 = vector.broadcast %cst_162 : f32 to vector<8x32xf32>
    %231 = arith.addf %229, %230 : vector<8x32xf32>
    %c64_i32_163 = arith.constant 64 : i32
    %232 = arith.addi %c64_i32_163, %201 : i32
    %233 = tpu.assume_multiple %232, 8 : i32
    %234 = arith.index_cast %233 : i32 to index
    %c0_164 = arith.constant 0 : index
    %235 = vector.load %arg11[%234, %c0_164] : memref<128x32xf32, #tpu.memory_space<vmem>>, vector<8x32xf32>
    %c2_165 = arith.constant 2 : index
    %c0_166 = arith.constant 0 : index
    %c0_167 = arith.constant 0 : index
    %236 = vector.load %arg5[%c2_165, %c0_166, %c0_167] : memref<4x32x32xf32, #tpu.memory_space<vmem>>, vector<1x32x32xf32>
    %237 = vector.shape_cast %236 : vector<1x32x32xf32> to vector<32x32xf32>
    %cst_168 = arith.constant dense<0.000000e+00> : vector<8x32xf32>
    %238 = tpu.matmul %133, %237, %cst_168 {dimension_numbers = #tpu.dot_dimension_numbers<[1], [0], [0], [1], [0, 0, 1, 1], [], []>} : vector<8x32xf32>, vector<32x32xf32>, vector<8x32xf32> -> vector<8x32xf32>
    %239 = arith.addf %235, %238 : vector<8x32xf32>
    %240 = math.tanh %239 : vector<8x32xf32>
    %c96_i32_169 = arith.constant 96 : i32
    %241 = arith.addi %c96_i32_169, %201 : i32
    %242 = tpu.assume_multiple %241, 8 : i32
    %243 = arith.index_cast %242 : i32 to index
    %c0_170 = arith.constant 0 : index
    %244 = vector.load %arg11[%243, %c0_170] : memref<128x32xf32, #tpu.memory_space<vmem>>, vector<8x32xf32>
    %c3_171 = arith.constant 3 : index
    %c0_172 = arith.constant 0 : index
    %c0_173 = arith.constant 0 : index
    %245 = vector.load %arg5[%c3_171, %c0_172, %c0_173] : memref<4x32x32xf32, #tpu.memory_space<vmem>>, vector<1x32x32xf32>
    %246 = vector.shape_cast %245 : vector<1x32x32xf32> to vector<32x32xf32>
    %cst_174 = arith.constant dense<0.000000e+00> : vector<8x32xf32>
    %247 = tpu.matmul %133, %246, %cst_174 {dimension_numbers = #tpu.dot_dimension_numbers<[1], [0], [0], [1], [0, 0, 1, 1], [], []>} : vector<8x32xf32>, vector<32x32xf32>, vector<8x32xf32> -> vector<8x32xf32>
    %248 = arith.addf %244, %247 : vector<8x32xf32>
    %cst_175 = arith.constant 5.000000e-01 : f32
    %249 = vector.broadcast %cst_175 : f32 to vector<8x32xf32>
    %250 = arith.mulf %249, %248 : vector<8x32xf32>
    %251 = math.tanh %250 : vector<8x32xf32>
    %cst_176 = arith.constant 5.000000e-01 : f32
    %252 = vector.broadcast %cst_176 : f32 to vector<8x32xf32>
    %253 = arith.mulf %252, %251 : vector<8x32xf32>
    %cst_177 = arith.constant 5.000000e-01 : f32
    %254 = vector.broadcast %cst_177 : f32 to vector<8x32xf32>
    %255 = arith.addf %253, %254 : vector<8x32xf32>
    %256 = arith.mulf %231, %131 : vector<8x32xf32>
    %257 = arith.mulf %216, %240 : vector<8x32xf32>
    %258 = arith.addf %256, %257 : vector<8x32xf32>
    %259 = math.tanh %258 : vector<8x32xf32>
    %260 = arith.mulf %255, %259 : vector<8x32xf32>
    %261 = arith.index_cast %201 : i32 to index
    %c0_178 = arith.constant 0 : index
    %262 = vector.load %arg9[%261, %c0_178] : memref<32x32xf32, #tpu.memory_space<vmem>>, vector<8x32xf32>
    tpu.vector_store %arg9[%261, %c0_178], %260 {strides = array<i32>} : memref<32x32xf32, #tpu.memory_space<vmem>>, vector<8x32xf32>,
    %c3_i32_179 = arith.constant 3 : i32
    %263 = arith.subi %c3_i32_179, %c1_i32 : i32
    %c8_i32_180 = arith.constant 8 : i32
    %264 = arith.muli %263, %c8_i32_180 : i32
    %265 = tpu.assume_multiple %264, 8 : i32
    %c0_i32_181 = arith.constant 0 : i32
    %266 = arith.addi %c0_i32_181, %265 : i32
    %267 = tpu.assume_multiple %266, 8 : i32
    %268 = arith.index_cast %267 : i32 to index
    %c0_182 = arith.constant 0 : index
    %269 = vector.load %arg12[%268, %c0_182] : memref<128x32xf32, #tpu.memory_space<vmem>>, vector<8x32xf32>
    %c0_183 = arith.constant 0 : index
    %c0_184 = arith.constant 0 : index
    %c0_185 = arith.constant 0 : index
    %270 = vector.load %arg6[%c0_183, %c0_184, %c0_185] : memref<4x32x32xf32, #tpu.memory_space<vmem>>, vector<1x32x32xf32>
    %271 = vector.shape_cast %270 : vector<1x32x32xf32> to vector<32x32xf32>
    %cst_186 = arith.constant dense<0.000000e+00> : vector<8x32xf32>
    %272 = tpu.matmul %197, %271, %cst_186 {dimension_numbers = #tpu.dot_dimension_numbers<[1], [0], [0], [1], [0, 0, 1, 1], [], []>} : vector<8x32xf32>, vector<32x32xf32>, vector<8x32xf32> -> vector<8x32xf32>
    %273 = arith.addf %269, %272 : vector<8x32xf32>
    %cst_187 = arith.constant 5.000000e-01 : f32
    %274 = vector.broadcast %cst_187 : f32 to vector<8x32xf32>
    %275 = arith.mulf %274, %273 : vector<8x32xf32>
    %276 = math.tanh %275 : vector<8x32xf32>
    %cst_188 = arith.constant 5.000000e-01 : f32
    %277 = vector.broadcast %cst_188 : f32 to vector<8x32xf32>
    %278 = arith.mulf %277, %276 : vector<8x32xf32>
    %cst_189 = arith.constant 5.000000e-01 : f32
    %279 = vector.broadcast %cst_189 : f32 to vector<8x32xf32>
    %280 = arith.addf %278, %279 : vector<8x32xf32>
    %c32_i32_190 = arith.constant 32 : i32
    %281 = arith.addi %c32_i32_190, %265 : i32
    %282 = tpu.assume_multiple %281, 8 : i32
    %283 = arith.index_cast %282 : i32 to index
    %c0_191 = arith.constant 0 : index
    %284 = vector.load %arg12[%283, %c0_191] : memref<128x32xf32, #tpu.memory_space<vmem>>, vector<8x32xf32>
    %c1_192 = arith.constant 1 : index
    %c0_193 = arith.constant 0 : index
    %c0_194 = arith.constant 0 : index
    %285 = vector.load %arg6[%c1_192, %c0_193, %c0_194] : memref<4x32x32xf32, #tpu.memory_space<vmem>>, vector<1x32x32xf32>
    %286 = vector.shape_cast %285 : vector<1x32x32xf32> to vector<32x32xf32>
    %cst_195 = arith.constant dense<0.000000e+00> : vector<8x32xf32>
    %287 = tpu.matmul %197, %286, %cst_195 {dimension_numbers = #tpu.dot_dimension_numbers<[1], [0], [0], [1], [0, 0, 1, 1], [], []>} : vector<8x32xf32>, vector<32x32xf32>, vector<8x32xf32> -> vector<8x32xf32>
    %288 = arith.addf %284, %287 : vector<8x32xf32>
    %cst_196 = arith.constant 5.000000e-01 : f32
    %289 = vector.broadcast %cst_196 : f32 to vector<8x32xf32>
    %290 = arith.mulf %289, %288 : vector<8x32xf32>
    %291 = math.tanh %290 : vector<8x32xf32>
    %cst_197 = arith.constant 5.000000e-01 : f32
    %292 = vector.broadcast %cst_197 : f32 to vector<8x32xf32>
    %293 = arith.mulf %292, %291 : vector<8x32xf32>
    %cst_198 = arith.constant 5.000000e-01 : f32
    %294 = vector.broadcast %cst_198 : f32 to vector<8x32xf32>
    %295 = arith.addf %293, %294 : vector<8x32xf32>
    %c64_i32_199 = arith.constant 64 : i32
    %296 = arith.addi %c64_i32_199, %265 : i32
    %297 = tpu.assume_multiple %296, 8 : i32
    %298 = arith.index_cast %297 : i32 to index
    %c0_200 = arith.constant 0 : index
    %299 = vector.load %arg12[%298, %c0_200] : memref<128x32xf32, #tpu.memory_space<vmem>>, vector<8x32xf32>
    %c2_201 = arith.constant 2 : index
    %c0_202 = arith.constant 0 : index
    %c0_203 = arith.constant 0 : index
    %300 = vector.load %arg6[%c2_201, %c0_202, %c0_203] : memref<4x32x32xf32, #tpu.memory_space<vmem>>, vector<1x32x32xf32>
    %301 = vector.shape_cast %300 : vector<1x32x32xf32> to vector<32x32xf32>
    %cst_204 = arith.constant dense<0.000000e+00> : vector<8x32xf32>
    %302 = tpu.matmul %197, %301, %cst_204 {dimension_numbers = #tpu.dot_dimension_numbers<[1], [0], [0], [1], [0, 0, 1, 1], [], []>} : vector<8x32xf32>, vector<32x32xf32>, vector<8x32xf32> -> vector<8x32xf32>
    %303 = arith.addf %299, %302 : vector<8x32xf32>
    %304 = math.tanh %303 : vector<8x32xf32>
    %c96_i32_205 = arith.constant 96 : i32
    %305 = arith.addi %c96_i32_205, %265 : i32
    %306 = tpu.assume_multiple %305, 8 : i32
    %307 = arith.index_cast %306 : i32 to index
    %c0_206 = arith.constant 0 : index
    %308 = vector.load %arg12[%307, %c0_206] : memref<128x32xf32, #tpu.memory_space<vmem>>, vector<8x32xf32>
    %c3_207 = arith.constant 3 : index
    %c0_208 = arith.constant 0 : index
    %c0_209 = arith.constant 0 : index
    %309 = vector.load %arg6[%c3_207, %c0_208, %c0_209] : memref<4x32x32xf32, #tpu.memory_space<vmem>>, vector<1x32x32xf32>
    %310 = vector.shape_cast %309 : vector<1x32x32xf32> to vector<32x32xf32>
    %cst_210 = arith.constant dense<0.000000e+00> : vector<8x32xf32>
    %311 = tpu.matmul %197, %310, %cst_210 {dimension_numbers = #tpu.dot_dimension_numbers<[1], [0], [0], [1], [0, 0, 1, 1], [], []>} : vector<8x32xf32>, vector<32x32xf32>, vector<8x32xf32> -> vector<8x32xf32>
    %312 = arith.addf %308, %311 : vector<8x32xf32>
    %cst_211 = arith.constant 5.000000e-01 : f32
    %313 = vector.broadcast %cst_211 : f32 to vector<8x32xf32>
    %314 = arith.mulf %313, %312 : vector<8x32xf32>
    %315 = math.tanh %314 : vector<8x32xf32>
    %cst_212 = arith.constant 5.000000e-01 : f32
    %316 = vector.broadcast %cst_212 : f32 to vector<8x32xf32>
    %317 = arith.mulf %316, %315 : vector<8x32xf32>
    %cst_213 = arith.constant 5.000000e-01 : f32
    %318 = vector.broadcast %cst_213 : f32 to vector<8x32xf32>
    %319 = arith.addf %317, %318 : vector<8x32xf32>
    %320 = arith.mulf %295, %195 : vector<8x32xf32>
    %321 = arith.mulf %280, %304 : vector<8x32xf32>
    %322 = arith.addf %320, %321 : vector<8x32xf32>
    %323 = math.tanh %322 : vector<8x32xf32>
    %324 = arith.mulf %319, %323 : vector<8x32xf32>
    %325 = arith.index_cast %265 : i32 to index
    %c0_214 = arith.constant 0 : index
    %326 = vector.load %arg10[%325, %c0_214] : memref<32x32xf32, #tpu.memory_space<vmem>>, vector<8x32xf32>
    tpu.vector_store %arg10[%325, %c0_214], %324 {strides = array<i32>} : memref<32x32xf32, #tpu.memory_space<vmem>>, vector<8x32xf32>,
    %c2_i32 = arith.constant 2 : i32
    %c8_i32_215 = arith.constant 8 : i32
    %327 = arith.muli %c2_i32, %c8_i32_215 : i32
    %328 = tpu.assume_multiple %327, 8 : i32
    %c0_i32_216 = arith.constant 0 : i32
    %329 = arith.addi %c0_i32_216, %328 : i32
    %330 = tpu.assume_multiple %329, 8 : i32
    %331 = arith.index_cast %330 : i32 to index
    %c0_217 = arith.constant 0 : index
    %332 = vector.load %arg11[%331, %c0_217] : memref<128x32xf32, #tpu.memory_space<vmem>>, vector<8x32xf32>
    %c0_218 = arith.constant 0 : index
    %c0_219 = arith.constant 0 : index
    %c0_220 = arith.constant 0 : index
    %333 = vector.load %arg5[%c0_218, %c0_219, %c0_220] : memref<4x32x32xf32, #tpu.memory_space<vmem>>, vector<1x32x32xf32>
    %334 = vector.shape_cast %333 : vector<1x32x32xf32> to vector<32x32xf32>
    %cst_221 = arith.constant dense<0.000000e+00> : vector<8x32xf32>
    %335 = tpu.matmul %260, %334, %cst_221 {dimension_numbers = #tpu.dot_dimension_numbers<[1], [0], [0], [1], [0, 0, 1, 1], [], []>} : vector<8x32xf32>, vector<32x32xf32>, vector<8x32xf32> -> vector<8x32xf32>
    %336 = arith.addf %332, %335 : vector<8x32xf32>
    %cst_222 = arith.constant 5.000000e-01 : f32
    %337 = vector.broadcast %cst_222 : f32 to vector<8x32xf32>
    %338 = arith.mulf %337, %336 : vector<8x32xf32>
    %339 = math.tanh %338 : vector<8x32xf32>
    %cst_223 = arith.constant 5.000000e-01 : f32
    %340 = vector.broadcast %cst_223 : f32 to vector<8x32xf32>
    %341 = arith.mulf %340, %339 : vector<8x32xf32>
    %cst_224 = arith.constant 5.000000e-01 : f32
    %342 = vector.broadcast %cst_224 : f32 to vector<8x32xf32>
    %343 = arith.addf %341, %342 : vector<8x32xf32>
    %c32_i32_225 = arith.constant 32 : i32
    %344 = arith.addi %c32_i32_225, %328 : i32
    %345 = tpu.assume_multiple %344, 8 : i32
    %346 = arith.index_cast %345 : i32 to index
    %c0_226 = arith.constant 0 : index
    %347 = vector.load %arg11[%346, %c0_226] : memref<128x32xf32, #tpu.memory_space<vmem>>, vector<8x32xf32>
    %c1_227 = arith.constant 1 : index
    %c0_228 = arith.constant 0 : index
    %c0_229 = arith.constant 0 : index
    %348 = vector.load %arg5[%c1_227, %c0_228, %c0_229] : memref<4x32x32xf32, #tpu.memory_space<vmem>>, vector<1x32x32xf32>
    %349 = vector.shape_cast %348 : vector<1x32x32xf32> to vector<32x32xf32>
    %cst_230 = arith.constant dense<0.000000e+00> : vector<8x32xf32>
    %350 = tpu.matmul %260, %349, %cst_230 {dimension_numbers = #tpu.dot_dimension_numbers<[1], [0], [0], [1], [0, 0, 1, 1], [], []>} : vector<8x32xf32>, vector<32x32xf32>, vector<8x32xf32> -> vector<8x32xf32>
    %351 = arith.addf %347, %350 : vector<8x32xf32>
    %cst_231 = arith.constant 5.000000e-01 : f32
    %352 = vector.broadcast %cst_231 : f32 to vector<8x32xf32>
    %353 = arith.mulf %352, %351 : vector<8x32xf32>
    %354 = math.tanh %353 : vector<8x32xf32>
    %cst_232 = arith.constant 5.000000e-01 : f32
    %355 = vector.broadcast %cst_232 : f32 to vector<8x32xf32>
    %356 = arith.mulf %355, %354 : vector<8x32xf32>
    %cst_233 = arith.constant 5.000000e-01 : f32
    %357 = vector.broadcast %cst_233 : f32 to vector<8x32xf32>
    %358 = arith.addf %356, %357 : vector<8x32xf32>
    %c64_i32_234 = arith.constant 64 : i32
    %359 = arith.addi %c64_i32_234, %328 : i32
    %360 = tpu.assume_multiple %359, 8 : i32
    %361 = arith.index_cast %360 : i32 to index
    %c0_235 = arith.constant 0 : index
    %362 = vector.load %arg11[%361, %c0_235] : memref<128x32xf32, #tpu.memory_space<vmem>>, vector<8x32xf32>
    %c2_236 = arith.constant 2 : index
    %c0_237 = arith.constant 0 : index
    %c0_238 = arith.constant 0 : index
    %363 = vector.load %arg5[%c2_236, %c0_237, %c0_238] : memref<4x32x32xf32, #tpu.memory_space<vmem>>, vector<1x32x32xf32>
    %364 = vector.shape_cast %363 : vector<1x32x32xf32> to vector<32x32xf32>
    %cst_239 = arith.constant dense<0.000000e+00> : vector<8x32xf32>
    %365 = tpu.matmul %260, %364, %cst_239 {dimension_numbers = #tpu.dot_dimension_numbers<[1], [0], [0], [1], [0, 0, 1, 1], [], []>} : vector<8x32xf32>, vector<32x32xf32>, vector<8x32xf32> -> vector<8x32xf32>
    %366 = arith.addf %362, %365 : vector<8x32xf32>
    %367 = math.tanh %366 : vector<8x32xf32>
    %c96_i32_240 = arith.constant 96 : i32
    %368 = arith.addi %c96_i32_240, %328 : i32
    %369 = tpu.assume_multiple %368, 8 : i32
    %370 = arith.index_cast %369 : i32 to index
    %c0_241 = arith.constant 0 : index
    %371 = vector.load %arg11[%370, %c0_241] : memref<128x32xf32, #tpu.memory_space<vmem>>, vector<8x32xf32>
    %c3_242 = arith.constant 3 : index
    %c0_243 = arith.constant 0 : index
    %c0_244 = arith.constant 0 : index
    %372 = vector.load %arg5[%c3_242, %c0_243, %c0_244] : memref<4x32x32xf32, #tpu.memory_space<vmem>>, vector<1x32x32xf32>
    %373 = vector.shape_cast %372 : vector<1x32x32xf32> to vector<32x32xf32>
    %cst_245 = arith.constant dense<0.000000e+00> : vector<8x32xf32>
    %374 = tpu.matmul %260, %373, %cst_245 {dimension_numbers = #tpu.dot_dimension_numbers<[1], [0], [0], [1], [0, 0, 1, 1], [], []>} : vector<8x32xf32>, vector<32x32xf32>, vector<8x32xf32> -> vector<8x32xf32>
    %375 = arith.addf %371, %374 : vector<8x32xf32>
    %cst_246 = arith.constant 5.000000e-01 : f32
    %376 = vector.broadcast %cst_246 : f32 to vector<8x32xf32>
    %377 = arith.mulf %376, %375 : vector<8x32xf32>
    %378 = math.tanh %377 : vector<8x32xf32>
    %cst_247 = arith.constant 5.000000e-01 : f32
    %379 = vector.broadcast %cst_247 : f32 to vector<8x32xf32>
    %380 = arith.mulf %379, %378 : vector<8x32xf32>
    %cst_248 = arith.constant 5.000000e-01 : f32
    %381 = vector.broadcast %cst_248 : f32 to vector<8x32xf32>
    %382 = arith.addf %380, %381 : vector<8x32xf32>
    %383 = arith.mulf %358, %258 : vector<8x32xf32>
    %384 = arith.mulf %343, %367 : vector<8x32xf32>
    %385 = arith.addf %383, %384 : vector<8x32xf32>
    %386 = math.tanh %385 : vector<8x32xf32>
    %387 = arith.mulf %382, %386 : vector<8x32xf32>
    %388 = arith.index_cast %328 : i32 to index
    %c0_249 = arith.constant 0 : index
    %389 = vector.load %arg9[%388, %c0_249] : memref<32x32xf32, #tpu.memory_space<vmem>>, vector<8x32xf32>
    tpu.vector_store %arg9[%388, %c0_249], %387 {strides = array<i32>} : memref<32x32xf32, #tpu.memory_space<vmem>>, vector<8x32xf32>,
    %c3_i32_250 = arith.constant 3 : i32
    %390 = arith.subi %c3_i32_250, %c2_i32 : i32
    %c8_i32_251 = arith.constant 8 : i32
    %391 = arith.muli %390, %c8_i32_251 : i32
    %392 = tpu.assume_multiple %391, 8 : i32
    %c0_i32_252 = arith.constant 0 : i32
    %393 = arith.addi %c0_i32_252, %392 : i32
    %394 = tpu.assume_multiple %393, 8 : i32
    %395 = arith.index_cast %394 : i32 to index
    %c0_253 = arith.constant 0 : index
    %396 = vector.load %arg12[%395, %c0_253] : memref<128x32xf32, #tpu.memory_space<vmem>>, vector<8x32xf32>
    %c0_254 = arith.constant 0 : index
    %c0_255 = arith.constant 0 : index
    %c0_256 = arith.constant 0 : index
    %397 = vector.load %arg6[%c0_254, %c0_255, %c0_256] : memref<4x32x32xf32, #tpu.memory_space<vmem>>, vector<1x32x32xf32>
    %398 = vector.shape_cast %397 : vector<1x32x32xf32> to vector<32x32xf32>
    %cst_257 = arith.constant dense<0.000000e+00> : vector<8x32xf32>
    %399 = tpu.matmul %324, %398, %cst_257 {dimension_numbers = #tpu.dot_dimension_numbers<[1], [0], [0], [1], [0, 0, 1, 1], [], []>} : vector<8x32xf32>, vector<32x32xf32>, vector<8x32xf32> -> vector<8x32xf32>
    %400 = arith.addf %396, %399 : vector<8x32xf32>
    %cst_258 = arith.constant 5.000000e-01 : f32
    %401 = vector.broadcast %cst_258 : f32 to vector<8x32xf32>
    %402 = arith.mulf %401, %400 : vector<8x32xf32>
    %403 = math.tanh %402 : vector<8x32xf32>
    %cst_259 = arith.constant 5.000000e-01 : f32
    %404 = vector.broadcast %cst_259 : f32 to vector<8x32xf32>
    %405 = arith.mulf %404, %403 : vector<8x32xf32>
    %cst_260 = arith.constant 5.000000e-01 : f32
    %406 = vector.broadcast %cst_260 : f32 to vector<8x32xf32>
    %407 = arith.addf %405, %406 : vector<8x32xf32>
    %c32_i32_261 = arith.constant 32 : i32
    %408 = arith.addi %c32_i32_261, %392 : i32
    %409 = tpu.assume_multiple %408, 8 : i32
    %410 = arith.index_cast %409 : i32 to index
    %c0_262 = arith.constant 0 : index
    %411 = vector.load %arg12[%410, %c0_262] : memref<128x32xf32, #tpu.memory_space<vmem>>, vector<8x32xf32>
    %c1_263 = arith.constant 1 : index
    %c0_264 = arith.constant 0 : index
    %c0_265 = arith.constant 0 : index
    %412 = vector.load %arg6[%c1_263, %c0_264, %c0_265] : memref<4x32x32xf32, #tpu.memory_space<vmem>>, vector<1x32x32xf32>
    %413 = vector.shape_cast %412 : vector<1x32x32xf32> to vector<32x32xf32>
    %cst_266 = arith.constant dense<0.000000e+00> : vector<8x32xf32>
    %414 = tpu.matmul %324, %413, %cst_266 {dimension_numbers = #tpu.dot_dimension_numbers<[1], [0], [0], [1], [0, 0, 1, 1], [], []>} : vector<8x32xf32>, vector<32x32xf32>, vector<8x32xf32> -> vector<8x32xf32>
    %415 = arith.addf %411, %414 : vector<8x32xf32>
    %cst_267 = arith.constant 5.000000e-01 : f32
    %416 = vector.broadcast %cst_267 : f32 to vector<8x32xf32>
    %417 = arith.mulf %416, %415 : vector<8x32xf32>
    %418 = math.tanh %417 : vector<8x32xf32>
    %cst_268 = arith.constant 5.000000e-01 : f32
    %419 = vector.broadcast %cst_268 : f32 to vector<8x32xf32>
    %420 = arith.mulf %419, %418 : vector<8x32xf32>
    %cst_269 = arith.constant 5.000000e-01 : f32
    %421 = vector.broadcast %cst_269 : f32 to vector<8x32xf32>
    %422 = arith.addf %420, %421 : vector<8x32xf32>
    %c64_i32_270 = arith.constant 64 : i32
    %423 = arith.addi %c64_i32_270, %392 : i32
    %424 = tpu.assume_multiple %423, 8 : i32
    %425 = arith.index_cast %424 : i32 to index
    %c0_271 = arith.constant 0 : index
    %426 = vector.load %arg12[%425, %c0_271] : memref<128x32xf32, #tpu.memory_space<vmem>>, vector<8x32xf32>
    %c2_272 = arith.constant 2 : index
    %c0_273 = arith.constant 0 : index
    %c0_274 = arith.constant 0 : index
    %427 = vector.load %arg6[%c2_272, %c0_273, %c0_274] : memref<4x32x32xf32, #tpu.memory_space<vmem>>, vector<1x32x32xf32>
    %428 = vector.shape_cast %427 : vector<1x32x32xf32> to vector<32x32xf32>
    %cst_275 = arith.constant dense<0.000000e+00> : vector<8x32xf32>
    %429 = tpu.matmul %324, %428, %cst_275 {dimension_numbers = #tpu.dot_dimension_numbers<[1], [0], [0], [1], [0, 0, 1, 1], [], []>} : vector<8x32xf32>, vector<32x32xf32>, vector<8x32xf32> -> vector<8x32xf32>
    %430 = arith.addf %426, %429 : vector<8x32xf32>
    %431 = math.tanh %430 : vector<8x32xf32>
    %c96_i32_276 = arith.constant 96 : i32
    %432 = arith.addi %c96_i32_276, %392 : i32
    %433 = tpu.assume_multiple %432, 8 : i32
    %434 = arith.index_cast %433 : i32 to index
    %c0_277 = arith.constant 0 : index
    %435 = vector.load %arg12[%434, %c0_277] : memref<128x32xf32, #tpu.memory_space<vmem>>, vector<8x32xf32>
    %c3_278 = arith.constant 3 : index
    %c0_279 = arith.constant 0 : index
    %c0_280 = arith.constant 0 : index
    %436 = vector.load %arg6[%c3_278, %c0_279, %c0_280] : memref<4x32x32xf32, #tpu.memory_space<vmem>>, vector<1x32x32xf32>
    %437 = vector.shape_cast %436 : vector<1x32x32xf32> to vector<32x32xf32>
    %cst_281 = arith.constant dense<0.000000e+00> : vector<8x32xf32>
    %438 = tpu.matmul %324, %437, %cst_281 {dimension_numbers = #tpu.dot_dimension_numbers<[1], [0], [0], [1], [0, 0, 1, 1], [], []>} : vector<8x32xf32>, vector<32x32xf32>, vector<8x32xf32> -> vector<8x32xf32>
    %439 = arith.addf %435, %438 : vector<8x32xf32>
    %cst_282 = arith.constant 5.000000e-01 : f32
    %440 = vector.broadcast %cst_282 : f32 to vector<8x32xf32>
    %441 = arith.mulf %440, %439 : vector<8x32xf32>
    %442 = math.tanh %441 : vector<8x32xf32>
    %cst_283 = arith.constant 5.000000e-01 : f32
    %443 = vector.broadcast %cst_283 : f32 to vector<8x32xf32>
    %444 = arith.mulf %443, %442 : vector<8x32xf32>
    %cst_284 = arith.constant 5.000000e-01 : f32
    %445 = vector.broadcast %cst_284 : f32 to vector<8x32xf32>
    %446 = arith.addf %444, %445 : vector<8x32xf32>
    %447 = arith.mulf %422, %322 : vector<8x32xf32>
    %448 = arith.mulf %407, %431 : vector<8x32xf32>
    %449 = arith.addf %447, %448 : vector<8x32xf32>
    %450 = math.tanh %449 : vector<8x32xf32>
    %451 = arith.mulf %446, %450 : vector<8x32xf32>
    %452 = arith.index_cast %392 : i32 to index
    %c0_285 = arith.constant 0 : index
    %453 = vector.load %arg10[%452, %c0_285] : memref<32x32xf32, #tpu.memory_space<vmem>>, vector<8x32xf32>
    tpu.vector_store %arg10[%452, %c0_285], %451 {strides = array<i32>} : memref<32x32xf32, #tpu.memory_space<vmem>>, vector<8x32xf32>,
    %c3_i32_286 = arith.constant 3 : i32
    %c8_i32_287 = arith.constant 8 : i32
    %454 = arith.muli %c3_i32_286, %c8_i32_287 : i32
    %455 = tpu.assume_multiple %454, 8 : i32
    %c0_i32_288 = arith.constant 0 : i32
    %456 = arith.addi %c0_i32_288, %455 : i32
    %457 = tpu.assume_multiple %456, 8 : i32
    %458 = arith.index_cast %457 : i32 to index
    %c0_289 = arith.constant 0 : index
    %459 = vector.load %arg11[%458, %c0_289] : memref<128x32xf32, #tpu.memory_space<vmem>>, vector<8x32xf32>
    %c0_290 = arith.constant 0 : index
    %c0_291 = arith.constant 0 : index
    %c0_292 = arith.constant 0 : index
    %460 = vector.load %arg5[%c0_290, %c0_291, %c0_292] : memref<4x32x32xf32, #tpu.memory_space<vmem>>, vector<1x32x32xf32>
    %461 = vector.shape_cast %460 : vector<1x32x32xf32> to vector<32x32xf32>
    %cst_293 = arith.constant dense<0.000000e+00> : vector<8x32xf32>
    %462 = tpu.matmul %387, %461, %cst_293 {dimension_numbers = #tpu.dot_dimension_numbers<[1], [0], [0], [1], [0, 0, 1, 1], [], []>} : vector<8x32xf32>, vector<32x32xf32>, vector<8x32xf32> -> vector<8x32xf32>
    %463 = arith.addf %459, %462 : vector<8x32xf32>
    %cst_294 = arith.constant 5.000000e-01 : f32
    %464 = vector.broadcast %cst_294 : f32 to vector<8x32xf32>
    %465 = arith.mulf %464, %463 : vector<8x32xf32>
    %466 = math.tanh %465 : vector<8x32xf32>
    %cst_295 = arith.constant 5.000000e-01 : f32
    %467 = vector.broadcast %cst_295 : f32 to vector<8x32xf32>
    %468 = arith.mulf %467, %466 : vector<8x32xf32>
    %cst_296 = arith.constant 5.000000e-01 : f32
    %469 = vector.broadcast %cst_296 : f32 to vector<8x32xf32>
    %470 = arith.addf %468, %469 : vector<8x32xf32>
    %c32_i32_297 = arith.constant 32 : i32
    %471 = arith.addi %c32_i32_297, %455 : i32
    %472 = tpu.assume_multiple %471, 8 : i32
    %473 = arith.index_cast %472 : i32 to index
    %c0_298 = arith.constant 0 : index
    %474 = vector.load %arg11[%473, %c0_298] : memref<128x32xf32, #tpu.memory_space<vmem>>, vector<8x32xf32>
    %c1_299 = arith.constant 1 : index
    %c0_300 = arith.constant 0 : index
    %c0_301 = arith.constant 0 : index
    %475 = vector.load %arg5[%c1_299, %c0_300, %c0_301] : memref<4x32x32xf32, #tpu.memory_space<vmem>>, vector<1x32x32xf32>
    %476 = vector.shape_cast %475 : vector<1x32x32xf32> to vector<32x32xf32>
    %cst_302 = arith.constant dense<0.000000e+00> : vector<8x32xf32>
    %477 = tpu.matmul %387, %476, %cst_302 {dimension_numbers = #tpu.dot_dimension_numbers<[1], [0], [0], [1], [0, 0, 1, 1], [], []>} : vector<8x32xf32>, vector<32x32xf32>, vector<8x32xf32> -> vector<8x32xf32>
    %478 = arith.addf %474, %477 : vector<8x32xf32>
    %cst_303 = arith.constant 5.000000e-01 : f32
    %479 = vector.broadcast %cst_303 : f32 to vector<8x32xf32>
    %480 = arith.mulf %479, %478 : vector<8x32xf32>
    %481 = math.tanh %480 : vector<8x32xf32>
    %cst_304 = arith.constant 5.000000e-01 : f32
    %482 = vector.broadcast %cst_304 : f32 to vector<8x32xf32>
    %483 = arith.mulf %482, %481 : vector<8x32xf32>
    %cst_305 = arith.constant 5.000000e-01 : f32
    %484 = vector.broadcast %cst_305 : f32 to vector<8x32xf32>
    %485 = arith.addf %483, %484 : vector<8x32xf32>
    %c64_i32_306 = arith.constant 64 : i32
    %486 = arith.addi %c64_i32_306, %455 : i32
    %487 = tpu.assume_multiple %486, 8 : i32
    %488 = arith.index_cast %487 : i32 to index
    %c0_307 = arith.constant 0 : index
    %489 = vector.load %arg11[%488, %c0_307] : memref<128x32xf32, #tpu.memory_space<vmem>>, vector<8x32xf32>
    %c2_308 = arith.constant 2 : index
    %c0_309 = arith.constant 0 : index
    %c0_310 = arith.constant 0 : index
    %490 = vector.load %arg5[%c2_308, %c0_309, %c0_310] : memref<4x32x32xf32, #tpu.memory_space<vmem>>, vector<1x32x32xf32>
    %491 = vector.shape_cast %490 : vector<1x32x32xf32> to vector<32x32xf32>
    %cst_311 = arith.constant dense<0.000000e+00> : vector<8x32xf32>
    %492 = tpu.matmul %387, %491, %cst_311 {dimension_numbers = #tpu.dot_dimension_numbers<[1], [0], [0], [1], [0, 0, 1, 1], [], []>} : vector<8x32xf32>, vector<32x32xf32>, vector<8x32xf32> -> vector<8x32xf32>
    %493 = arith.addf %489, %492 : vector<8x32xf32>
    %494 = math.tanh %493 : vector<8x32xf32>
    %c96_i32_312 = arith.constant 96 : i32
    %495 = arith.addi %c96_i32_312, %455 : i32
    %496 = tpu.assume_multiple %495, 8 : i32
    %497 = arith.index_cast %496 : i32 to index
    %c0_313 = arith.constant 0 : index
    %498 = vector.load %arg11[%497, %c0_313] : memref<128x32xf32, #tpu.memory_space<vmem>>, vector<8x32xf32>
    %c3_314 = arith.constant 3 : index
    %c0_315 = arith.constant 0 : index
    %c0_316 = arith.constant 0 : index
    %499 = vector.load %arg5[%c3_314, %c0_315, %c0_316] : memref<4x32x32xf32, #tpu.memory_space<vmem>>, vector<1x32x32xf32>
    %500 = vector.shape_cast %499 : vector<1x32x32xf32> to vector<32x32xf32>
    %cst_317 = arith.constant dense<0.000000e+00> : vector<8x32xf32>
    %501 = tpu.matmul %387, %500, %cst_317 {dimension_numbers = #tpu.dot_dimension_numbers<[1], [0], [0], [1], [0, 0, 1, 1], [], []>} : vector<8x32xf32>, vector<32x32xf32>, vector<8x32xf32> -> vector<8x32xf32>
    %502 = arith.addf %498, %501 : vector<8x32xf32>
    %cst_318 = arith.constant 5.000000e-01 : f32
    %503 = vector.broadcast %cst_318 : f32 to vector<8x32xf32>
    %504 = arith.mulf %503, %502 : vector<8x32xf32>
    %505 = math.tanh %504 : vector<8x32xf32>
    %cst_319 = arith.constant 5.000000e-01 : f32
    %506 = vector.broadcast %cst_319 : f32 to vector<8x32xf32>
    %507 = arith.mulf %506, %505 : vector<8x32xf32>
    %cst_320 = arith.constant 5.000000e-01 : f32
    %508 = vector.broadcast %cst_320 : f32 to vector<8x32xf32>
    %509 = arith.addf %507, %508 : vector<8x32xf32>
    %510 = arith.mulf %485, %385 : vector<8x32xf32>
    %511 = arith.mulf %470, %494 : vector<8x32xf32>
    %512 = arith.addf %510, %511 : vector<8x32xf32>
    %513 = math.tanh %512 : vector<8x32xf32>
    %514 = arith.mulf %509, %513 : vector<8x32xf32>
    %515 = arith.index_cast %455 : i32 to index
    %c0_321 = arith.constant 0 : index
    %516 = vector.load %arg9[%515, %c0_321] : memref<32x32xf32, #tpu.memory_space<vmem>>, vector<8x32xf32>
    tpu.vector_store %arg9[%515, %c0_321], %514 {strides = array<i32>} : memref<32x32xf32, #tpu.memory_space<vmem>>, vector<8x32xf32>,
    %c3_i32_322 = arith.constant 3 : i32
    %517 = arith.subi %c3_i32_322, %c3_i32_286 : i32
    %c8_i32_323 = arith.constant 8 : i32
    %518 = arith.muli %517, %c8_i32_323 : i32
    %519 = tpu.assume_multiple %518, 8 : i32
    %c0_i32_324 = arith.constant 0 : i32
    %520 = arith.addi %c0_i32_324, %519 : i32
    %521 = tpu.assume_multiple %520, 8 : i32
    %522 = arith.index_cast %521 : i32 to index
    %c0_325 = arith.constant 0 : index
    %523 = vector.load %arg12[%522, %c0_325] : memref<128x32xf32, #tpu.memory_space<vmem>>, vector<8x32xf32>
    %c0_326 = arith.constant 0 : index
    %c0_327 = arith.constant 0 : index
    %c0_328 = arith.constant 0 : index
    %524 = vector.load %arg6[%c0_326, %c0_327, %c0_328] : memref<4x32x32xf32, #tpu.memory_space<vmem>>, vector<1x32x32xf32>
    %525 = vector.shape_cast %524 : vector<1x32x32xf32> to vector<32x32xf32>
    %cst_329 = arith.constant dense<0.000000e+00> : vector<8x32xf32>
    %526 = tpu.matmul %451, %525, %cst_329 {dimension_numbers = #tpu.dot_dimension_numbers<[1], [0], [0], [1], [0, 0, 1, 1], [], []>} : vector<8x32xf32>, vector<32x32xf32>, vector<8x32xf32> -> vector<8x32xf32>
    %527 = arith.addf %523, %526 : vector<8x32xf32>
    %cst_330 = arith.constant 5.000000e-01 : f32
    %528 = vector.broadcast %cst_330 : f32 to vector<8x32xf32>
    %529 = arith.mulf %528, %527 : vector<8x32xf32>
    %530 = math.tanh %529 : vector<8x32xf32>
    %cst_331 = arith.constant 5.000000e-01 : f32
    %531 = vector.broadcast %cst_331 : f32 to vector<8x32xf32>
    %532 = arith.mulf %531, %530 : vector<8x32xf32>
    %cst_332 = arith.constant 5.000000e-01 : f32
    %533 = vector.broadcast %cst_332 : f32 to vector<8x32xf32>
    %534 = arith.addf %532, %533 : vector<8x32xf32>
    %c32_i32_333 = arith.constant 32 : i32
    %535 = arith.addi %c32_i32_333, %519 : i32
    %536 = tpu.assume_multiple %535, 8 : i32
    %537 = arith.index_cast %536 : i32 to index
    %c0_334 = arith.constant 0 : index
    %538 = vector.load %arg12[%537, %c0_334] : memref<128x32xf32, #tpu.memory_space<vmem>>, vector<8x32xf32>
    %c1_335 = arith.constant 1 : index
    %c0_336 = arith.constant 0 : index
    %c0_337 = arith.constant 0 : index
    %539 = vector.load %arg6[%c1_335, %c0_336, %c0_337] : memref<4x32x32xf32, #tpu.memory_space<vmem>>, vector<1x32x32xf32>
    %540 = vector.shape_cast %539 : vector<1x32x32xf32> to vector<32x32xf32>
    %cst_338 = arith.constant dense<0.000000e+00> : vector<8x32xf32>
    %541 = tpu.matmul %451, %540, %cst_338 {dimension_numbers = #tpu.dot_dimension_numbers<[1], [0], [0], [1], [0, 0, 1, 1], [], []>} : vector<8x32xf32>, vector<32x32xf32>, vector<8x32xf32> -> vector<8x32xf32>
    %542 = arith.addf %538, %541 : vector<8x32xf32>
    %cst_339 = arith.constant 5.000000e-01 : f32
    %543 = vector.broadcast %cst_339 : f32 to vector<8x32xf32>
    %544 = arith.mulf %543, %542 : vector<8x32xf32>
    %545 = math.tanh %544 : vector<8x32xf32>
    %cst_340 = arith.constant 5.000000e-01 : f32
    %546 = vector.broadcast %cst_340 : f32 to vector<8x32xf32>
    %547 = arith.mulf %546, %545 : vector<8x32xf32>
    %cst_341 = arith.constant 5.000000e-01 : f32
    %548 = vector.broadcast %cst_341 : f32 to vector<8x32xf32>
    %549 = arith.addf %547, %548 : vector<8x32xf32>
    %c64_i32_342 = arith.constant 64 : i32
    %550 = arith.addi %c64_i32_342, %519 : i32
    %551 = tpu.assume_multiple %550, 8 : i32
    %552 = arith.index_cast %551 : i32 to index
    %c0_343 = arith.constant 0 : index
    %553 = vector.load %arg12[%552, %c0_343] : memref<128x32xf32, #tpu.memory_space<vmem>>, vector<8x32xf32>
    %c2_344 = arith.constant 2 : index
    %c0_345 = arith.constant 0 : index
    %c0_346 = arith.constant 0 : index
    %554 = vector.load %arg6[%c2_344, %c0_345, %c0_346] : memref<4x32x32xf32, #tpu.memory_space<vmem>>, vector<1x32x32xf32>
    %555 = vector.shape_cast %554 : vector<1x32x32xf32> to vector<32x32xf32>
    %cst_347 = arith.constant dense<0.000000e+00> : vector<8x32xf32>
    %556 = tpu.matmul %451, %555, %cst_347 {dimension_numbers = #tpu.dot_dimension_numbers<[1], [0], [0], [1], [0, 0, 1, 1], [], []>} : vector<8x32xf32>, vector<32x32xf32>, vector<8x32xf32> -> vector<8x32xf32>
    %557 = arith.addf %553, %556 : vector<8x32xf32>
    %558 = math.tanh %557 : vector<8x32xf32>
    %c96_i32_348 = arith.constant 96 : i32
    %559 = arith.addi %c96_i32_348, %519 : i32
    %560 = tpu.assume_multiple %559, 8 : i32
    %561 = arith.index_cast %560 : i32 to index
    %c0_349 = arith.constant 0 : index
    %562 = vector.load %arg12[%561, %c0_349] : memref<128x32xf32, #tpu.memory_space<vmem>>, vector<8x32xf32>
    %c3_350 = arith.constant 3 : index
    %c0_351 = arith.constant 0 : index
    %c0_352 = arith.constant 0 : index
    %563 = vector.load %arg6[%c3_350, %c0_351, %c0_352] : memref<4x32x32xf32, #tpu.memory_space<vmem>>, vector<1x32x32xf32>
    %564 = vector.shape_cast %563 : vector<1x32x32xf32> to vector<32x32xf32>
    %cst_353 = arith.constant dense<0.000000e+00> : vector<8x32xf32>
    %565 = tpu.matmul %451, %564, %cst_353 {dimension_numbers = #tpu.dot_dimension_numbers<[1], [0], [0], [1], [0, 0, 1, 1], [], []>} : vector<8x32xf32>, vector<32x32xf32>, vector<8x32xf32> -> vector<8x32xf32>
    %566 = arith.addf %562, %565 : vector<8x32xf32>
    %cst_354 = arith.constant 5.000000e-01 : f32
    %567 = vector.broadcast %cst_354 : f32 to vector<8x32xf32>
    %568 = arith.mulf %567, %566 : vector<8x32xf32>
    %569 = math.tanh %568 : vector<8x32xf32>
    %cst_355 = arith.constant 5.000000e-01 : f32
    %570 = vector.broadcast %cst_355 : f32 to vector<8x32xf32>
    %571 = arith.mulf %570, %569 : vector<8x32xf32>
    %cst_356 = arith.constant 5.000000e-01 : f32
    %572 = vector.broadcast %cst_356 : f32 to vector<8x32xf32>
    %573 = arith.addf %571, %572 : vector<8x32xf32>
    %574 = arith.mulf %549, %449 : vector<8x32xf32>
    %575 = arith.mulf %534, %558 : vector<8x32xf32>
    %576 = arith.addf %574, %575 : vector<8x32xf32>
    %577 = math.tanh %576 : vector<8x32xf32>
    %578 = arith.mulf %573, %577 : vector<8x32xf32>
    %579 = arith.index_cast %519 : i32 to index
    %c0_357 = arith.constant 0 : index
    %580 = vector.load %arg10[%579, %c0_357] : memref<32x32xf32, #tpu.memory_space<vmem>>, vector<8x32xf32>
    tpu.vector_store %arg10[%579, %c0_357], %578 {strides = array<i32>} : memref<32x32xf32, #tpu.memory_space<vmem>>, vector<8x32xf32>,
    %c4_i32 = arith.constant 4 : i32
    %c0_358 = arith.constant 0 : index
    %c0_359 = arith.constant 0 : index
    %581 = vector.load %arg13[%c0_358, %c0_359] : memref<8x32xf32, #tpu.memory_space<vmem>>, vector<8x32xf32>
    tpu.vector_store %arg13[%c0_358, %c0_359], %514 {strides = array<i32>} : memref<8x32xf32, #tpu.memory_space<vmem>>, vector<8x32xf32>,
    %c0_360 = arith.constant 0 : index
    %c0_361 = arith.constant 0 : index
    %582 = vector.load %arg14[%c0_360, %c0_361] : memref<8x32xf32, #tpu.memory_space<vmem>>, vector<8x32xf32>
    tpu.vector_store %arg14[%c0_360, %c0_361], %512 {strides = array<i32>} : memref<8x32xf32, #tpu.memory_space<vmem>>, vector<8x32xf32>,
    %c0_362 = arith.constant 0 : index
    %c0_363 = arith.constant 0 : index
    %583 = vector.load %arg15[%c0_362, %c0_363] : memref<8x32xf32, #tpu.memory_space<vmem>>, vector<8x32xf32>
    tpu.vector_store %arg15[%c0_362, %c0_363], %578 {strides = array<i32>} : memref<8x32xf32, #tpu.memory_space<vmem>>, vector<8x32xf32>,
    %c0_364 = arith.constant 0 : index
    %c0_365 = arith.constant 0 : index
    %584 = vector.load %arg16[%c0_364, %c0_365] : memref<8x32xf32, #tpu.memory_space<vmem>>, vector<8x32xf32>
    tpu.vector_store %arg16[%c0_364, %c0_365], %576 {strides = array<i32>} : memref<8x32xf32, #tpu.memory_space<vmem>>, vector<8x32xf32>,
    return
  }
  func.func @transform_0(%arg0: i32) -> (i32, i32) {
    %c0_i32 = arith.constant 0 : i32
    %c0_i32_0 = arith.constant 0 : i32
    return %arg0, %c0_i32 : i32, i32
  }
  func.func @transform_1(%arg0: i32) -> (i32, i32) {
    %c0_i32 = arith.constant 0 : i32
    %0 = arith.subi %c0_i32, %arg0 : i32
    %c0_i32_0 = arith.constant 0 : i32
    %c0_i32_1 = arith.constant 0 : i32
    return %0, %c0_i32_0 : i32, i32
  }
  func.func @transform_2(%arg0: i32) -> (i32, i32, i32) {
    %c0_i32 = arith.constant 0 : i32
    %c0_i32_0 = arith.constant 0 : i32
    %c0_i32_1 = arith.constant 0 : i32
    %c0_i32_2 = arith.constant 0 : i32
    return %c0_i32, %c0_i32_0, %c0_i32_1 : i32, i32, i32
  }
  func.func @transform_3(%arg0: i32) -> (i32, i32, i32) {
    %c0_i32 = arith.constant 0 : i32
    %c0_i32_0 = arith.constant 0 : i32
    %c0_i32_1 = arith.constant 0 : i32
    %c0_i32_2 = arith.constant 0 : i32
    return %c0_i32, %c0_i32_0, %c0_i32_1 : i32, i32, i32
  }
  func.func @transform_4(%arg0: i32) -> (i32, i32, i32) {
    %c0_i32 = arith.constant 0 : i32
    %c0_i32_0 = arith.constant 0 : i32
    %c0_i32_1 = arith.constant 0 : i32
    %c0_i32_2 = arith.constant 0 : i32
    return %c0_i32, %c0_i32_0, %c0_i32_1 : i32, i32, i32
  }
  func.func @transform_5(%arg0: i32) -> (i32, i32, i32) {
    %c0_i32 = arith.constant 0 : i32
    %c0_i32_0 = arith.constant 0 : i32
    %c0_i32_1 = arith.constant 0 : i32
    %c0_i32_2 = arith.constant 0 : i32
    return %c0_i32, %c0_i32_0, %c0_i32_1 : i32, i32, i32
  }
  func.func @transform_6(%arg0: i32) -> (i32, i32, i32) {
    %c0_i32 = arith.constant 0 : i32
    %c0_i32_0 = arith.constant 0 : i32
    %c0_i32_1 = arith.constant 0 : i32
    %c0_i32_2 = arith.constant 0 : i32
    return %c0_i32, %c0_i32_0, %c0_i32_1 : i32, i32, i32
  }
  func.func @transform_7(%arg0: i32) -> (i32, i32, i32) {
    %c0_i32 = arith.constant 0 : i32
    %c0_i32_0 = arith.constant 0 : i32
    %c0_i32_1 = arith.constant 0 : i32
    %c0_i32_2 = arith.constant 0 : i32
    return %c0_i32, %c0_i32_0, %c0_i32_1 : i32, i32, i32
  }
  func.func @transform_8(%arg0: i32) -> (i32, i32) {
    %c0_i32 = arith.constant 0 : i32
    %c0_i32_0 = arith.constant 0 : i32
    return %arg0, %c0_i32 : i32, i32
  }
  func.func @transform_9(%arg0: i32) -> (i32, i32) {
    %c0_i32 = arith.constant 0 : i32
    %0 = arith.subi %c0_i32, %arg0 : i32
    %c0_i32_0 = arith.constant 0 : i32
    %c0_i32_1 = arith.constant 0 : i32
    return %0, %c0_i32_0 : i32, i32
  }
}

</mosaic_0001>

<llo_original>
// kernel: pblstm_forward.1
$region0: #{pblstm_forward.1}
  #allocation0 [shape = 'u32[]', space=smem, size = 0x4, offset = 0x4, fixed_abs, tag = 'smem constant byte address 0x4 - core index']
  #allocation1 [shape = 'u32[144,128]{1,0:T(1,128)}', space=vmem, size = 0x12000, scoped, tag = 'internal scratch']
  #allocation2 [shape = 'f32[128,32]{1,0:T(8,128)}', space=vmem, size = 0x10000, scoped, tag = 'scratch operand']
  #allocation3 [shape = 'f32[128,32]{1,0:T(8,128)}', space=vmem, size = 0x10000, scoped, tag = 'scratch operand']
  #allocation4 [shape = 'f32[8,32]{1,0:T(8,128)}', space=vmem, size = 0x1000, scoped, tag = 'scratch operand']
  #allocation5 [shape = 'f32[8,32]{1,0:T(8,128)}', space=vmem, size = 0x1000, scoped, tag = 'scratch operand']
  #allocation6 [shape = 'f32[8,32]{1,0:T(8,128)}', space=vmem, size = 0x1000, scoped, tag = 'scratch operand']
  #allocation7 [shape = 'f32[8,32]{1,0:T(8,128)}', space=vmem, size = 0x1000, scoped, tag = 'scratch operand']
  %s0 = inlined_call_operand.vmem [shape: f32[32,32], index: 0, kind: input, shape index: {}, may-alias: {0,1}]
  %s1 = inlined_call_operand.vmem [shape: f32[32,32], index: 1, kind: input, shape index: {}, may-alias: {0,1}]
  %s2 = inlined_call_operand.vmem [shape: f32[4,32,32], index: 2, kind: input, shape index: {}]
  %s3 = inlined_call_operand.vmem [shape: f32[4,32,32], index: 3, kind: input, shape index: {}]
  %s4 = inlined_call_operand.vmem [shape: f32[4,32,32], index: 4, kind: input, shape index: {}]
  %s5 = inlined_call_operand.vmem [shape: f32[4,32,32], index: 5, kind: input, shape index: {}]
  %s6 = inlined_call_operand.vmem [shape: f32[4,1,32], index: 6, kind: input, shape index: {}]
  %s7 = inlined_call_operand.vmem [shape: f32[4,1,32], index: 7, kind: input, shape index: {}]
  %s8 = inlined_call_operand.vmem [shape: f32[32,32], index: 8, kind: output, shape index: {0}]
  %s9 = inlined_call_operand.vmem [shape: f32[32,32], index: 9, kind: output, shape index: {1}]
  %10 = xla_tuple %s8, %s9
  %s11 = sld [smem:[#allocation0]]
  $region54: #{pblstm_forward.1} parent=0
    _
  %s13 = ssub.s32 1, %s11
  %s14 = scalar_select 0, %s13, %s11
  // Predicated region
  $region2: #{pblstm_forward.1} parent=0 // pred_check
    _
  $region3: #{pblstm_forward.1} parent=0 // pred_check_branch
    %16 = sbr.rel (0) target = $region5
  $region4: #{pblstm_forward.1} parent=0 // pred_region
    _
  $region5: #{pblstm_forward.1} parent=0 // pred_fallthru
    _
  // Predicated region
  $region6: #{pblstm_forward.1} parent=0 // pred_check
    _
  $region7: #{pblstm_forward.1} parent=0 // pred_check_branch
    %18 = sbr.rel (0) target = $region9
  $region8: #{pblstm_forward.1} parent=0 // pred_region
    %s19 = ssub.s32 0, 0
    %s20 = smul.u32 4, %s19
    %p21 = scmp.lt.s32.totalorder %s20, 3
    %s22 = scalar_select %p21, %s20, 3
    %s23 = smul.addr %s22, 8
    %s24 = scalar_lea.vmem %s1, %s23
    %s25 = ssub.s32 0, 0
    %s26 = smul.u32 4, %s25
  $region9: #{pblstm_forward.1} parent=0 // pred_fallthru
    _
  // Predicated region
  $region10: #{pblstm_forward.1} parent=0 // pred_check
    _
  $region11: #{pblstm_forward.1} parent=0 // pred_check_branch
    %28 = sbr.rel (0) target = $region13
  $region12: #{pblstm_forward.1} parent=0 // pred_region
    _
  $region13: #{pblstm_forward.1} parent=0 // pred_fallthru
    _
  // Predicated region
  $region14: #{pblstm_forward.1} parent=0 // pred_check
    _
  $region15: #{pblstm_forward.1} parent=0 // pred_check_branch
    %30 = sbr.rel (0) target = $region17
  $region16: #{pblstm_forward.1} parent=0 // pred_region
    _
  $region17: #{pblstm_forward.1} parent=0 // pred_fallthru
    _
  // Predicated region
  $region18: #{pblstm_forward.1} parent=0 // pred_check
    _
  $region19: #{pblstm_forward.1} parent=0 // pred_check_branch
    %32 = sbr.rel (0) target = $region21
  $region20: #{pblstm_forward.1} parent=0 // pred_region
    _
  $region21: #{pblstm_forward.1} parent=0 // pred_fallthru
    _
  // Predicated region
  $region22: #{pblstm_forward.1} parent=0 // pred_check
    _
  $region23: #{pblstm_forward.1} parent=0 // pred_check_branch
    %34 = sbr.rel (0) target = $region25
  $region24: #{pblstm_forward.1} parent=0 // pred_region
    _
  $region25: #{pblstm_forward.1} parent=0 // pred_fallthru
    _
  // Predicated region
  $region26: #{pblstm_forward.1} parent=0 // pred_check
    _
  $region27: #{pblstm_forward.1} parent=0 // pred_check_branch
    %36 = sbr.rel (0) target = $region29
  $region28: #{pblstm_forward.1} parent=0 // pred_region
    _
  $region29: #{pblstm_forward.1} parent=0 // pred_fallthru
    _
  // Predicated region
  $region30: #{pblstm_forward.1} parent=0 // pred_check
    _
  $region31: #{pblstm_forward.1} parent=0 // pred_check_branch
    %38 = sbr.rel (0) target = $region33
  $region32: #{pblstm_forward.1} parent=0 // pred_region
    _
  $region33: #{pblstm_forward.1} parent=0 // pred_fallthru
    _
  %s39 = ssub.s32 0, 0
  %s40 = smul.u32 4, %s39
  %p41 = scmp.lt.s32.totalorder %s40, 3
  %s42 = scalar_select %p41, %s40, 3
  %s43 = smul.addr %s42, 8
  %s44 = scalar_lea.vmem %s1, %s43
  %s45 = ssub.s32 0, 0
  %s46 = smul.u32 4, %s45
  %p47 = scmp.lt.s32.totalorder %s46, 3
  %s48 = scalar_select %p47, %s46, 3
  %s49 = smul.addr %s48, 8
  %s50 = scalar_lea.vmem %s9, %s49
  %s51 = ssub.s32 0, 0
  %s52 = smul.u32 4, %s51
  %p53 = scmp.lt.s32.totalorder %s52, 3
  %s54 = scalar_select %p53, %s52, 3
  %s55 = smul.addr %s54, 8
  %s56 = scalar_lea.vmem %s1, %s55
  %s57 = ssub.s32 0, 0
  %s58 = smul.u32 4, %s57
  %s59 = ssub.s32 0, 0
  %s60 = smul.u32 4, %s59
  %p61 = scmp.lt.s32.totalorder %s60, 3
  %s62 = scalar_select %p61, %s60, 3
  %s63 = smul.addr %s62, 8
  %s64 = scalar_lea.vmem %s9, %s63
  %s65 = ssub.s32 0, 0
  %s66 = smul.u32 4, %s65
  %p67 = scmp.eq.s32.totalorder 0, 0
  // Predicated region
  $region34: #{pblstm_forward.1} parent=0 // pred_check
    %p68 = pneg %p67
  $region35: #{pblstm_forward.1} parent=0 // pred_check_branch
    %70 = sbr.rel (%p68) target = $region37
  $region36: #{pblstm_forward.1} parent=0 // pred_region
    %vm71 = vcmask 261120
    %72 = vst.msk [vmem:[#allocation4] sm:$0xff] %vm71, 0.0
    %73 = vst.msk [vmem:[#allocation5] sm:$0xff] %vm71, 0.0
    %74 = vst.msk [vmem:[#allocation6] sm:$0xff] %vm71, 0.0
    %75 = vst.msk [vmem:[#allocation7] sm:$0xff] %vm71, 0.0
  $region37: #{pblstm_forward.1} parent=0 // pred_fallthru
    _
  %v76 = vld [vmem:[%s0] sm:$0xff]
  %v77 = vld [vmem:[%s0 + $0x8] sm:$0xff]
  %v78 = vld [vmem:[%s0 + $0x10] sm:$0xff]
  %v79 = vld [vmem:[%s0 + $0x18] sm:$0xff]
  %v80 = vld [vmem:[%s2] sm:$0xff]
  %v81 = vld [vmem:[%s2 + $0x8] sm:$0xff]
  %v82 = vld [vmem:[%s2 + $0x10] sm:$0xff]
  %v83 = vld [vmem:[%s2 + $0x18] sm:$0xff]
  %v84 = vld [vmem:[%s6] sm:$0x1]
  %v86 = vlaneseq
  %v87 = vshrl.u32 %v86, 7
  %v88 = vsub.s32 0, %v87
  %v89 = vrot.slane %v84, %v88
  %vm91 = vcmask 261120
  %v93 = vsel %vm91, %v76, 0
  %v96 = vsel %vm91, %v77, 0
  %v99 = vsel %vm91, %v78, 0
  %v102 = vsel %vm91, %v79, 0
  %104 = vmatprep.subr.mxu0 0.0
  %105 = vmatpush1.msra.mxu0 %v80
  %106 = vmatprep.subr.mxu0 0.0
  %107 = vmatpush1.msra.mxu0 %v81
  %108 = vmatprep.subr.mxu0 0.0
  %109 = vmatpush1.msra.mxu0 %v82
  %110 = vmatprep.subr.mxu0 0.0
  %111 = vmatpush1.msra.mxu0 %v83
  %112 = vmatprep.subr.mxu0 0.0
  %113 = vmatpush1.msra.mxu0 0.0
  %114 = vmatprep.subr.mxu0 0.0
  %115 = vmatpush1.msra.mxu0 0.0
  %116 = vmatprep.subr.mxu0 0.0
  %117 = vmatpush1.msra.mxu0 0.0
  %118 = vmatprep.subr.mxu0 0.0
  %119 = vmatpush1.msra.mxu0 0.0
  %120 = vmatprep.subr.mxu0 0.0
  %121 = vmatpush1.msra.mxu0 0.0
  %122 = vmatprep.subr.mxu0 0.0
  %123 = vmatpush1.msra.mxu0 0.0
  %124 = vmatprep.subr.mxu0 0.0
  %125 = vmatpush1.msra.mxu0 0.0
  %126 = vmatprep.subr.mxu0 0.0
  %127 = vmatpush1.msra.mxu0 0.0
  %128 = vmatprep.subr.mxu0 0.0
  %129 = vmatpush1.msra.mxu0 0.0
  %130 = vmatprep.subr.mxu0 0.0
  %131 = vmatpush1.msra.mxu0 0.0
  %132 = vmatprep.subr.mxu0 0.0
  %133 = vmatpush1.msra.mxu0 0.0
  %134 = vmatprep.subr.mxu0 0.0
  %135 = vmatpush1.msra.mxu0 0.0
  %136 = vmatprep.subr.mxu0 0.0
  %137 = vmatpush1.msra.mxu0 0.0
  %138 = vmatprep.subr.mxu0 0.0
  %139 = vmatpush1.msra.mxu0 0.0
  %140 = vmatprep.subr.mxu0 0.0
  %141 = vmatpush1.msra.mxu0 0.0
  %142 = vmatprep.subr.mxu0 0.0
  %143 = vmatpush1.msra.mxu0 0.0
  %144 = vmatprep.subr.mxu0 0.0
  %145 = vmatpush1.msra.mxu0 0.0
  %146 = vmatprep.subr.mxu0 0.0
  %147 = vmatpush1.msra.mxu0 0.0
  %148 = vmatprep.subr.mxu0 0.0
  %149 = vmatpush1.msra.mxu0 0.0
  %150 = vmatprep.subr.mxu0 0.0
  %151 = vmatpush1.msra.mxu0 0.0
  %152 = vmatprep.subr.mxu0 0.0
  %153 = vmatpush1.msra.mxu0 0.0
  %154 = vmatprep.subr.mxu0 0.0
  %155 = vmatpush1.msra.mxu0 0.0
  %156 = vmatprep.subr.mxu0 0.0
  %157 = vmatpush1.msra.mxu0 0.0
  %158 = vmatprep.subr.mxu0 0.0
  %159 = vmatpush1.msra.mxu0 0.0
  %160 = vmatprep.subr.mxu0 0.0
  %161 = vmatpush1.msra.mxu0 0.0
  %162 = vmatprep.subr.mxu0 0.0
  %163 = vmatpush1.msra.mxu0 0.0
  %164 = vmatprep.subr.mxu0 0.0
  %165 = vmatpush1.msra.mxu0 0.0
  %166 = vmatprep.subr.mxu0 0.0
  %167 = vmatpush1.msra.mxu0 0.0
  %168 = vmatprep.mubr.f32.mxu0 0.0
  %169 = vmatmul.mubr.f32.gmra.mrb[0].mxu0 %v93
  %v170 = vpop.f32.mrb[0].mxu0
  %v171 = vadd.f32 %v89, %v170
  %v172 = vpop.f32.mrb[0].mxu0
  %173 = vmatprep.mubr.f32.mxu0 0.0
  %174 = vmatmul.mubr.f32.gmra.mrb[0].mxu0 %v96
  %v175 = vpop.f32.mrb[0].mxu0
  %v176 = vadd.f32 %v89, %v175
  %v177 = vpop.f32.mrb[0].mxu0
  %178 = vmatprep.mubr.f32.mxu0 0.0
  %179 = vmatmul.mubr.f32.gmra.mrb[0].mxu0 %v99
  %v180 = vpop.f32.mrb[0].mxu0
  %v181 = vadd.f32 %v89, %v180
  %v182 = vpop.f32.mrb[0].mxu0
  %183 = vmatprep.mubr.f32.mxu0 0.0
  %184 = vmatmul.mubr.f32.gmra.mrb[0].mxu0 %v102
  %v185 = vpop.f32.mrb[0].mxu0
  %v186 = vadd.f32 %v89, %v185
  %v187 = vpop.f32.mrb[0].mxu0
  %188 = vdwg.mxu0
  %189 = vst.msk [vmem:[#allocation2] sm:$0xff] %vm91, %v171
  %190 = vst.msk [vmem:[#allocation2 + $0x8] sm:$0xff] %vm91, %v176
  %191 = vst.msk [vmem:[#allocation2 + $0x10] sm:$0xff] %vm91, %v181
  %192 = vst.msk [vmem:[#allocation2 + $0x18] sm:$0xff] %vm91, %v186
  %s193 = scalar_lea.vmem %s2, 32
  %v194 = vld [vmem:[%s193] sm:$0xff]
  %v195 = vld [vmem:[%s193 + $0x8] sm:$0xff]
  %v196 = vld [vmem:[%s193 + $0x10] sm:$0xff]
  %v197 = vld [vmem:[%s193 + $0x18] sm:$0xff]
  %s198 = scalar_lea.vmem %s6, 1
  %v199 = vld [vmem:[%s198] sm:$0x1]
  %v201 = vlaneseq
  %v202 = vshrl.u32 %v201, 7
  %v203 = vsub.s32 0, %v202
  %v204 = vrot.slane %v199, %v203
  %206 = vmatprep.subr.mxu0 0.0
  %207 = vmatpush1.msra.mxu0 %v194
  %208 = vmatprep.subr.mxu0 0.0
  %209 = vmatpush1.msra.mxu0 %v195
  %210 = vmatprep.subr.mxu0 0.0
  %211 = vmatpush1.msra.mxu0 %v196
  %212 = vmatprep.subr.mxu0 0.0
  %213 = vmatpush1.msra.mxu0 %v197
  %214 = vmatprep.subr.mxu0 0.0
  %215 = vmatpush1.msra.mxu0 0.0
  %216 = vmatprep.subr.mxu0 0.0
  %217 = vmatpush1.msra.mxu0 0.0
  %218 = vmatprep.subr.mxu0 0.0
  %219 = vmatpush1.msra.mxu0 0.0
  %220 = vmatprep.subr.mxu0 0.0
  %221 = vmatpush1.msra.mxu0 0.0
  %222 = vmatprep.subr.mxu0 0.0
  %223 = vmatpush1.msra.mxu0 0.0
  %224 = vmatprep.subr.mxu0 0.0
  %225 = vmatpush1.msra.mxu0 0.0
  %226 = vmatprep.subr.mxu0 0.0
  %227 = vmatpush1.msra.mxu0 0.0
  %228 = vmatprep.subr.mxu0 0.0
  %229 = vmatpush1.msra.mxu0 0.0
  %230 = vmatprep.subr.mxu0 0.0
  %231 = vmatpush1.msra.mxu0 0.0
  %232 = vmatprep.subr.mxu0 0.0
  %233 = vmatpush1.msra.mxu0 0.0
  %234 = vmatprep.subr.mxu0 0.0
  %235 = vmatpush1.msra.mxu0 0.0
  %236 = vmatprep.subr.mxu0 0.0
  %237 = vmatpush1.msra.mxu0 0.0
  %238 = vmatprep.subr.mxu0 0.0
  %239 = vmatpush1.msra.mxu0 0.0
  %240 = vmatprep.subr.mxu0 0.0
  %241 = vmatpush1.msra.mxu0 0.0
  %242 = vmatprep.subr.mxu0 0.0
  %243 = vmatpush1.msra.mxu0 0.0
  %244 = vmatprep.subr.mxu0 0.0
  %245 = vmatpush1.msra.mxu0 0.0
  %246 = vmatprep.subr.mxu0 0.0
  %247 = vmatpush1.msra.mxu0 0.0
  %248 = vmatprep.subr.mxu0 0.0
  %249 = vmatpush1.msra.mxu0 0.0
  %250 = vmatprep.subr.mxu0 0.0
  %251 = vmatpush1.msra.mxu0 0.0
  %252 = vmatprep.subr.mxu0 0.0
  %253 = vmatpush1.msra.mxu0 0.0
  %254 = vmatprep.subr.mxu0 0.0
  %255 = vmatpush1.msra.mxu0 0.0
  %256 = vmatprep.subr.mxu0 0.0
  %257 = vmatpush1.msra.mxu0 0.0
  %258 = vmatprep.subr.mxu0 0.0
  %259 = vmatpush1.msra.mxu0 0.0
  %260 = vmatprep.subr.mxu0 0.0
  %261 = vmatpush1.msra.mxu0 0.0
  %262 = vmatprep.subr.mxu0 0.0
  %263 = vmatpush1.msra.mxu0 0.0
  %264 = vmatprep.subr.mxu0 0.0
  %265 = vmatpush1.msra.mxu0 0.0
  %266 = vmatprep.subr.mxu0 0.0
  %267 = vmatpush1.msra.mxu0 0.0
  %268 = vmatprep.subr.mxu0 0.0
  %269 = vmatpush1.msra.mxu0 0.0
  %270 = vmatprep.mubr.f32.mxu0 0.0
  %271 = vmatmul.mubr.f32.gmra.mrb[0].mxu0 %v93
  %v272 = vpop.f32.mrb[0].mxu0
  %v273 = vadd.f32 %v204, %v272
  %v274 = vpop.f32.mrb[0].mxu0
  %275 = vmatprep.mubr.f32.mxu0 0.0
  %276 = vmatmul.mubr.f32.gmra.mrb[0].mxu0 %v96
  %v277 = vpop.f32.mrb[0].mxu0
  %v278 = vadd.f32 %v204, %v277
  %v279 = vpop.f32.mrb[0].mxu0
  %280 = vmatprep.mubr.f32.mxu0 0.0
  %281 = vmatmul.mubr.f32.gmra.mrb[0].mxu0 %v99
  %v282 = vpop.f32.mrb[0].mxu0
  %v283 = vadd.f32 %v204, %v282
  %v284 = vpop.f32.mrb[0].mxu0
  %285 = vmatprep.mubr.f32.mxu0 0.0
  %286 = vmatmul.mubr.f32.gmra.mrb[0].mxu0 %v102
  %v287 = vpop.f32.mrb[0].mxu0
  %v288 = vadd.f32 %v204, %v287
  %v289 = vpop.f32.mrb[0].mxu0
  %290 = vdwg.mxu0
  %291 = vst.msk [vmem:[#allocation2 + $0x20] sm:$0xff] %vm91, %v273
  %292 = vst.msk [vmem:[#allocation2 + $0x28] sm:$0xff] %vm91, %v278
  %293 = vst.msk [vmem:[#allocation2 + $0x30] sm:$0xff] %vm91, %v283
  %294 = vst.msk [vmem:[#allocation2 + $0x38] sm:$0xff] %vm91, %v288
  %s295 = scalar_lea.vmem %s2, 64
  %v296 = vld [vmem:[%s295] sm:$0xff]
  %v297 = vld [vmem:[%s295 + $0x8] sm:$0xff]
  %v298 = vld [vmem:[%s295 + $0x10] sm:$0xff]
  %v299 = vld [vmem:[%s295 + $0x18] sm:$0xff]
  %s300 = scalar_lea.vmem %s6, 2
  %v301 = vld [vmem:[%s300] sm:$0x1]
  %v303 = vlaneseq
  %v304 = vshrl.u32 %v303, 7
  %v305 = vsub.s32 0, %v304
  %v306 = vrot.slane %v301, %v305
  %308 = vmatprep.subr.mxu0 0.0
  %309 = vmatpush1.msra.mxu0 %v296
  %310 = vmatprep.subr.mxu0 0.0
  %311 = vmatpush1.msra.mxu0 %v297
  %312 = vmatprep.subr.mxu0 0.0
  %313 = vmatpush1.msra.mxu0 %v298
  %314 = vmatprep.subr.mxu0 0.0
  %315 = vmatpush1.msra.mxu0 %v299
  %316 = vmatprep.subr.mxu0 0.0
  %317 = vmatpush1.msra.mxu0 0.0
  %318 = vmatprep.subr.mxu0 0.0
  %319 = vmatpush1.msra.mxu0 0.0
  %320 = vmatprep.subr.mxu0 0.0
  %321 = vmatpush1.msra.mxu0 0.0
  %322 = vmatprep.subr.mxu0 0.0
  %323 = vmatpush1.msra.mxu0 0.0
  %324 = vmatprep.subr.mxu0 0.0
  %325 = vmatpush1.msra.mxu0 0.0
  %326 = vmatprep.subr.mxu0 0.0
  %327 = vmatpush1.msra.mxu0 0.0
  %328 = vmatprep.subr.mxu0 0.0
  %329 = vmatpush1.msra.mxu0 0.0
  %330 = vmatprep.subr.mxu0 0.0
  %331 = vmatpush1.msra.mxu0 0.0
  %332 = vmatprep.subr.mxu0 0.0
  %333 = vmatpush1.msra.mxu0 0.0
  %334 = vmatprep.subr.mxu0 0.0
  %335 = vmatpush1.msra.mxu0 0.0
  %336 = vmatprep.subr.mxu0 0.0
  %337 = vmatpush1.msra.mxu0 0.0
  %338 = vmatprep.subr.mxu0 0.0
  %339 = vmatpush1.msra.mxu0 0.0
  %340 = vmatprep.subr.mxu0 0.0
  %341 = vmatpush1.msra.mxu0 0.0
  %342 = vmatprep.subr.mxu0 0.0
  %343 = vmatpush1.msra.mxu0 0.0
  %344 = vmatprep.subr.mxu0 0.0
  %345 = vmatpush1.msra.mxu0 0.0
  %346 = vmatprep.subr.mxu0 0.0
  %347 = vmatpush1.msra.mxu0 0.0
  %348 = vmatprep.subr.mxu0 0.0
  %349 = vmatpush1.msra.mxu0 0.0
  %350 = vmatprep.subr.mxu0 0.0
  %351 = vmatpush1.msra.mxu0 0.0
  %352 = vmatprep.subr.mxu0 0.0
  %353 = vmatpush1.msra.mxu0 0.0
  %354 = vmatprep.subr.mxu0 0.0
  %355 = vmatpush1.msra.mxu0 0.0
  %356 = vmatprep.subr.mxu0 0.0
  %357 = vmatpush1.msra.mxu0 0.0
  %358 = vmatprep.subr.mxu0 0.0
  %359 = vmatpush1.msra.mxu0 0.0
  %360 = vmatprep.subr.mxu0 0.0
  %361 = vmatpush1.msra.mxu0 0.0
  %362 = vmatprep.subr.mxu0 0.0
  %363 = vmatpush1.msra.mxu0 0.0
  %364 = vmatprep.subr.mxu0 0.0
  %365 = vmatpush1.msra.mxu0 0.0
  %366 = vmatprep.subr.mxu0 0.0
  %367 = vmatpush1.msra.mxu0 0.0
  %368 = vmatprep.subr.mxu0 0.0
  %369 = vmatpush1.msra.mxu0 0.0
  %370 = vmatprep.subr.mxu0 0.0
  %371 = vmatpush1.msra.mxu0 0.0
  %372 = vmatprep.mubr.f32.mxu0 0.0
  %373 = vmatmul.mubr.f32.gmra.mrb[0].mxu0 %v93
  %v374 = vpop.f32.mrb[0].mxu0
  %v375 = vadd.f32 %v306, %v374
  %v376 = vpop.f32.mrb[0].mxu0
  %377 = vmatprep.mubr.f32.mxu0 0.0
  %378 = vmatmul.mubr.f32.gmra.mrb[0].mxu0 %v96
  %v379 = vpop.f32.mrb[0].mxu0
  %v380 = vadd.f32 %v306, %v379
  %v381 = vpop.f32.mrb[0].mxu0
  %382 = vmatprep.mubr.f32.mxu0 0.0
  %383 = vmatmul.mubr.f32.gmra.mrb[0].mxu0 %v99
  %v384 = vpop.f32.mrb[0].mxu0
  %v385 = vadd.f32 %v306, %v384
  %v386 = vpop.f32.mrb[0].mxu0
  %387 = vmatprep.mubr.f32.mxu0 0.0
  %388 = vmatmul.mubr.f32.gmra.mrb[0].mxu0 %v102
  %v389 = vpop.f32.mrb[0].mxu0
  %v390 = vadd.f32 %v306, %v389
  %v391 = vpop.f32.mrb[0].mxu0
  %392 = vdwg.mxu0
  %393 = vst.msk [vmem:[#allocation2 + $0x40] sm:$0xff] %vm91, %v375
  %394 = vst.msk [vmem:[#allocation2 + $0x48] sm:$0xff] %vm91, %v380
  %395 = vst.msk [vmem:[#allocation2 + $0x50] sm:$0xff] %vm91, %v385
  %396 = vst.msk [vmem:[#allocation2 + $0x58] sm:$0xff] %vm91, %v390
  %s397 = scalar_lea.vmem %s2, 96
  %v398 = vld [vmem:[%s397] sm:$0xff]
  %v399 = vld [vmem:[%s397 + $0x8] sm:$0xff]
  %v400 = vld [vmem:[%s397 + $0x10] sm:$0xff]
  %v401 = vld [vmem:[%s397 + $0x18] sm:$0xff]
  %s402 = scalar_lea.vmem %s6, 3
  %v403 = vld [vmem:[%s402] sm:$0x1]
  %v405 = vlaneseq
  %v406 = vshrl.u32 %v405, 7
  %v407 = vsub.s32 0, %v406
  %v408 = vrot.slane %v403, %v407
  %410 = vmatprep.subr.mxu0 0.0
  %411 = vmatpush1.msra.mxu0 %v398
  %412 = vmatprep.subr.mxu0 0.0
  %413 = vmatpush1.msra.mxu0 %v399
  %414 = vmatprep.subr.mxu0 0.0
  %415 = vmatpush1.msra.mxu0 %v400
  %416 = vmatprep.subr.mxu0 0.0
  %417 = vmatpush1.msra.mxu0 %v401
  %418 = vmatprep.subr.mxu0 0.0
  %419 = vmatpush1.msra.mxu0 0.0
  %420 = vmatprep.subr.mxu0 0.0
  %421 = vmatpush1.msra.mxu0 0.0
  %422 = vmatprep.subr.mxu0 0.0
  %423 = vmatpush1.msra.mxu0 0.0
  %424 = vmatprep.subr.mxu0 0.0
  %425 = vmatpush1.msra.mxu0 0.0
  %426 = vmatprep.subr.mxu0 0.0
  %427 = vmatpush1.msra.mxu0 0.0
  %428 = vmatprep.subr.mxu0 0.0
  %429 = vmatpush1.msra.mxu0 0.0
  %430 = vmatprep.subr.mxu0 0.0
  %431 = vmatpush1.msra.mxu0 0.0
  %432 = vmatprep.subr.mxu0 0.0
  %433 = vmatpush1.msra.mxu0 0.0
  %434 = vmatprep.subr.mxu0 0.0
  %435 = vmatpush1.msra.mxu0 0.0
  %436 = vmatprep.subr.mxu0 0.0
  %437 = vmatpush1.msra.mxu0 0.0
  %438 = vmatprep.subr.mxu0 0.0
  %439 = vmatpush1.msra.mxu0 0.0
  %440 = vmatprep.subr.mxu0 0.0
  %441 = vmatpush1.msra.mxu0 0.0
  %442 = vmatprep.subr.mxu0 0.0
  %443 = vmatpush1.msra.mxu0 0.0
  %444 = vmatprep.subr.mxu0 0.0
  %445 = vmatpush1.msra.mxu0 0.0
  %446 = vmatprep.subr.mxu0 0.0
  %447 = vmatpush1.msra.mxu0 0.0
  %448 = vmatprep.subr.mxu0 0.0
  %449 = vmatpush1.msra.mxu0 0.0
  %450 = vmatprep.subr.mxu0 0.0
  %451 = vmatpush1.msra.mxu0 0.0
  %452 = vmatprep.subr.mxu0 0.0
  %453 = vmatpush1.msra.mxu0 0.0
  %454 = vmatprep.subr.mxu0 0.0
  %455 = vmatpush1.msra.mxu0 0.0
  %456 = vmatprep.subr.mxu0 0.0
  %457 = vmatpush1.msra.mxu0 0.0
  %458 = vmatprep.subr.mxu0 0.0
  %459 = vmatpush1.msra.mxu0 0.0
  %460 = vmatprep.subr.mxu0 0.0
  %461 = vmatpush1.msra.mxu0 0.0
  %462 = vmatprep.subr.mxu0 0.0
  %463 = vmatpush1.msra.mxu0 0.0
  %464 = vmatprep.subr.mxu0 0.0
  %465 = vmatpush1.msra.mxu0 0.0
  %466 = vmatprep.subr.mxu0 0.0
  %467 = vmatpush1.msra.mxu0 0.0
  %468 = vmatprep.subr.mxu0 0.0
  %469 = vmatpush1.msra.mxu0 0.0
  %470 = vmatprep.subr.mxu0 0.0
  %471 = vmatpush1.msra.mxu0 0.0
  %472 = vmatprep.subr.mxu0 0.0
  %473 = vmatpush1.msra.mxu0 0.0
  %474 = vmatprep.mubr.f32.mxu0 0.0
  %475 = vmatmul.mubr.f32.gmra.mrb[0].mxu0 %v93
  %v476 = vpop.f32.mrb[0].mxu0
  %v477 = vadd.f32 %v408, %v476
  %v478 = vpop.f32.mrb[0].mxu0
  %479 = vmatprep.mubr.f32.mxu0 0.0
  %480 = vmatmul.mubr.f32.gmra.mrb[0].mxu0 %v96
  %v481 = vpop.f32.mrb[0].mxu0
  %v482 = vadd.f32 %v408, %v481
  %v483 = vpop.f32.mrb[0].mxu0
  %484 = vmatprep.mubr.f32.mxu0 0.0
  %485 = vmatmul.mubr.f32.gmra.mrb[0].mxu0 %v99
  %v486 = vpop.f32.mrb[0].mxu0
  %v487 = vadd.f32 %v408, %v486
  %v488 = vpop.f32.mrb[0].mxu0
  %489 = vmatprep.mubr.f32.mxu0 0.0
  %490 = vmatmul.mubr.f32.gmra.mrb[0].mxu0 %v102
  %v491 = vpop.f32.mrb[0].mxu0
  %v492 = vadd.f32 %v408, %v491
  %v493 = vpop.f32.mrb[0].mxu0
  %494 = vdwg.mxu0
  %495 = vst.msk [vmem:[#allocation2 + $0x60] sm:$0xff] %vm91, %v477
  %496 = vst.msk [vmem:[#allocation2 + $0x68] sm:$0xff] %vm91, %v482
  %497 = vst.msk [vmem:[#allocation2 + $0x70] sm:$0xff] %vm91, %v487
  %498 = vst.msk [vmem:[#allocation2 + $0x78] sm:$0xff] %vm91, %v492
  %v499 = vld [vmem:[%s56] sm:$0xff]
  %v500 = vld [vmem:[%s56 + $0x8] sm:$0xff]
  %v501 = vld [vmem:[%s56 + $0x10] sm:$0xff]
  %v502 = vld [vmem:[%s56 + $0x18] sm:$0xff]
  %v503 = vld [vmem:[%s3] sm:$0xff]
  %v504 = vld [vmem:[%s3 + $0x8] sm:$0xff]
  %v505 = vld [vmem:[%s3 + $0x10] sm:$0xff]
  %v506 = vld [vmem:[%s3 + $0x18] sm:$0xff]
  %v507 = vld [vmem:[%s7] sm:$0x1]
  %v509 = vlaneseq
  %v510 = vshrl.u32 %v509, 7
  %v511 = vsub.s32 0, %v510
  %v512 = vrot.slane %v507, %v511
  %v515 = vsel %vm91, %v499, 0
  %v518 = vsel %vm91, %v500, 0
  %v521 = vsel %vm91, %v501, 0
  %v524 = vsel %vm91, %v502, 0
  %526 = vmatprep.subr.mxu0 0.0
  %527 = vmatpush1.msra.mxu0 %v503
  %528 = vmatprep.subr.mxu0 0.0
  %529 = vmatpush1.msra.mxu0 %v504
  %530 = vmatprep.subr.mxu0 0.0
  %531 = vmatpush1.msra.mxu0 %v505
  %532 = vmatprep.subr.mxu0 0.0
  %533 = vmatpush1.msra.mxu0 %v506
  %534 = vmatprep.subr.mxu0 0.0
  %535 = vmatpush1.msra.mxu0 0.0
  %536 = vmatprep.subr.mxu0 0.0
  %537 = vmatpush1.msra.mxu0 0.0
  %538 = vmatprep.subr.mxu0 0.0
  %539 = vmatpush1.msra.mxu0 0.0
  %540 = vmatprep.subr.mxu0 0.0
  %541 = vmatpush1.msra.mxu0 0.0
  %542 = vmatprep.subr.mxu0 0.0
  %543 = vmatpush1.msra.mxu0 0.0
  %544 = vmatprep.subr.mxu0 0.0
  %545 = vmatpush1.msra.mxu0 0.0
  %546 = vmatprep.subr.mxu0 0.0
  %547 = vmatpush1.msra.mxu0 0.0
  %548 = vmatprep.subr.mxu0 0.0
  %549 = vmatpush1.msra.mxu0 0.0
  %550 = vmatprep.subr.mxu0 0.0
  %551 = vmatpush1.msra.mxu0 0.0
  %552 = vmatprep.subr.mxu0 0.0
  %553 = vmatpush1.msra.mxu0 0.0
  %554 = vmatprep.subr.mxu0 0.0
  %555 = vmatpush1.msra.mxu0 0.0
  %556 = vmatprep.subr.mxu0 0.0
  %557 = vmatpush1.msra.mxu0 0.0
  %558 = vmatprep.subr.mxu0 0.0
  %559 = vmatpush1.msra.mxu0 0.0
  %560 = vmatprep.subr.mxu0 0.0
  %561 = vmatpush1.msra.mxu0 0.0
  %562 = vmatprep.subr.mxu0 0.0
  %563 = vmatpush1.msra.mxu0 0.0
  %564 = vmatprep.subr.mxu0 0.0
  %565 = vmatpush1.msra.mxu0 0.0
  %566 = vmatprep.subr.mxu0 0.0
  %567 = vmatpush1.msra.mxu0 0.0
  %568 = vmatprep.subr.mxu0 0.0
  %569 = vmatpush1.msra.mxu0 0.0
  %570 = vmatprep.subr.mxu0 0.0
  %571 = vmatpush1.msra.mxu0 0.0
  %572 = vmatprep.subr.mxu0 0.0
  %573 = vmatpush1.msra.mxu0 0.0
  %574 = vmatprep.subr.mxu0 0.0
  %575 = vmatpush1.msra.mxu0 0.0
  %576 = vmatprep.subr.mxu0 0.0
  %577 = vmatpush1.msra.mxu0 0.0
  %578 = vmatprep.subr.mxu0 0.0
  %579 = vmatpush1.msra.mxu0 0.0
  %580 = vmatprep.subr.mxu0 0.0
  %581 = vmatpush1.msra.mxu0 0.0
  %582 = vmatprep.subr.mxu0 0.0
  %583 = vmatpush1.msra.mxu0 0.0
  %584 = vmatprep.subr.mxu0 0.0
  %585 = vmatpush1.msra.mxu0 0.0
  %586 = vmatprep.subr.mxu0 0.0
  %587 = vmatpush1.msra.mxu0 0.0
  %588 = vmatprep.subr.mxu0 0.0
  %589 = vmatpush1.msra.mxu0 0.0
  %590 = vmatprep.mubr.f32.mxu0 0.0
  %591 = vmatmul.mubr.f32.gmra.mrb[0].mxu0 %v515
  %v592 = vpop.f32.mrb[0].mxu0
  %v593 = vadd.f32 %v512, %v592
  %v594 = vpop.f32.mrb[0].mxu0
  %595 = vmatprep.mubr.f32.mxu0 0.0
  %596 = vmatmul.mubr.f32.gmra.mrb[0].mxu0 %v518
  %v597 = vpop.f32.mrb[0].mxu0
  %v598 = vadd.f32 %v512, %v597
  %v599 = vpop.f32.mrb[0].mxu0
  %600 = vmatprep.mubr.f32.mxu0 0.0
  %601 = vmatmul.mubr.f32.gmra.mrb[0].mxu0 %v521
  %v602 = vpop.f32.mrb[0].mxu0
  %v603 = vadd.f32 %v512, %v602
  %v604 = vpop.f32.mrb[0].mxu0
  %605 = vmatprep.mubr.f32.mxu0 0.0
  %606 = vmatmul.mubr.f32.gmra.mrb[0].mxu0 %v524
  %v607 = vpop.f32.mrb[0].mxu0
  %v608 = vadd.f32 %v512, %v607
  %v609 = vpop.f32.mrb[0].mxu0
  %610 = vdwg.mxu0
  %611 = vst.msk [vmem:[#allocation3] sm:$0xff] %vm91, %v593
  %612 = vst.msk [vmem:[#allocation3 + $0x8] sm:$0xff] %vm91, %v598
  %613 = vst.msk [vmem:[#allocation3 + $0x10] sm:$0xff] %vm91, %v603
  %614 = vst.msk [vmem:[#allocation3 + $0x18] sm:$0xff] %vm91, %v608
  %s615 = scalar_lea.vmem %s3, 32
  %v616 = vld [vmem:[%s615] sm:$0xff]
  %v617 = vld [vmem:[%s615 + $0x8] sm:$0xff]
  %v618 = vld [vmem:[%s615 + $0x10] sm:$0xff]
  %v619 = vld [vmem:[%s615 + $0x18] sm:$0xff]
  %s620 = scalar_lea.vmem %s7, 1
  %v621 = vld [vmem:[%s620] sm:$0x1]
  %v623 = vlaneseq
  %v624 = vshrl.u32 %v623, 7
  %v625 = vsub.s32 0, %v624
  %v626 = vrot.slane %v621, %v625
  %628 = vmatprep.subr.mxu0 0.0
  %629 = vmatpush1.msra.mxu0 %v616
  %630 = vmatprep.subr.mxu0 0.0
  %631 = vmatpush1.msra.mxu0 %v617
  %632 = vmatprep.subr.mxu0 0.0
  %633 = vmatpush1.msra.mxu0 %v618
  %634 = vmatprep.subr.mxu0 0.0
  %635 = vmatpush1.msra.mxu0 %v619
  %636 = vmatprep.subr.mxu0 0.0
  %637 = vmatpush1.msra.mxu0 0.0
  %638 = vmatprep.subr.mxu0 0.0
  %639 = vmatpush1.msra.mxu0 0.0
  %640 = vmatprep.subr.mxu0 0.0
  %641 = vmatpush1.msra.mxu0 0.0
  %642 = vmatprep.subr.mxu0 0.0
  %643 = vmatpush1.msra.mxu0 0.0
  %644 = vmatprep.subr.mxu0 0.0
  %645 = vmatpush1.msra.mxu0 0.0
  %646 = vmatprep.subr.mxu0 0.0
  %647 = vmatpush1.msra.mxu0 0.0
  %648 = vmatprep.subr.mxu0 0.0
  %649 = vmatpush1.msra.mxu0 0.0
  %650 = vmatprep.subr.mxu0 0.0
  %651 = vmatpush1.msra.mxu0 0.0
  %652 = vmatprep.subr.mxu0 0.0
  %653 = vmatpush1.msra.mxu0 0.0
  %654 = vmatprep.subr.mxu0 0.0
  %655 = vmatpush1.msra.mxu0 0.0
  %656 = vmatprep.subr.mxu0 0.0
  %657 = vmatpush1.msra.mxu0 0.0
  %658 = vmatprep.subr.mxu0 0.0
  %659 = vmatpush1.msra.mxu0 0.0
  %660 = vmatprep.subr.mxu0 0.0
  %661 = vmatpush1.msra.mxu0 0.0
  %662 = vmatprep.subr.mxu0 0.0
  %663 = vmatpush1.msra.mxu0 0.0
  %664 = vmatprep.subr.mxu0 0.0
  %665 = vmatpush1.msra.mxu0 0.0
  %666 = vmatprep.subr.mxu0 0.0
  %667 = vmatpush1.msra.mxu0 0.0
  %668 = vmatprep.subr.mxu0 0.0
  %669 = vmatpush1.msra.mxu0 0.0
  %670 = vmatprep.subr.mxu0 0.0
  %671 = vmatpush1.msra.mxu0 0.0
  %672 = vmatprep.subr.mxu0 0.0
  %673 = vmatpush1.msra.mxu0 0.0
  %674 = vmatprep.subr.mxu0 0.0
  %675 = vmatpush1.msra.mxu0 0.0
  %676 = vmatprep.subr.mxu0 0.0
  %677 = vmatpush1.msra.mxu0 0.0
  %678 = vmatprep.subr.mxu0 0.0
  %679 = vmatpush1.msra.mxu0 0.0
  %680 = vmatprep.subr.mxu0 0.0
  %681 = vmatpush1.msra.mxu0 0.0
  %682 = vmatprep.subr.mxu0 0.0
  %683 = vmatpush1.msra.mxu0 0.0
  %684 = vmatprep.subr.mxu0 0.0
  %685 = vmatpush1.msra.mxu0 0.0
  %686 = vmatprep.subr.mxu0 0.0
  %687 = vmatpush1.msra.mxu0 0.0
  %688 = vmatprep.subr.mxu0 0.0
  %689 = vmatpush1.msra.mxu0 0.0
  %690 = vmatprep.subr.mxu0 0.0
  %691 = vmatpush1.msra.mxu0 0.0
  %692 = vmatprep.mubr.f32.mxu0 0.0
  %693 = vmatmul.mubr.f32.gmra.mrb[0].mxu0 %v515
  %v694 = vpop.f32.mrb[0].mxu0
  %v695 = vadd.f32 %v626, %v694
  %v696 = vpop.f32.mrb[0].mxu0
  %697 = vmatprep.mubr.f32.mxu0 0.0
  %698 = vmatmul.mubr.f32.gmra.mrb[0].mxu0 %v518
  %v699 = vpop.f32.mrb[0].mxu0
  %v700 = vadd.f32 %v626, %v699
  %v701 = vpop.f32.mrb[0].mxu0
  %702 = vmatprep.mubr.f32.mxu0 0.0
  %703 = vmatmul.mubr.f32.gmra.mrb[0].mxu0 %v521
  %v704 = vpop.f32.mrb[0].mxu0
  %v705 = vadd.f32 %v626, %v704
  %v706 = vpop.f32.mrb[0].mxu0
  %707 = vmatprep.mubr.f32.mxu0 0.0
  %708 = vmatmul.mubr.f32.gmra.mrb[0].mxu0 %v524
  %v709 = vpop.f32.mrb[0].mxu0
  %v710 = vadd.f32 %v626, %v709
  %v711 = vpop.f32.mrb[0].mxu0
  %712 = vdwg.mxu0
  %713 = vst.msk [vmem:[#allocation3 + $0x20] sm:$0xff] %vm91, %v695
  %714 = vst.msk [vmem:[#allocation3 + $0x28] sm:$0xff] %vm91, %v700
  %715 = vst.msk [vmem:[#allocation3 + $0x30] sm:$0xff] %vm91, %v705
  %716 = vst.msk [vmem:[#allocation3 + $0x38] sm:$0xff] %vm91, %v710
  %s717 = scalar_lea.vmem %s3, 64
  %v718 = vld [vmem:[%s717] sm:$0xff]
  %v719 = vld [vmem:[%s717 + $0x8] sm:$0xff]
  %v720 = vld [vmem:[%s717 + $0x10] sm:$0xff]
  %v721 = vld [vmem:[%s717 + $0x18] sm:$0xff]
  %s722 = scalar_lea.vmem %s7, 2
  %v723 = vld [vmem:[%s722] sm:$0x1]
  %v725 = vlaneseq
  %v726 = vshrl.u32 %v725, 7
  %v727 = vsub.s32 0, %v726
  %v728 = vrot.slane %v723, %v727
  %730 = vmatprep.subr.mxu0 0.0
  %731 = vmatpush1.msra.mxu0 %v718
  %732 = vmatprep.subr.mxu0 0.0
  %733 = vmatpush1.msra.mxu0 %v719
  %734 = vmatprep.subr.mxu0 0.0
  %735 = vmatpush1.msra.mxu0 %v720
  %736 = vmatprep.subr.mxu0 0.0
  %737 = vmatpush1.msra.mxu0 %v721
  %738 = vmatprep.subr.mxu0 0.0
  %739 = vmatpush1.msra.mxu0 0.0
  %740 = vmatprep.subr.mxu0 0.0
  %741 = vmatpush1.msra.mxu0 0.0
  %742 = vmatprep.subr.mxu0 0.0
  %743 = vmatpush1.msra.mxu0 0.0
  %744 = vmatprep.subr.mxu0 0.0
  %745 = vmatpush1.msra.mxu0 0.0
  %746 = vmatprep.subr.mxu0 0.0
  %747 = vmatpush1.msra.mxu0 0.0
  %748 = vmatprep.subr.mxu0 0.0
  %749 = vmatpush1.msra.mxu0 0.0
  %750 = vmatprep.subr.mxu0 0.0
  %751 = vmatpush1.msra.mxu0 0.0
  %752 = vmatprep.subr.mxu0 0.0
  %753 = vmatpush1.msra.mxu0 0.0
  %754 = vmatprep.subr.mxu0 0.0
  %755 = vmatpush1.msra.mxu0 0.0
  %756 = vmatprep.subr.mxu0 0.0
  %757 = vmatpush1.msra.mxu0 0.0
  %758 = vmatprep.subr.mxu0 0.0
  %759 = vmatpush1.msra.mxu0 0.0
  %760 = vmatprep.subr.mxu0 0.0
  %761 = vmatpush1.msra.mxu0 0.0
  %762 = vmatprep.subr.mxu0 0.0
  %763 = vmatpush1.msra.mxu0 0.0
  %764 = vmatprep.subr.mxu0 0.0
  %765 = vmatpush1.msra.mxu0 0.0
  %766 = vmatprep.subr.mxu0 0.0
  %767 = vmatpush1.msra.mxu0 0.0
  %768 = vmatprep.subr.mxu0 0.0
  %769 = vmatpush1.msra.mxu0 0.0
  %770 = vmatprep.subr.mxu0 0.0
  %771 = vmatpush1.msra.mxu0 0.0
  %772 = vmatprep.subr.mxu0 0.0
  %773 = vmatpush1.msra.mxu0 0.0
  %774 = vmatprep.subr.mxu0 0.0
  %775 = vmatpush1.msra.mxu0 0.0
  %776 = vmatprep.subr.mxu0 0.0
  %777 = vmatpush1.msra.mxu0 0.0
  %778 = vmatprep.subr.mxu0 0.0
  %779 = vmatpush1.msra.mxu0 0.0
  %780 = vmatprep.subr.mxu0 0.0
  %781 = vmatpush1.msra.mxu0 0.0
  %782 = vmatprep.subr.mxu0 0.0
  %783 = vmatpush1.msra.mxu0 0.0
  %784 = vmatprep.subr.mxu0 0.0
  %785 = vmatpush1.msra.mxu0 0.0
  %786 = vmatprep.subr.mxu0 0.0
  %787 = vmatpush1.msra.mxu0 0.0
  %788 = vmatprep.subr.mxu0 0.0
  %789 = vmatpush1.msra.mxu0 0.0
  %790 = vmatprep.subr.mxu0 0.0
  %791 = vmatpush1.msra.mxu0 0.0
  %792 = vmatprep.subr.mxu0 0.0
  %793 = vmatpush1.msra.mxu0 0.0
  %794 = vmatprep.mubr.f32.mxu0 0.0
  %795 = vmatmul.mubr.f32.gmra.mrb[0].mxu0 %v515
  %v796 = vpop.f32.mrb[0].mxu0
  %v797 = vadd.f32 %v728, %v796
  %v798 = vpop.f32.mrb[0].mxu0
  %799 = vmatprep.mubr.f32.mxu0 0.0
  %800 = vmatmul.mubr.f32.gmra.mrb[0].mxu0 %v518
  %v801 = vpop.f32.mrb[0].mxu0
  %v802 = vadd.f32 %v728, %v801
  %v803 = vpop.f32.mrb[0].mxu0
  %804 = vmatprep.mubr.f32.mxu0 0.0
  %805 = vmatmul.mubr.f32.gmra.mrb[0].mxu0 %v521
  %v806 = vpop.f32.mrb[0].mxu0
  %v807 = vadd.f32 %v728, %v806
  %v808 = vpop.f32.mrb[0].mxu0
  %809 = vmatprep.mubr.f32.mxu0 0.0
  %810 = vmatmul.mubr.f32.gmra.mrb[0].mxu0 %v524
  %v811 = vpop.f32.mrb[0].mxu0
  %v812 = vadd.f32 %v728, %v811
  %v813 = vpop.f32.mrb[0].mxu0
  %814 = vdwg.mxu0
  %815 = vst.msk [vmem:[#allocation3 + $0x40] sm:$0xff] %vm91, %v797
  %816 = vst.msk [vmem:[#allocation3 + $0x48] sm:$0xff] %vm91, %v802
  %817 = vst.msk [vmem:[#allocation3 + $0x50] sm:$0xff] %vm91, %v807
  %818 = vst.msk [vmem:[#allocation3 + $0x58] sm:$0xff] %vm91, %v812
  %s819 = scalar_lea.vmem %s3, 96
  %v820 = vld [vmem:[%s819] sm:$0xff]
  %v821 = vld [vmem:[%s819 + $0x8] sm:$0xff]
  %v822 = vld [vmem:[%s819 + $0x10] sm:$0xff]
  %v823 = vld [vmem:[%s819 + $0x18] sm:$0xff]
  %s824 = scalar_lea.vmem %s7, 3
  %v825 = vld [vmem:[%s824] sm:$0x1]
  %v827 = vlaneseq
  %v828 = vshrl.u32 %v827, 7
  %v829 = vsub.s32 0, %v828
  %v830 = vrot.slane %v825, %v829
  %832 = vmatprep.subr.mxu0 0.0
  %833 = vmatpush1.msra.mxu0 %v820
  %834 = vmatprep.subr.mxu0 0.0
  %835 = vmatpush1.msra.mxu0 %v821
  %836 = vmatprep.subr.mxu0 0.0
  %837 = vmatpush1.msra.mxu0 %v822
  %838 = vmatprep.subr.mxu0 0.0
  %839 = vmatpush1.msra.mxu0 %v823
  %840 = vmatprep.subr.mxu0 0.0
  %841 = vmatpush1.msra.mxu0 0.0
  %842 = vmatprep.subr.mxu0 0.0
  %843 = vmatpush1.msra.mxu0 0.0
  %844 = vmatprep.subr.mxu0 0.0
  %845 = vmatpush1.msra.mxu0 0.0
  %846 = vmatprep.subr.mxu0 0.0
  %847 = vmatpush1.msra.mxu0 0.0
  %848 = vmatprep.subr.mxu0 0.0
  %849 = vmatpush1.msra.mxu0 0.0
  %850 = vmatprep.subr.mxu0 0.0
  %851 = vmatpush1.msra.mxu0 0.0
  %852 = vmatprep.subr.mxu0 0.0
  %853 = vmatpush1.msra.mxu0 0.0
  %854 = vmatprep.subr.mxu0 0.0
  %855 = vmatpush1.msra.mxu0 0.0
  %856 = vmatprep.subr.mxu0 0.0
  %857 = vmatpush1.msra.mxu0 0.0
  %858 = vmatprep.subr.mxu0 0.0
  %859 = vmatpush1.msra.mxu0 0.0
  %860 = vmatprep.subr.mxu0 0.0
  %861 = vmatpush1.msra.mxu0 0.0
  %862 = vmatprep.subr.mxu0 0.0
  %863 = vmatpush1.msra.mxu0 0.0
  %864 = vmatprep.subr.mxu0 0.0
  %865 = vmatpush1.msra.mxu0 0.0
  %866 = vmatprep.subr.mxu0 0.0
  %867 = vmatpush1.msra.mxu0 0.0
  %868 = vmatprep.subr.mxu0 0.0
  %869 = vmatpush1.msra.mxu0 0.0
  %870 = vmatprep.subr.mxu0 0.0
  %871 = vmatpush1.msra.mxu0 0.0
  %872 = vmatprep.subr.mxu0 0.0
  %873 = vmatpush1.msra.mxu0 0.0
  %874 = vmatprep.subr.mxu0 0.0
  %875 = vmatpush1.msra.mxu0 0.0
  %876 = vmatprep.subr.mxu0 0.0
  %877 = vmatpush1.msra.mxu0 0.0
  %878 = vmatprep.subr.mxu0 0.0
  %879 = vmatpush1.msra.mxu0 0.0
  %880 = vmatprep.subr.mxu0 0.0
  %881 = vmatpush1.msra.mxu0 0.0
  %882 = vmatprep.subr.mxu0 0.0
  %883 = vmatpush1.msra.mxu0 0.0
  %884 = vmatprep.subr.mxu0 0.0
  %885 = vmatpush1.msra.mxu0 0.0
  %886 = vmatprep.subr.mxu0 0.0
  %887 = vmatpush1.msra.mxu0 0.0
  %888 = vmatprep.subr.mxu0 0.0
  %889 = vmatpush1.msra.mxu0 0.0
  %890 = vmatprep.subr.mxu0 0.0
  %891 = vmatpush1.msra.mxu0 0.0
  %892 = vmatprep.subr.mxu0 0.0
  %893 = vmatpush1.msra.mxu0 0.0
  %894 = vmatprep.subr.mxu0 0.0
  %895 = vmatpush1.msra.mxu0 0.0
  %896 = vmatprep.mubr.f32.mxu0 0.0
  %897 = vmatmul.mubr.f32.gmra.mrb[0].mxu0 %v515
  %v898 = vpop.f32.mrb[0].mxu0
  %v899 = vadd.f32 %v830, %v898
  %v900 = vpop.f32.mrb[0].mxu0
  %901 = vmatprep.mubr.f32.mxu0 0.0
  %902 = vmatmul.mubr.f32.gmra.mrb[0].mxu0 %v518
  %v903 = vpop.f32.mrb[0].mxu0
  %v904 = vadd.f32 %v830, %v903
  %v905 = vpop.f32.mrb[0].mxu0
  %906 = vmatprep.mubr.f32.mxu0 0.0
  %907 = vmatmul.mubr.f32.gmra.mrb[0].mxu0 %v521
  %v908 = vpop.f32.mrb[0].mxu0
  %v909 = vadd.f32 %v830, %v908
  %v910 = vpop.f32.mrb[0].mxu0
  %911 = vmatprep.mubr.f32.mxu0 0.0
  %912 = vmatmul.mubr.f32.gmra.mrb[0].mxu0 %v524
  %v913 = vpop.f32.mrb[0].mxu0
  %v914 = vadd.f32 %v830, %v913
  %v915 = vpop.f32.mrb[0].mxu0
  %916 = vdwg.mxu0
  %917 = vst.msk [vmem:[#allocation3 + $0x60] sm:$0xff] %vm91, %v899
  %918 = vst.msk [vmem:[#allocation3 + $0x68] sm:$0xff] %vm91, %v904
  %919 = vst.msk [vmem:[#allocation3 + $0x70] sm:$0xff] %vm91, %v909
  %920 = vst.msk [vmem:[#allocation3 + $0x78] sm:$0xff] %vm91, %v914
  %v921 = vld [vmem:[#allocation4] sm:$0xff]
  %v922 = vld [vmem:[#allocation5] sm:$0xff]
  %v923 = vld [vmem:[#allocation6] sm:$0xff]
  %v924 = vld [vmem:[#allocation7] sm:$0xff]
  %v925 = vld [vmem:[#allocation2] sm:$0xff]
  %v926 = vld [vmem:[%s4] sm:$0xff]
  %v927 = vld [vmem:[%s4 + $0x8] sm:$0xff]
  %v928 = vld [vmem:[%s4 + $0x10] sm:$0xff]
  %v929 = vld [vmem:[%s4 + $0x18] sm:$0xff]
  %v931 = vsel %vm91, %v921, 0
  %933 = vmatprep.subr.mxu0 0.0
  %934 = vmatpush1.msra.mxu0 %v926
  %935 = vmatprep.subr.mxu0 0.0
  %936 = vmatpush1.msra.mxu0 %v927
  %937 = vmatprep.subr.mxu0 0.0
  %938 = vmatpush1.msra.mxu0 %v928
  %939 = vmatprep.subr.mxu0 0.0
  %940 = vmatpush1.msra.mxu0 %v929
  %941 = vmatprep.subr.mxu0 0.0
  %942 = vmatpush1.msra.mxu0 0.0
  %943 = vmatprep.subr.mxu0 0.0
  %944 = vmatpush1.msra.mxu0 0.0
  %945 = vmatprep.subr.mxu0 0.0
  %946 = vmatpush1.msra.mxu0 0.0
  %947 = vmatprep.subr.mxu0 0.0
  %948 = vmatpush1.msra.mxu0 0.0
  %949 = vmatprep.subr.mxu0 0.0
  %950 = vmatpush1.msra.mxu0 0.0
  %951 = vmatprep.subr.mxu0 0.0
  %952 = vmatpush1.msra.mxu0 0.0
  %953 = vmatprep.subr.mxu0 0.0
  %954 = vmatpush1.msra.mxu0 0.0
  %955 = vmatprep.subr.mxu0 0.0
  %956 = vmatpush1.msra.mxu0 0.0
  %957 = vmatprep.subr.mxu0 0.0
  %958 = vmatpush1.msra.mxu0 0.0
  %959 = vmatprep.subr.mxu0 0.0
  %960 = vmatpush1.msra.mxu0 0.0
  %961 = vmatprep.subr.mxu0 0.0
  %962 = vmatpush1.msra.mxu0 0.0
  %963 = vmatprep.subr.mxu0 0.0
  %964 = vmatpush1.msra.mxu0 0.0
  %965 = vmatprep.subr.mxu0 0.0
  %966 = vmatpush1.msra.mxu0 0.0
  %967 = vmatprep.subr.mxu0 0.0
  %968 = vmatpush1.msra.mxu0 0.0
  %969 = vmatprep.subr.mxu0 0.0
  %970 = vmatpush1.msra.mxu0 0.0
  %971 = vmatprep.subr.mxu0 0.0
  %972 = vmatpush1.msra.mxu0 0.0
  %973 = vmatprep.subr.mxu0 0.0
  %974 = vmatpush1.msra.mxu0 0.0
  %975 = vmatprep.subr.mxu0 0.0
  %976 = vmatpush1.msra.mxu0 0.0
  %977 = vmatprep.subr.mxu0 0.0
  %978 = vmatpush1.msra.mxu0 0.0
  %979 = vmatprep.subr.mxu0 0.0
  %980 = vmatpush1.msra.mxu0 0.0
  %981 = vmatprep.subr.mxu0 0.0
  %982 = vmatpush1.msra.mxu0 0.0
  %983 = vmatprep.subr.mxu0 0.0
  %984 = vmatpush1.msra.mxu0 0.0
  %985 = vmatprep.subr.mxu0 0.0
  %986 = vmatpush1.msra.mxu0 0.0
  %987 = vmatprep.subr.mxu0 0.0
  %988 = vmatpush1.msra.mxu0 0.0
  %989 = vmatprep.subr.mxu0 0.0
  %990 = vmatpush1.msra.mxu0 0.0
  %991 = vmatprep.subr.mxu0 0.0
  %992 = vmatpush1.msra.mxu0 0.0
  %993 = vmatprep.subr.mxu0 0.0
  %994 = vmatpush1.msra.mxu0 0.0
  %995 = vmatprep.subr.mxu0 0.0
  %996 = vmatpush1.msra.mxu0 0.0
  %997 = vmatprep.mubr.f32.mxu0 0.0
  %998 = vmatmul.mubr.f32.gmra.mrb[0].mxu0 %v931
  %v999 = vpop.f32.mrb[0].mxu0
  %v1000 = vadd.f32 0.0, %v999
  %v1001 = vpop.f32.mrb[0].mxu0
  %1002 = vdwg.mxu0
  %v1003 = vadd.f32 %v925, %v1000
  %v1004 = vmul.f32 %v1003, 0.5
  %v1005 = vtanh.pop %v1004
  %v1006 = vmul.f32 %v1005, 0.5
  %v1007 = vadd.f32 %v1006, 0.5
  %s1008 = sadd.s32 0, 32
  %s1009 = scalar_lea.vmem [#allocation2], %s1008
  %v1010 = vld [vmem:[%s1009] sm:$0xff]
  %s1011 = scalar_lea.vmem %s4, 32
  %v1012 = vld [vmem:[%s1011] sm:$0xff]
  %v1013 = vld [vmem:[%s1011 + $0x8] sm:$0xff]
  %v1014 = vld [vmem:[%s1011 + $0x10] sm:$0xff]
  %v1015 = vld [vmem:[%s1011 + $0x18] sm:$0xff]
  %1016 = vmatprep.subr.mxu0 0.0
  %1017 = vmatpush1.msra.mxu0 %v1012
  %1018 = vmatprep.subr.mxu0 0.0
  %1019 = vmatpush1.msra.mxu0 %v1013
  %1020 = vmatprep.subr.mxu0 0.0
  %1021 = vmatpush1.msra.mxu0 %v1014
  %1022 = vmatprep.subr.mxu0 0.0
  %1023 = vmatpush1.msra.mxu0 %v1015
  %1024 = vmatprep.subr.mxu0 0.0
  %1025 = vmatpush1.msra.mxu0 0.0
  %1026 = vmatprep.subr.mxu0 0.0
  %1027 = vmatpush1.msra.mxu0 0.0
  %1028 = vmatprep.subr.mxu0 0.0
  %1029 = vmatpush1.msra.mxu0 0.0
  %1030 = vmatprep.subr.mxu0 0.0
  %1031 = vmatpush1.msra.mxu0 0.0
  %1032 = vmatprep.subr.mxu0 0.0
  %1033 = vmatpush1.msra.mxu0 0.0
  %1034 = vmatprep.subr.mxu0 0.0
  %1035 = vmatpush1.msra.mxu0 0.0
  %1036 = vmatprep.subr.mxu0 0.0
  %1037 = vmatpush1.msra.mxu0 0.0
  %1038 = vmatprep.subr.mxu0 0.0
  %1039 = vmatpush1.msra.mxu0 0.0
  %1040 = vmatprep.subr.mxu0 0.0
  %1041 = vmatpush1.msra.mxu0 0.0
  %1042 = vmatprep.subr.mxu0 0.0
  %1043 = vmatpush1.msra.mxu0 0.0
  %1044 = vmatprep.subr.mxu0 0.0
  %1045 = vmatpush1.msra.mxu0 0.0
  %1046 = vmatprep.subr.mxu0 0.0
  %1047 = vmatpush1.msra.mxu0 0.0
  %1048 = vmatprep.subr.mxu0 0.0
  %1049 = vmatpush1.msra.mxu0 0.0
  %1050 = vmatprep.subr.mxu0 0.0
  %1051 = vmatpush1.msra.mxu0 0.0
  %1052 = vmatprep.subr.mxu0 0.0
  %1053 = vmatpush1.msra.mxu0 0.0
  %1054 = vmatprep.subr.mxu0 0.0
  %1055 = vmatpush1.msra.mxu0 0.0
  %1056 = vmatprep.subr.mxu0 0.0
  %1057 = vmatpush1.msra.mxu0 0.0
  %1058 = vmatprep.subr.mxu0 0.0
  %1059 = vmatpush1.msra.mxu0 0.0
  %1060 = vmatprep.subr.mxu0 0.0
  %1061 = vmatpush1.msra.mxu0 0.0
  %1062 = vmatprep.subr.mxu0 0.0
  %1063 = vmatpush1.msra.mxu0 0.0
  %1064 = vmatprep.subr.mxu0 0.0
  %1065 = vmatpush1.msra.mxu0 0.0
  %1066 = vmatprep.subr.mxu0 0.0
  %1067 = vmatpush1.msra.mxu0 0.0
  %1068 = vmatprep.subr.mxu0 0.0
  %1069 = vmatpush1.msra.mxu0 0.0
  %1070 = vmatprep.subr.mxu0 0.0
  %1071 = vmatpush1.msra.mxu0 0.0
  %1072 = vmatprep.subr.mxu0 0.0
  %1073 = vmatpush1.msra.mxu0 0.0
  %1074 = vmatprep.subr.mxu0 0.0
  %1075 = vmatpush1.msra.mxu0 0.0
  %1076 = vmatprep.subr.mxu0 0.0
  %1077 = vmatpush1.msra.mxu0 0.0
  %1078 = vmatprep.subr.mxu0 0.0
  %1079 = vmatpush1.msra.mxu0 0.0
  %1080 = vmatprep.mubr.f32.mxu0 0.0
  %1081 = vmatmul.mubr.f32.gmra.mrb[0].mxu0 %v931
  %v1082 = vpop.f32.mrb[0].mxu0
  %v1083 = vadd.f32 0.0, %v1082
  %v1084 = vpop.f32.mrb[0].mxu0
  %1085 = vdwg.mxu0
  %v1086 = vadd.f32 %v1010, %v1083
  %v1087 = vmul.f32 %v1086, 0.5
  %v1088 = vtanh.pop %v1087
  %v1089 = vmul.f32 %v1088, 0.5
  %v1090 = vadd.f32 %v1089, 0.5
  %s1091 = sadd.s32 0, 64
  %s1092 = scalar_lea.vmem [#allocation2], %s1091
  %v1093 = vld [vmem:[%s1092] sm:$0xff]
  %s1094 = scalar_lea.vmem %s4, 64
  %v1095 = vld [vmem:[%s1094] sm:$0xff]
  %v1096 = vld [vmem:[%s1094 + $0x8] sm:$0xff]
  %v1097 = vld [vmem:[%s1094 + $0x10] sm:$0xff]
  %v1098 = vld [vmem:[%s1094 + $0x18] sm:$0xff]
  %1099 = vmatprep.subr.mxu0 0.0
  %1100 = vmatpush1.msra.mxu0 %v1095
  %1101 = vmatprep.subr.mxu0 0.0
  %1102 = vmatpush1.msra.mxu0 %v1096
  %1103 = vmatprep.subr.mxu0 0.0
  %1104 = vmatpush1.msra.mxu0 %v1097
  %1105 = vmatprep.subr.mxu0 0.0
  %1106 = vmatpush1.msra.mxu0 %v1098
  %1107 = vmatprep.subr.mxu0 0.0
  %1108 = vmatpush1.msra.mxu0 0.0
  %1109 = vmatprep.subr.mxu0 0.0
  %1110 = vmatpush1.msra.mxu0 0.0
  %1111 = vmatprep.subr.mxu0 0.0
  %1112 = vmatpush1.msra.mxu0 0.0
  %1113 = vmatprep.subr.mxu0 0.0
  %1114 = vmatpush1.msra.mxu0 0.0
  %1115 = vmatprep.subr.mxu0 0.0
  %1116 = vmatpush1.msra.mxu0 0.0
  %1117 = vmatprep.subr.mxu0 0.0
  %1118 = vmatpush1.msra.mxu0 0.0
  %1119 = vmatprep.subr.mxu0 0.0
  %1120 = vmatpush1.msra.mxu0 0.0
  %1121 = vmatprep.subr.mxu0 0.0
  %1122 = vmatpush1.msra.mxu0 0.0
  %1123 = vmatprep.subr.mxu0 0.0
  %1124 = vmatpush1.msra.mxu0 0.0
  %1125 = vmatprep.subr.mxu0 0.0
  %1126 = vmatpush1.msra.mxu0 0.0
  %1127 = vmatprep.subr.mxu0 0.0
  %1128 = vmatpush1.msra.mxu0 0.0
  %1129 = vmatprep.subr.mxu0 0.0
  %1130 = vmatpush1.msra.mxu0 0.0
  %1131 = vmatprep.subr.mxu0 0.0
  %1132 = vmatpush1.msra.mxu0 0.0
  %1133 = vmatprep.subr.mxu0 0.0
  %1134 = vmatpush1.msra.mxu0 0.0
  %1135 = vmatprep.subr.mxu0 0.0
  %1136 = vmatpush1.msra.mxu0 0.0
  %1137 = vmatprep.subr.mxu0 0.0
  %1138 = vmatpush1.msra.mxu0 0.0
  %1139 = vmatprep.subr.mxu0 0.0
  %1140 = vmatpush1.msra.mxu0 0.0
  %1141 = vmatprep.subr.mxu0 0.0
  %1142 = vmatpush1.msra.mxu0 0.0
  %1143 = vmatprep.subr.mxu0 0.0
  %1144 = vmatpush1.msra.mxu0 0.0
  %1145 = vmatprep.subr.mxu0 0.0
  %1146 = vmatpush1.msra.mxu0 0.0
  %1147 = vmatprep.subr.mxu0 0.0
  %1148 = vmatpush1.msra.mxu0 0.0
  %1149 = vmatprep.subr.mxu0 0.0
  %1150 = vmatpush1.msra.mxu0 0.0
  %1151 = vmatprep.subr.mxu0 0.0
  %1152 = vmatpush1.msra.mxu0 0.0
  %1153 = vmatprep.subr.mxu0 0.0
  %1154 = vmatpush1.msra.mxu0 0.0
  %1155 = vmatprep.subr.mxu0 0.0
  %1156 = vmatpush1.msra.mxu0 0.0
  %1157 = vmatprep.subr.mxu0 0.0
  %1158 = vmatpush1.msra.mxu0 0.0
  %1159 = vmatprep.subr.mxu0 0.0
  %1160 = vmatpush1.msra.mxu0 0.0
  %1161 = vmatprep.subr.mxu0 0.0
  %1162 = vmatpush1.msra.mxu0 0.0
  %1163 = vmatprep.mubr.f32.mxu0 0.0
  %1164 = vmatmul.mubr.f32.gmra.mrb[0].mxu0 %v931
  %v1165 = vpop.f32.mrb[0].mxu0
  %v1166 = vadd.f32 0.0, %v1165
  %v1167 = vpop.f32.mrb[0].mxu0
  %1168 = vdwg.mxu0
  %v1169 = vadd.f32 %v1093, %v1166
  %v1170 = vtanh.pop %v1169
  %s1171 = sadd.s32 0, 96
  %s1172 = scalar_lea.vmem [#allocation2], %s1171
  %v1173 = vld [vmem:[%s1172] sm:$0xff]
  %s1174 = scalar_lea.vmem %s4, 96
  %v1175 = vld [vmem:[%s1174] sm:$0xff]
  %v1176 = vld [vmem:[%s1174 + $0x8] sm:$0xff]
  %v1177 = vld [vmem:[%s1174 + $0x10] sm:$0xff]
  %v1178 = vld [vmem:[%s1174 + $0x18] sm:$0xff]
  %1179 = vmatprep.subr.mxu0 0.0
  %1180 = vmatpush1.msra.mxu0 %v1175
  %1181 = vmatprep.subr.mxu0 0.0
  %1182 = vmatpush1.msra.mxu0 %v1176
  %1183 = vmatprep.subr.mxu0 0.0
  %1184 = vmatpush1.msra.mxu0 %v1177
  %1185 = vmatprep.subr.mxu0 0.0
  %1186 = vmatpush1.msra.mxu0 %v1178
  %1187 = vmatprep.subr.mxu0 0.0
  %1188 = vmatpush1.msra.mxu0 0.0
  %1189 = vmatprep.subr.mxu0 0.0
  %1190 = vmatpush1.msra.mxu0 0.0
  %1191 = vmatprep.subr.mxu0 0.0
  %1192 = vmatpush1.msra.mxu0 0.0
  %1193 = vmatprep.subr.mxu0 0.0
  %1194 = vmatpush1.msra.mxu0 0.0
  %1195 = vmatprep.subr.mxu0 0.0
  %1196 = vmatpush1.msra.mxu0 0.0
  %1197 = vmatprep.subr.mxu0 0.0
  %1198 = vmatpush1.msra.mxu0 0.0
  %1199 = vmatprep.subr.mxu0 0.0
  %1200 = vmatpush1.msra.mxu0 0.0
  %1201 = vmatprep.subr.mxu0 0.0
  %1202 = vmatpush1.msra.mxu0 0.0
  %1203 = vmatprep.subr.mxu0 0.0
  %1204 = vmatpush1.msra.mxu0 0.0
  %1205 = vmatprep.subr.mxu0 0.0
  %1206 = vmatpush1.msra.mxu0 0.0
  %1207 = vmatprep.subr.mxu0 0.0
  %1208 = vmatpush1.msra.mxu0 0.0
  %1209 = vmatprep.subr.mxu0 0.0
  %1210 = vmatpush1.msra.mxu0 0.0
  %1211 = vmatprep.subr.mxu0 0.0
  %1212 = vmatpush1.msra.mxu0 0.0
  %1213 = vmatprep.subr.mxu0 0.0
  %1214 = vmatpush1.msra.mxu0 0.0
  %1215 = vmatprep.subr.mxu0 0.0
  %1216 = vmatpush1.msra.mxu0 0.0
  %1217 = vmatprep.subr.mxu0 0.0
  %1218 = vmatpush1.msra.mxu0 0.0
  %1219 = vmatprep.subr.mxu0 0.0
  %1220 = vmatpush1.msra.mxu0 0.0
  %1221 = vmatprep.subr.mxu0 0.0
  %1222 = vmatpush1.msra.mxu0 0.0
  %1223 = vmatprep.subr.mxu0 0.0
  %1224 = vmatpush1.msra.mxu0 0.0
  %1225 = vmatprep.subr.mxu0 0.0
  %1226 = vmatpush1.msra.mxu0 0.0
  %1227 = vmatprep.subr.mxu0 0.0
  %1228 = vmatpush1.msra.mxu0 0.0
  %1229 = vmatprep.subr.mxu0 0.0
  %1230 = vmatpush1.msra.mxu0 0.0
  %1231 = vmatprep.subr.mxu0 0.0
  %1232 = vmatpush1.msra.mxu0 0.0
  %1233 = vmatprep.subr.mxu0 0.0
  %1234 = vmatpush1.msra.mxu0 0.0
  %1235 = vmatprep.subr.mxu0 0.0
  %1236 = vmatpush1.msra.mxu0 0.0
  %1237 = vmatprep.subr.mxu0 0.0
  %1238 = vmatpush1.msra.mxu0 0.0
  %1239 = vmatprep.subr.mxu0 0.0
  %1240 = vmatpush1.msra.mxu0 0.0
  %1241 = vmatprep.subr.mxu0 0.0
  %1242 = vmatpush1.msra.mxu0 0.0
  %1243 = vmatprep.mubr.f32.mxu0 0.0
  %1244 = vmatmul.mubr.f32.gmra.mrb[0].mxu0 %v931
  %v1245 = vpop.f32.mrb[0].mxu0
  %v1246 = vadd.f32 0.0, %v1245
  %v1247 = vpop.f32.mrb[0].mxu0
  %1248 = vdwg.mxu0
  %v1249 = vadd.f32 %v1173, %v1246
  %v1250 = vmul.f32 %v1249, 0.5
  %v1251 = vtanh.pop %v1250
  %v1252 = vmul.f32 %v1251, 0.5
  %v1253 = vadd.f32 %v1252, 0.5
  %v1254 = vmul.f32 %v1090, %v922
  %v1255 = vmul.f32 %v1007, %v1170
  %v1256 = vadd.f32 %v1254, %v1255
  %v1257 = vtanh.pop %v1256
  %v1258 = vmul.f32 %v1253, %v1257
  %1259 = vst.msk [vmem:[%s8] sm:$0xff] %vm91, %v1258
  %s1260 = scalar_lea.vmem [#allocation3], 24
  %v1261 = vld [vmem:[%s1260] sm:$0xff]
  %v1262 = vld [vmem:[%s5] sm:$0xff]
  %v1263 = vld [vmem:[%s5 + $0x8] sm:$0xff]
  %v1264 = vld [vmem:[%s5 + $0x10] sm:$0xff]
  %v1265 = vld [vmem:[%s5 + $0x18] sm:$0xff]
  %v1267 = vsel %vm91, %v923, 0
  %1269 = vmatprep.subr.mxu0 0.0
  %1270 = vmatpush1.msra.mxu0 %v1262
  %1271 = vmatprep.subr.mxu0 0.0
  %1272 = vmatpush1.msra.mxu0 %v1263
  %1273 = vmatprep.subr.mxu0 0.0
  %1274 = vmatpush1.msra.mxu0 %v1264
  %1275 = vmatprep.subr.mxu0 0.0
  %1276 = vmatpush1.msra.mxu0 %v1265
  %1277 = vmatprep.subr.mxu0 0.0
  %1278 = vmatpush1.msra.mxu0 0.0
  %1279 = vmatprep.subr.mxu0 0.0
  %1280 = vmatpush1.msra.mxu0 0.0
  %1281 = vmatprep.subr.mxu0 0.0
  %1282 = vmatpush1.msra.mxu0 0.0
  %1283 = vmatprep.subr.mxu0 0.0
  %1284 = vmatpush1.msra.mxu0 0.0
  %1285 = vmatprep.subr.mxu0 0.0
  %1286 = vmatpush1.msra.mxu0 0.0
  %1287 = vmatprep.subr.mxu0 0.0
  %1288 = vmatpush1.msra.mxu0 0.0
  %1289 = vmatprep.subr.mxu0 0.0
  %1290 = vmatpush1.msra.mxu0 0.0
  %1291 = vmatprep.subr.mxu0 0.0
  %1292 = vmatpush1.msra.mxu0 0.0
  %1293 = vmatprep.subr.mxu0 0.0
  %1294 = vmatpush1.msra.mxu0 0.0
  %1295 = vmatprep.subr.mxu0 0.0
  %1296 = vmatpush1.msra.mxu0 0.0
  %1297 = vmatprep.subr.mxu0 0.0
  %1298 = vmatpush1.msra.mxu0 0.0
  %1299 = vmatprep.subr.mxu0 0.0
  %1300 = vmatpush1.msra.mxu0 0.0
  %1301 = vmatprep.subr.mxu0 0.0
  %1302 = vmatpush1.msra.mxu0 0.0
  %1303 = vmatprep.subr.mxu0 0.0
  %1304 = vmatpush1.msra.mxu0 0.0
  %1305 = vmatprep.subr.mxu0 0.0
  %1306 = vmatpush1.msra.mxu0 0.0
  %1307 = vmatprep.subr.mxu0 0.0
  %1308 = vmatpush1.msra.mxu0 0.0
  %1309 = vmatprep.subr.mxu0 0.0
  %1310 = vmatpush1.msra.mxu0 0.0
  %1311 = vmatprep.subr.mxu0 0.0
  %1312 = vmatpush1.msra.mxu0 0.0
  %1313 = vmatprep.subr.mxu0 0.0
  %1314 = vmatpush1.msra.mxu0 0.0
  %1315 = vmatprep.subr.mxu0 0.0
  %1316 = vmatpush1.msra.mxu0 0.0
  %1317 = vmatprep.subr.mxu0 0.0
  %1318 = vmatpush1.msra.mxu0 0.0
  %1319 = vmatprep.subr.mxu0 0.0
  %1320 = vmatpush1.msra.mxu0 0.0
  %1321 = vmatprep.subr.mxu0 0.0
  %1322 = vmatpush1.msra.mxu0 0.0
  %1323 = vmatprep.subr.mxu0 0.0
  %1324 = vmatpush1.msra.mxu0 0.0
  %1325 = vmatprep.subr.mxu0 0.0
  %1326 = vmatpush1.msra.mxu0 0.0
  %1327 = vmatprep.subr.mxu0 0.0
  %1328 = vmatpush1.msra.mxu0 0.0
  %1329 = vmatprep.subr.mxu0 0.0
  %1330 = vmatpush1.msra.mxu0 0.0
  %1331 = vmatprep.subr.mxu0 0.0
  %1332 = vmatpush1.msra.mxu0 0.0
  %1333 = vmatprep.mubr.f32.mxu0 0.0
  %1334 = vmatmul.mubr.f32.gmra.mrb[0].mxu0 %v1267
  %v1335 = vpop.f32.mrb[0].mxu0
  %v1336 = vadd.f32 0.0, %v1335
  %v1337 = vpop.f32.mrb[0].mxu0
  %1338 = vdwg.mxu0
  %v1339 = vadd.f32 %v1261, %v1336
  %v1340 = vmul.f32 %v1339, 0.5
  %v1341 = vtanh.pop %v1340
  %v1342 = vmul.f32 %v1341, 0.5
  %v1343 = vadd.f32 %v1342, 0.5
  %s1344 = sadd.s32 24, 32
  %s1345 = scalar_lea.vmem [#allocation3], %s1344
  %v1346 = vld [vmem:[%s1345] sm:$0xff]
  %s1347 = scalar_lea.vmem %s5, 32
  %v1348 = vld [vmem:[%s1347] sm:$0xff]
  %v1349 = vld [vmem:[%s1347 + $0x8] sm:$0xff]
  %v1350 = vld [vmem:[%s1347 + $0x10] sm:$0xff]
  %v1351 = vld [vmem:[%s1347 + $0x18] sm:$0xff]
  %1352 = vmatprep.subr.mxu0 0.0
  %1353 = vmatpush1.msra.mxu0 %v1348
  %1354 = vmatprep.subr.mxu0 0.0
  %1355 = vmatpush1.msra.mxu0 %v1349
  %1356 = vmatprep.subr.mxu0 0.0
  %1357 = vmatpush1.msra.mxu0 %v1350
  %1358 = vmatprep.subr.mxu0 0.0
  %1359 = vmatpush1.msra.mxu0 %v1351
  %1360 = vmatprep.subr.mxu0 0.0
  %1361 = vmatpush1.msra.mxu0 0.0
  %1362 = vmatprep.subr.mxu0 0.0
  %1363 = vmatpush1.msra.mxu0 0.0
  %1364 = vmatprep.subr.mxu0 0.0
  %1365 = vmatpush1.msra.mxu0 0.0
  %1366 = vmatprep.subr.mxu0 0.0
  %1367 = vmatpush1.msra.mxu0 0.0
  %1368 = vmatprep.subr.mxu0 0.0
  %1369 = vmatpush1.msra.mxu0 0.0
  %1370 = vmatprep.subr.mxu0 0.0
  %1371 = vmatpush1.msra.mxu0 0.0
  %1372 = vmatprep.subr.mxu0 0.0
  %1373 = vmatpush1.msra.mxu0 0.0
  %1374 = vmatprep.subr.mxu0 0.0
  %1375 = vmatpush1.msra.mxu0 0.0
  %1376 = vmatprep.subr.mxu0 0.0
  %1377 = vmatpush1.msra.mxu0 0.0
  %1378 = vmatprep.subr.mxu0 0.0
  %1379 = vmatpush1.msra.mxu0 0.0
  %1380 = vmatprep.subr.mxu0 0.0
  %1381 = vmatpush1.msra.mxu0 0.0
  %1382 = vmatprep.subr.mxu0 0.0
  %1383 = vmatpush1.msra.mxu0 0.0
  %1384 = vmatprep.subr.mxu0 0.0
  %1385 = vmatpush1.msra.mxu0 0.0
  %1386 = vmatprep.subr.mxu0 0.0
  %1387 = vmatpush1.msra.mxu0 0.0
  %1388 = vmatprep.subr.mxu0 0.0
  %1389 = vmatpush1.msra.mxu0 0.0
  %1390 = vmatprep.subr.mxu0 0.0
  %1391 = vmatpush1.msra.mxu0 0.0
  %1392 = vmatprep.subr.mxu0 0.0
  %1393 = vmatpush1.msra.mxu0 0.0
  %1394 = vmatprep.subr.mxu0 0.0
  %1395 = vmatpush1.msra.mxu0 0.0
  %1396 = vmatprep.subr.mxu0 0.0
  %1397 = vmatpush1.msra.mxu0 0.0
  %1398 = vmatprep.subr.mxu0 0.0
  %1399 = vmatpush1.msra.mxu0 0.0
  %1400 = vmatprep.subr.mxu0 0.0
  %1401 = vmatpush1.msra.mxu0 0.0
  %1402 = vmatprep.subr.mxu0 0.0
  %1403 = vmatpush1.msra.mxu0 0.0
  %1404 = vmatprep.subr.mxu0 0.0
  %1405 = vmatpush1.msra.mxu0 0.0
  %1406 = vmatprep.subr.mxu0 0.0
  %1407 = vmatpush1.msra.mxu0 0.0
  %1408 = vmatprep.subr.mxu0 0.0
  %1409 = vmatpush1.msra.mxu0 0.0
  %1410 = vmatprep.subr.mxu0 0.0
  %1411 = vmatpush1.msra.mxu0 0.0
  %1412 = vmatprep.subr.mxu0 0.0
  %1413 = vmatpush1.msra.mxu0 0.0
  %1414 = vmatprep.subr.mxu0 0.0
  %1415 = vmatpush1.msra.mxu0 0.0
  %1416 = vmatprep.mubr.f32.mxu0 0.0
  %1417 = vmatmul.mubr.f32.gmra.mrb[0].mxu0 %v1267
  %v1418 = vpop.f32.mrb[0].mxu0
  %v1419 = vadd.f32 0.0, %v1418
  %v1420 = vpop.f32.mrb[0].mxu0
  %1421 = vdwg.mxu0
  %v1422 = vadd.f32 %v1346, %v1419
  %v1423 = vmul.f32 %v1422, 0.5
  %v1424 = vtanh.pop %v1423
  %v1425 = vmul.f32 %v1424, 0.5
  %v1426 = vadd.f32 %v1425, 0.5
  %s1427 = sadd.s32 24, 64
  %s1428 = scalar_lea.vmem [#allocation3], %s1427
  %v1429 = vld [vmem:[%s1428] sm:$0xff]
  %s1430 = scalar_lea.vmem %s5, 64
  %v1431 = vld [vmem:[%s1430] sm:$0xff]
  %v1432 = vld [vmem:[%s1430 + $0x8] sm:$0xff]
  %v1433 = vld [vmem:[%s1430 + $0x10] sm:$0xff]
  %v1434 = vld [vmem:[%s1430 + $0x18] sm:$0xff]
  %1435 = vmatprep.subr.mxu0 0.0
  %1436 = vmatpush1.msra.mxu0 %v1431
  %1437 = vmatprep.subr.mxu0 0.0
  %1438 = vmatpush1.msra.mxu0 %v1432
  %1439 = vmatprep.subr.mxu0 0.0
  %1440 = vmatpush1.msra.mxu0 %v1433
  %1441 = vmatprep.subr.mxu0 0.0
  %1442 = vmatpush1.msra.mxu0 %v1434
  %1443 = vmatprep.subr.mxu0 0.0
  %1444 = vmatpush1.msra.mxu0 0.0
  %1445 = vmatprep.subr.mxu0 0.0
  %1446 = vmatpush1.msra.mxu0 0.0
  %1447 = vmatprep.subr.mxu0 0.0
  %1448 = vmatpush1.msra.mxu0 0.0
  %1449 = vmatprep.subr.mxu0 0.0
  %1450 = vmatpush1.msra.mxu0 0.0
  %1451 = vmatprep.subr.mxu0 0.0
  %1452 = vmatpush1.msra.mxu0 0.0
  %1453 = vmatprep.subr.mxu0 0.0
  %1454 = vmatpush1.msra.mxu0 0.0
  %1455 = vmatprep.subr.mxu0 0.0
  %1456 = vmatpush1.msra.mxu0 0.0
  %1457 = vmatprep.subr.mxu0 0.0
  %1458 = vmatpush1.msra.mxu0 0.0
  %1459 = vmatprep.subr.mxu0 0.0
  %1460 = vmatpush1.msra.mxu0 0.0
  %1461 = vmatprep.subr.mxu0 0.0
  %1462 = vmatpush1.msra.mxu0 0.0
  %1463 = vmatprep.subr.mxu0 0.0
  %1464 = vmatpush1.msra.mxu0 0.0
  %1465 = vmatprep.subr.mxu0 0.0
  %1466 = vmatpush1.msra.mxu0 0.0
  %1467 = vmatprep.subr.mxu0 0.0
  %1468 = vmatpush1.msra.mxu0 0.0
  %1469 = vmatprep.subr.mxu0 0.0
  %1470 = vmatpush1.msra.mxu0 0.0
  %1471 = vmatprep.subr.mxu0 0.0
  %1472 = vmatpush1.msra.mxu0 0.0
  %1473 = vmatprep.subr.mxu0 0.0
  %1474 = vmatpush1.msra.mxu0 0.0
  %1475 = vmatprep.subr.mxu0 0.0
  %1476 = vmatpush1.msra.mxu0 0.0
  %1477 = vmatprep.subr.mxu0 0.0
  %1478 = vmatpush1.msra.mxu0 0.0
  %1479 = vmatprep.subr.mxu0 0.0
  %1480 = vmatpush1.msra.mxu0 0.0
  %1481 = vmatprep.subr.mxu0 0.0
  %1482 = vmatpush1.msra.mxu0 0.0
  %1483 = vmatprep.subr.mxu0 0.0
  %1484 = vmatpush1.msra.mxu0 0.0
  %1485 = vmatprep.subr.mxu0 0.0
  %1486 = vmatpush1.msra.mxu0 0.0
  %1487 = vmatprep.subr.mxu0 0.0
  %1488 = vmatpush1.msra.mxu0 0.0
  %1489 = vmatprep.subr.mxu0 0.0
  %1490 = vmatpush1.msra.mxu0 0.0
  %1491 = vmatprep.subr.mxu0 0.0
  %1492 = vmatpush1.msra.mxu0 0.0
  %1493 = vmatprep.subr.mxu0 0.0
  %1494 = vmatpush1.msra.mxu0 0.0
  %1495 = vmatprep.subr.mxu0 0.0
  %1496 = vmatpush1.msra.mxu0 0.0
  %1497 = vmatprep.subr.mxu0 0.0
  %1498 = vmatpush1.msra.mxu0 0.0
  %1499 = vmatprep.mubr.f32.mxu0 0.0
  %1500 = vmatmul.mubr.f32.gmra.mrb[0].mxu0 %v1267
  %v1501 = vpop.f32.mrb[0].mxu0
  %v1502 = vadd.f32 0.0, %v1501
  %v1503 = vpop.f32.mrb[0].mxu0
  %1504 = vdwg.mxu0
  %v1505 = vadd.f32 %v1429, %v1502
  %v1506 = vtanh.pop %v1505
  %s1507 = sadd.s32 24, 96
  %s1508 = scalar_lea.vmem [#allocation3], %s1507
  %v1509 = vld [vmem:[%s1508] sm:$0xff]
  %s1510 = scalar_lea.vmem %s5, 96
  %v1511 = vld [vmem:[%s1510] sm:$0xff]
  %v1512 = vld [vmem:[%s1510 + $0x8] sm:$0xff]
  %v1513 = vld [vmem:[%s1510 + $0x10] sm:$0xff]
  %v1514 = vld [vmem:[%s1510 + $0x18] sm:$0xff]
  %1515 = vmatprep.subr.mxu0 0.0
  %1516 = vmatpush1.msra.mxu0 %v1511
  %1517 = vmatprep.subr.mxu0 0.0
  %1518 = vmatpush1.msra.mxu0 %v1512
  %1519 = vmatprep.subr.mxu0 0.0
  %1520 = vmatpush1.msra.mxu0 %v1513
  %1521 = vmatprep.subr.mxu0 0.0
  %1522 = vmatpush1.msra.mxu0 %v1514
  %1523 = vmatprep.subr.mxu0 0.0
  %1524 = vmatpush1.msra.mxu0 0.0
  %1525 = vmatprep.subr.mxu0 0.0
  %1526 = vmatpush1.msra.mxu0 0.0
  %1527 = vmatprep.subr.mxu0 0.0
  %1528 = vmatpush1.msra.mxu0 0.0
  %1529 = vmatprep.subr.mxu0 0.0
  %1530 = vmatpush1.msra.mxu0 0.0
  %1531 = vmatprep.subr.mxu0 0.0
  %1532 = vmatpush1.msra.mxu0 0.0
  %1533 = vmatprep.subr.mxu0 0.0
  %1534 = vmatpush1.msra.mxu0 0.0
  %1535 = vmatprep.subr.mxu0 0.0
  %1536 = vmatpush1.msra.mxu0 0.0
  %1537 = vmatprep.subr.mxu0 0.0
  %1538 = vmatpush1.msra.mxu0 0.0
  %1539 = vmatprep.subr.mxu0 0.0
  %1540 = vmatpush1.msra.mxu0 0.0
  %1541 = vmatprep.subr.mxu0 0.0
  %1542 = vmatpush1.msra.mxu0 0.0
  %1543 = vmatprep.subr.mxu0 0.0
  %1544 = vmatpush1.msra.mxu0 0.0
  %1545 = vmatprep.subr.mxu0 0.0
  %1546 = vmatpush1.msra.mxu0 0.0
  %1547 = vmatprep.subr.mxu0 0.0
  %1548 = vmatpush1.msra.mxu0 0.0
  %1549 = vmatprep.subr.mxu0 0.0
  %1550 = vmatpush1.msra.mxu0 0.0
  %1551 = vmatprep.subr.mxu0 0.0
  %1552 = vmatpush1.msra.mxu0 0.0
  %1553 = vmatprep.subr.mxu0 0.0
  %1554 = vmatpush1.msra.mxu0 0.0
  %1555 = vmatprep.subr.mxu0 0.0
  %1556 = vmatpush1.msra.mxu0 0.0
  %1557 = vmatprep.subr.mxu0 0.0
  %1558 = vmatpush1.msra.mxu0 0.0
  %1559 = vmatprep.subr.mxu0 0.0
  %1560 = vmatpush1.msra.mxu0 0.0
  %1561 = vmatprep.subr.mxu0 0.0
  %1562 = vmatpush1.msra.mxu0 0.0
  %1563 = vmatprep.subr.mxu0 0.0
  %1564 = vmatpush1.msra.mxu0 0.0
  %1565 = vmatprep.subr.mxu0 0.0
  %1566 = vmatpush1.msra.mxu0 0.0
  %1567 = vmatprep.subr.mxu0 0.0
  %1568 = vmatpush1.msra.mxu0 0.0
  %1569 = vmatprep.subr.mxu0 0.0
  %1570 = vmatpush1.msra.mxu0 0.0
  %1571 = vmatprep.subr.mxu0 0.0
  %1572 = vmatpush1.msra.mxu0 0.0
  %1573 = vmatprep.subr.mxu0 0.0
  %1574 = vmatpush1.msra.mxu0 0.0
  %1575 = vmatprep.subr.mxu0 0.0
  %1576 = vmatpush1.msra.mxu0 0.0
  %1577 = vmatprep.subr.mxu0 0.0
  %1578 = vmatpush1.msra.mxu0 0.0
  %1579 = vmatprep.mubr.f32.mxu0 0.0
  %1580 = vmatmul.mubr.f32.gmra.mrb[0].mxu0 %v1267
  %v1581 = vpop.f32.mrb[0].mxu0
  %v1582 = vadd.f32 0.0, %v1581
  %v1583 = vpop.f32.mrb[0].mxu0
  %1584 = vdwg.mxu0
  %v1585 = vadd.f32 %v1509, %v1582
  %v1586 = vmul.f32 %v1585, 0.5
  %v1587 = vtanh.pop %v1586
  %v1588 = vmul.f32 %v1587, 0.5
  %v1589 = vadd.f32 %v1588, 0.5
  %v1590 = vmul.f32 %v1426, %v924
  %v1591 = vmul.f32 %v1343, %v1506
  %v1592 = vadd.f32 %v1590, %v1591
  %v1593 = vtanh.pop %v1592
  %v1594 = vmul.f32 %v1589, %v1593
  %s1595 = scalar_lea.vmem %s64, 24
  %1596 = vst.msk [vmem:[%s1595] sm:$0xff] %vm91, %v1594
  %s1597 = scalar_lea.vmem [#allocation2], 8
  %v1598 = vld [vmem:[%s1597] sm:$0xff]
  %v1599 = vld [vmem:[%s4] sm:$0xff]
  %v1600 = vld [vmem:[%s4 + $0x8] sm:$0xff]
  %v1601 = vld [vmem:[%s4 + $0x10] sm:$0xff]
  %v1602 = vld [vmem:[%s4 + $0x18] sm:$0xff]
  %v1604 = vsel %vm91, %v1258, 0
  %1606 = vmatprep.subr.mxu0 0.0
  %1607 = vmatpush1.msra.mxu0 %v1599
  %1608 = vmatprep.subr.mxu0 0.0
  %1609 = vmatpush1.msra.mxu0 %v1600
  %1610 = vmatprep.subr.mxu0 0.0
  %1611 = vmatpush1.msra.mxu0 %v1601
  %1612 = vmatprep.subr.mxu0 0.0
  %1613 = vmatpush1.msra.mxu0 %v1602
  %1614 = vmatprep.subr.mxu0 0.0
  %1615 = vmatpush1.msra.mxu0 0.0
  %1616 = vmatprep.subr.mxu0 0.0
  %1617 = vmatpush1.msra.mxu0 0.0
  %1618 = vmatprep.subr.mxu0 0.0
  %1619 = vmatpush1.msra.mxu0 0.0
  %1620 = vmatprep.subr.mxu0 0.0
  %1621 = vmatpush1.msra.mxu0 0.0
  %1622 = vmatprep.subr.mxu0 0.0
  %1623 = vmatpush1.msra.mxu0 0.0
  %1624 = vmatprep.subr.mxu0 0.0
  %1625 = vmatpush1.msra.mxu0 0.0
  %1626 = vmatprep.subr.mxu0 0.0
  %1627 = vmatpush1.msra.mxu0 0.0
  %1628 = vmatprep.subr.mxu0 0.0
  %1629 = vmatpush1.msra.mxu0 0.0
  %1630 = vmatprep.subr.mxu0 0.0
  %1631 = vmatpush1.msra.mxu0 0.0
  %1632 = vmatprep.subr.mxu0 0.0
  %1633 = vmatpush1.msra.mxu0 0.0
  %1634 = vmatprep.subr.mxu0 0.0
  %1635 = vmatpush1.msra.mxu0 0.0
  %1636 = vmatprep.subr.mxu0 0.0
  %1637 = vmatpush1.msra.mxu0 0.0
  %1638 = vmatprep.subr.mxu0 0.0
  %1639 = vmatpush1.msra.mxu0 0.0
  %1640 = vmatprep.subr.mxu0 0.0
  %1641 = vmatpush1.msra.mxu0 0.0
  %1642 = vmatprep.subr.mxu0 0.0
  %1643 = vmatpush1.msra.mxu0 0.0
  %1644 = vmatprep.subr.mxu0 0.0
  %1645 = vmatpush1.msra.mxu0 0.0
  %1646 = vmatprep.subr.mxu0 0.0
  %1647 = vmatpush1.msra.mxu0 0.0
  %1648 = vmatprep.subr.mxu0 0.0
  %1649 = vmatpush1.msra.mxu0 0.0
  %1650 = vmatprep.subr.mxu0 0.0
  %1651 = vmatpush1.msra.mxu0 0.0
  %1652 = vmatprep.subr.mxu0 0.0
  %1653 = vmatpush1.msra.mxu0 0.0
  %1654 = vmatprep.subr.mxu0 0.0
  %1655 = vmatpush1.msra.mxu0 0.0
  %1656 = vmatprep.subr.mxu0 0.0
  %1657 = vmatpush1.msra.mxu0 0.0
  %1658 = vmatprep.subr.mxu0 0.0
  %1659 = vmatpush1.msra.mxu0 0.0
  %1660 = vmatprep.subr.mxu0 0.0
  %1661 = vmatpush1.msra.mxu0 0.0
  %1662 = vmatprep.subr.mxu0 0.0
  %1663 = vmatpush1.msra.mxu0 0.0
  %1664 = vmatprep.subr.mxu0 0.0
  %1665 = vmatpush1.msra.mxu0 0.0
  %1666 = vmatprep.subr.mxu0 0.0
  %1667 = vmatpush1.msra.mxu0 0.0
  %1668 = vmatprep.subr.mxu0 0.0
  %1669 = vmatpush1.msra.mxu0 0.0
  %1670 = vmatprep.mubr.f32.mxu0 0.0
  %1671 = vmatmul.mubr.f32.gmra.mrb[0].mxu0 %v1604
  %v1672 = vpop.f32.mrb[0].mxu0
  %v1673 = vadd.f32 0.0, %v1672
  %v1674 = vpop.f32.mrb[0].mxu0
  %1675 = vdwg.mxu0
  %v1676 = vadd.f32 %v1598, %v1673
  %v1677 = vmul.f32 %v1676, 0.5
  %v1678 = vtanh.pop %v1677
  %v1679 = vmul.f32 %v1678, 0.5
  %v1680 = vadd.f32 %v1679, 0.5
  %s1681 = sadd.s32 8, 32
  %s1682 = scalar_lea.vmem [#allocation2], %s1681
  %v1683 = vld [vmem:[%s1682] sm:$0xff]
  %v1684 = vld [vmem:[%s1011] sm:$0xff]
  %v1685 = vld [vmem:[%s1011 + $0x8] sm:$0xff]
  %v1686 = vld [vmem:[%s1011 + $0x10] sm:$0xff]
  %v1687 = vld [vmem:[%s1011 + $0x18] sm:$0xff]
  %1688 = vmatprep.subr.mxu0 0.0
  %1689 = vmatpush1.msra.mxu0 %v1684
  %1690 = vmatprep.subr.mxu0 0.0
  %1691 = vmatpush1.msra.mxu0 %v1685
  %1692 = vmatprep.subr.mxu0 0.0
  %1693 = vmatpush1.msra.mxu0 %v1686
  %1694 = vmatprep.subr.mxu0 0.0
  %1695 = vmatpush1.msra.mxu0 %v1687
  %1696 = vmatprep.subr.mxu0 0.0
  %1697 = vmatpush1.msra.mxu0 0.0
  %1698 = vmatprep.subr.mxu0 0.0
  %1699 = vmatpush1.msra.mxu0 0.0
  %1700 = vmatprep.subr.mxu0 0.0
  %1701 = vmatpush1.msra.mxu0 0.0
  %1702 = vmatprep.subr.mxu0 0.0
  %1703 = vmatpush1.msra.mxu0 0.0
  %1704 = vmatprep.subr.mxu0 0.0
  %1705 = vmatpush1.msra.mxu0 0.0
  %1706 = vmatprep.subr.mxu0 0.0
  %1707 = vmatpush1.msra.mxu0 0.0
  %1708 = vmatprep.subr.mxu0 0.0
  %1709 = vmatpush1.msra.mxu0 0.0
  %1710 = vmatprep.subr.mxu0 0.0
  %1711 = vmatpush1.msra.mxu0 0.0
  %1712 = vmatprep.subr.mxu0 0.0
  %1713 = vmatpush1.msra.mxu0 0.0
  %1714 = vmatprep.subr.mxu0 0.0
  %1715 = vmatpush1.msra.mxu0 0.0
  %1716 = vmatprep.subr.mxu0 0.0
  %1717 = vmatpush1.msra.mxu0 0.0
  %1718 = vmatprep.subr.mxu0 0.0
  %1719 = vmatpush1.msra.mxu0 0.0
  %1720 = vmatprep.subr.mxu0 0.0
  %1721 = vmatpush1.msra.mxu0 0.0
  %1722 = vmatprep.subr.mxu0 0.0
  %1723 = vmatpush1.msra.mxu0 0.0
  %1724 = vmatprep.subr.mxu0 0.0
  %1725 = vmatpush1.msra.mxu0 0.0
  %1726 = vmatprep.subr.mxu0 0.0
  %1727 = vmatpush1.msra.mxu0 0.0
  %1728 = vmatprep.subr.mxu0 0.0
  %1729 = vmatpush1.msra.mxu0 0.0
  %1730 = vmatprep.subr.mxu0 0.0
  %1731 = vmatpush1.msra.mxu0 0.0
  %1732 = vmatprep.subr.mxu0 0.0
  %1733 = vmatpush1.msra.mxu0 0.0
  %1734 = vmatprep.subr.mxu0 0.0
  %1735 = vmatpush1.msra.mxu0 0.0
  %1736 = vmatprep.subr.mxu0 0.0
  %1737 = vmatpush1.msra.mxu0 0.0
  %1738 = vmatprep.subr.mxu0 0.0
  %1739 = vmatpush1.msra.mxu0 0.0
  %1740 = vmatprep.subr.mxu0 0.0
  %1741 = vmatpush1.msra.mxu0 0.0
  %1742 = vmatprep.subr.mxu0 0.0
  %1743 = vmatpush1.msra.mxu0 0.0
  %1744 = vmatprep.subr.mxu0 0.0
  %1745 = vmatpush1.msra.mxu0 0.0
  %1746 = vmatprep.subr.mxu0 0.0
  %1747 = vmatpush1.msra.mxu0 0.0
  %1748 = vmatprep.subr.mxu0 0.0
  %1749 = vmatpush1.msra.mxu0 0.0
  %1750 = vmatprep.subr.mxu0 0.0
  %1751 = vmatpush1.msra.mxu0 0.0
  %1752 = vmatprep.mubr.f32.mxu0 0.0
  %1753 = vmatmul.mubr.f32.gmra.mrb[0].mxu0 %v1604
  %v1754 = vpop.f32.mrb[0].mxu0
  %v1755 = vadd.f32 0.0, %v1754
  %v1756 = vpop.f32.mrb[0].mxu0
  %1757 = vdwg.mxu0
  %v1758 = vadd.f32 %v1683, %v1755
  %v1759 = vmul.f32 %v1758, 0.5
  %v1760 = vtanh.pop %v1759
  %v1761 = vmul.f32 %v1760, 0.5
  %v1762 = vadd.f32 %v1761, 0.5
  %s1763 = sadd.s32 8, 64
  %s1764 = scalar_lea.vmem [#allocation2], %s1763
  %v1765 = vld [vmem:[%s1764] sm:$0xff]
  %v1766 = vld [vmem:[%s1094] sm:$0xff]
  %v1767 = vld [vmem:[%s1094 + $0x8] sm:$0xff]
  %v1768 = vld [vmem:[%s1094 + $0x10] sm:$0xff]
  %v1769 = vld [vmem:[%s1094 + $0x18] sm:$0xff]
  %1770 = vmatprep.subr.mxu0 0.0
  %1771 = vmatpush1.msra.mxu0 %v1766
  %1772 = vmatprep.subr.mxu0 0.0
  %1773 = vmatpush1.msra.mxu0 %v1767
  %1774 = vmatprep.subr.mxu0 0.0
  %1775 = vmatpush1.msra.mxu0 %v1768
  %1776 = vmatprep.subr.mxu0 0.0
  %1777 = vmatpush1.msra.mxu0 %v1769
  %1778 = vmatprep.subr.mxu0 0.0
  %1779 = vmatpush1.msra.mxu0 0.0
  %1780 = vmatprep.subr.mxu0 0.0
  %1781 = vmatpush1.msra.mxu0 0.0
  %1782 = vmatprep.subr.mxu0 0.0
  %1783 = vmatpush1.msra.mxu0 0.0
  %1784 = vmatprep.subr.mxu0 0.0
  %1785 = vmatpush1.msra.mxu0 0.0
  %1786 = vmatprep.subr.mxu0 0.0
  %1787 = vmatpush1.msra.mxu0 0.0
  %1788 = vmatprep.subr.mxu0 0.0
  %1789 = vmatpush1.msra.mxu0 0.0
  %1790 = vmatprep.subr.mxu0 0.0
  %1791 = vmatpush1.msra.mxu0 0.0
  %1792 = vmatprep.subr.mxu0 0.0
  %1793 = vmatpush1.msra.mxu0 0.0
  %1794 = vmatprep.subr.mxu0 0.0
  %1795 = vmatpush1.msra.mxu0 0.0
  %1796 = vmatprep.subr.mxu0 0.0
  %1797 = vmatpush1.msra.mxu0 0.0
  %1798 = vmatprep.subr.mxu0 0.0
  %1799 = vmatpush1.msra.mxu0 0.0
  %1800 = vmatprep.subr.mxu0 0.0
  %1801 = vmatpush1.msra.mxu0 0.0
  %1802 = vmatprep.subr.mxu0 0.0
  %1803 = vmatpush1.msra.mxu0 0.0
  %1804 = vmatprep.subr.mxu0 0.0
  %1805 = vmatpush1.msra.mxu0 0.0
  %1806 = vmatprep.subr.mxu0 0.0
  %1807 = vmatpush1.msra.mxu0 0.0
  %1808 = vmatprep.subr.mxu0 0.0
  %1809 = vmatpush1.msra.mxu0 0.0
  %1810 = vmatprep.subr.mxu0 0.0
  %1811 = vmatpush1.msra.mxu0 0.0
  %1812 = vmatprep.subr.mxu0 0.0
  %1813 = vmatpush1.msra.mxu0 0.0
  %1814 = vmatprep.subr.mxu0 0.0
  %1815 = vmatpush1.msra.mxu0 0.0
  %1816 = vmatprep.subr.mxu0 0.0
  %1817 = vmatpush1.msra.mxu0 0.0
  %1818 = vmatprep.subr.mxu0 0.0
  %1819 = vmatpush1.msra.mxu0 0.0
  %1820 = vmatprep.subr.mxu0 0.0
  %1821 = vmatpush1.msra.mxu0 0.0
  %1822 = vmatprep.subr.mxu0 0.0
  %1823 = vmatpush1.msra.mxu0 0.0
  %1824 = vmatprep.subr.mxu0 0.0
  %1825 = vmatpush1.msra.mxu0 0.0
  %1826 = vmatprep.subr.mxu0 0.0
  %1827 = vmatpush1.msra.mxu0 0.0
  %1828 = vmatprep.subr.mxu0 0.0
  %1829 = vmatpush1.msra.mxu0 0.0
  %1830 = vmatprep.subr.mxu0 0.0
  %1831 = vmatpush1.msra.mxu0 0.0
  %1832 = vmatprep.subr.mxu0 0.0
  %1833 = vmatpush1.msra.mxu0 0.0
  %1834 = vmatprep.mubr.f32.mxu0 0.0
  %1835 = vmatmul.mubr.f32.gmra.mrb[0].mxu0 %v1604
  %v1836 = vpop.f32.mrb[0].mxu0
  %v1837 = vadd.f32 0.0, %v1836
  %v1838 = vpop.f32.mrb[0].mxu0
  %1839 = vdwg.mxu0
  %v1840 = vadd.f32 %v1765, %v1837
  %v1841 = vtanh.pop %v1840
  %s1842 = sadd.s32 8, 96
  %s1843 = scalar_lea.vmem [#allocation2], %s1842
  %v1844 = vld [vmem:[%s1843] sm:$0xff]
  %v1845 = vld [vmem:[%s1174] sm:$0xff]
  %v1846 = vld [vmem:[%s1174 + $0x8] sm:$0xff]
  %v1847 = vld [vmem:[%s1174 + $0x10] sm:$0xff]
  %v1848 = vld [vmem:[%s1174 + $0x18] sm:$0xff]
  %1849 = vmatprep.subr.mxu0 0.0
  %1850 = vmatpush1.msra.mxu0 %v1845
  %1851 = vmatprep.subr.mxu0 0.0
  %1852 = vmatpush1.msra.mxu0 %v1846
  %1853 = vmatprep.subr.mxu0 0.0
  %1854 = vmatpush1.msra.mxu0 %v1847
  %1855 = vmatprep.subr.mxu0 0.0
  %1856 = vmatpush1.msra.mxu0 %v1848
  %1857 = vmatprep.subr.mxu0 0.0
  %1858 = vmatpush1.msra.mxu0 0.0
  %1859 = vmatprep.subr.mxu0 0.0
  %1860 = vmatpush1.msra.mxu0 0.0
  %1861 = vmatprep.subr.mxu0 0.0
  %1862 = vmatpush1.msra.mxu0 0.0
  %1863 = vmatprep.subr.mxu0 0.0
  %1864 = vmatpush1.msra.mxu0 0.0
  %1865 = vmatprep.subr.mxu0 0.0
  %1866 = vmatpush1.msra.mxu0 0.0
  %1867 = vmatprep.subr.mxu0 0.0
  %1868 = vmatpush1.msra.mxu0 0.0
  %1869 = vmatprep.subr.mxu0 0.0
  %1870 = vmatpush1.msra.mxu0 0.0
  %1871 = vmatprep.subr.mxu0 0.0
  %1872 = vmatpush1.msra.mxu0 0.0
  %1873 = vmatprep.subr.mxu0 0.0
  %1874 = vmatpush1.msra.mxu0 0.0
  %1875 = vmatprep.subr.mxu0 0.0
  %1876 = vmatpush1.msra.mxu0 0.0
  %1877 = vmatprep.subr.mxu0 0.0
  %1878 = vmatpush1.msra.mxu0 0.0
  %1879 = vmatprep.subr.mxu0 0.0
  %1880 = vmatpush1.msra.mxu0 0.0
  %1881 = vmatprep.subr.mxu0 0.0
  %1882 = vmatpush1.msra.mxu0 0.0
  %1883 = vmatprep.subr.mxu0 0.0
  %1884 = vmatpush1.msra.mxu0 0.0
  %1885 = vmatprep.subr.mxu0 0.0
  %1886 = vmatpush1.msra.mxu0 0.0
  %1887 = vmatprep.subr.mxu0 0.0
  %1888 = vmatpush1.msra.mxu0 0.0
  %1889 = vmatprep.subr.mxu0 0.0
  %1890 = vmatpush1.msra.mxu0 0.0
  %1891 = vmatprep.subr.mxu0 0.0
  %1892 = vmatpush1.msra.mxu0 0.0
  %1893 = vmatprep.subr.mxu0 0.0
  %1894 = vmatpush1.msra.mxu0 0.0
  %1895 = vmatprep.subr.mxu0 0.0
  %1896 = vmatpush1.msra.mxu0 0.0
  %1897 = vmatprep.subr.mxu0 0.0
  %1898 = vmatpush1.msra.mxu0 0.0
  %1899 = vmatprep.subr.mxu0 0.0
  %1900 = vmatpush1.msra.mxu0 0.0
  %1901 = vmatprep.subr.mxu0 0.0
  %1902 = vmatpush1.msra.mxu0 0.0
  %1903 = vmatprep.subr.mxu0 0.0
  %1904 = vmatpush1.msra.mxu0 0.0
  %1905 = vmatprep.subr.mxu0 0.0
  %1906 = vmatpush1.msra.mxu0 0.0
  %1907 = vmatprep.subr.mxu0 0.0
  %1908 = vmatpush1.msra.mxu0 0.0
  %1909 = vmatprep.subr.mxu0 0.0
  %1910 = vmatpush1.msra.mxu0 0.0
  %1911 = vmatprep.subr.mxu0 0.0
  %1912 = vmatpush1.msra.mxu0 0.0
  %1913 = vmatprep.mubr.f32.mxu0 0.0
  %1914 = vmatmul.mubr.f32.gmra.mrb[0].mxu0 %v1604
  %v1915 = vpop.f32.mrb[0].mxu0
  %v1916 = vadd.f32 0.0, %v1915
  %v1917 = vpop.f32.mrb[0].mxu0
  %1918 = vdwg.mxu0
  %v1919 = vadd.f32 %v1844, %v1916
  %v1920 = vmul.f32 %v1919, 0.5
  %v1921 = vtanh.pop %v1920
  %v1922 = vmul.f32 %v1921, 0.5
  %v1923 = vadd.f32 %v1922, 0.5
  %v1924 = vmul.f32 %v1762, %v1256
  %v1925 = vmul.f32 %v1680, %v1841
  %v1926 = vadd.f32 %v1924, %v1925
  %v1927 = vtanh.pop %v1926
  %v1928 = vmul.f32 %v1923, %v1927
  %s1929 = scalar_lea.vmem %s8, 8
  %1930 = vst.msk [vmem:[%s1929] sm:$0xff] %vm91, %v1928
  %s1931 = scalar_lea.vmem [#allocation3], 16
  %v1932 = vld [vmem:[%s1931] sm:$0xff]
  %v1933 = vld [vmem:[%s5] sm:$0xff]
  %v1934 = vld [vmem:[%s5 + $0x8] sm:$0xff]
  %v1935 = vld [vmem:[%s5 + $0x10] sm:$0xff]
  %v1936 = vld [vmem:[%s5 + $0x18] sm:$0xff]
  %v1938 = vsel %vm91, %v1594, 0
  %1940 = vmatprep.subr.mxu0 0.0
  %1941 = vmatpush1.msra.mxu0 %v1933
  %1942 = vmatprep.subr.mxu0 0.0
  %1943 = vmatpush1.msra.mxu0 %v1934
  %1944 = vmatprep.subr.mxu0 0.0
  %1945 = vmatpush1.msra.mxu0 %v1935
  %1946 = vmatprep.subr.mxu0 0.0
  %1947 = vmatpush1.msra.mxu0 %v1936
  %1948 = vmatprep.subr.mxu0 0.0
  %1949 = vmatpush1.msra.mxu0 0.0
  %1950 = vmatprep.subr.mxu0 0.0
  %1951 = vmatpush1.msra.mxu0 0.0
  %1952 = vmatprep.subr.mxu0 0.0
  %1953 = vmatpush1.msra.mxu0 0.0
  %1954 = vmatprep.subr.mxu0 0.0
  %1955 = vmatpush1.msra.mxu0 0.0
  %1956 = vmatprep.subr.mxu0 0.0
  %1957 = vmatpush1.msra.mxu0 0.0
  %1958 = vmatprep.subr.mxu0 0.0
  %1959 = vmatpush1.msra.mxu0 0.0
  %1960 = vmatprep.subr.mxu0 0.0
  %1961 = vmatpush1.msra.mxu0 0.0
  %1962 = vmatprep.subr.mxu0 0.0
  %1963 = vmatpush1.msra.mxu0 0.0
  %1964 = vmatprep.subr.mxu0 0.0
  %1965 = vmatpush1.msra.mxu0 0.0
  %1966 = vmatprep.subr.mxu0 0.0
  %1967 = vmatpush1.msra.mxu0 0.0
  %1968 = vmatprep.subr.mxu0 0.0
  %1969 = vmatpush1.msra.mxu0 0.0
  %1970 = vmatprep.subr.mxu0 0.0
  %1971 = vmatpush1.msra.mxu0 0.0
  %1972 = vmatprep.subr.mxu0 0.0
  %1973 = vmatpush1.msra.mxu0 0.0
  %1974 = vmatprep.subr.mxu0 0.0
  %1975 = vmatpush1.msra.mxu0 0.0
  %1976 = vmatprep.subr.mxu0 0.0
  %1977 = vmatpush1.msra.mxu0 0.0
  %1978 = vmatprep.subr.mxu0 0.0
  %1979 = vmatpush1.msra.mxu0 0.0
  %1980 = vmatprep.subr.mxu0 0.0
  %1981 = vmatpush1.msra.mxu0 0.0
  %1982 = vmatprep.subr.mxu0 0.0
  %1983 = vmatpush1.msra.mxu0 0.0
  %1984 = vmatprep.subr.mxu0 0.0
  %1985 = vmatpush1.msra.mxu0 0.0
  %1986 = vmatprep.subr.mxu0 0.0
  %1987 = vmatpush1.msra.mxu0 0.0
  %1988 = vmatprep.subr.mxu0 0.0
  %1989 = vmatpush1.msra.mxu0 0.0
  %1990 = vmatprep.subr.mxu0 0.0
  %1991 = vmatpush1.msra.mxu0 0.0
  %1992 = vmatprep.subr.mxu0 0.0
  %1993 = vmatpush1.msra.mxu0 0.0
  %1994 = vmatprep.subr.mxu0 0.0
  %1995 = vmatpush1.msra.mxu0 0.0
  %1996 = vmatprep.subr.mxu0 0.0
  %1997 = vmatpush1.msra.mxu0 0.0
  %1998 = vmatprep.subr.mxu0 0.0
  %1999 = vmatpush1.msra.mxu0 0.0
  %2000 = vmatprep.subr.mxu0 0.0
  %2001 = vmatpush1.msra.mxu0 0.0
  %2002 = vmatprep.subr.mxu0 0.0
  %2003 = vmatpush1.msra.mxu0 0.0
  %2004 = vmatprep.mubr.f32.mxu0 0.0
  %2005 = vmatmul.mubr.f32.gmra.mrb[0].mxu0 %v1938
  %v2006 = vpop.f32.mrb[0].mxu0
  %v2007 = vadd.f32 0.0, %v2006
  %v2008 = vpop.f32.mrb[0].mxu0
  %2009 = vdwg.mxu0
  %v2010 = vadd.f32 %v1932, %v2007
  %v2011 = vmul.f32 %v2010, 0.5
  %v2012 = vtanh.pop %v2011
  %v2013 = vmul.f32 %v2012, 0.5
  %v2014 = vadd.f32 %v2013, 0.5
  %s2015 = sadd.s32 16, 32
  %s2016 = scalar_lea.vmem [#allocation3], %s2015
  %v2017 = vld [vmem:[%s2016] sm:$0xff]
  %v2018 = vld [vmem:[%s1347] sm:$0xff]
  %v2019 = vld [vmem:[%s1347 + $0x8] sm:$0xff]
  %v2020 = vld [vmem:[%s1347 + $0x10] sm:$0xff]
  %v2021 = vld [vmem:[%s1347 + $0x18] sm:$0xff]
  %2022 = vmatprep.subr.mxu0 0.0
  %2023 = vmatpush1.msra.mxu0 %v2018
  %2024 = vmatprep.subr.mxu0 0.0
  %2025 = vmatpush1.msra.mxu0 %v2019
  %2026 = vmatprep.subr.mxu0 0.0
  %2027 = vmatpush1.msra.mxu0 %v2020
  %2028 = vmatprep.subr.mxu0 0.0
  %2029 = vmatpush1.msra.mxu0 %v2021
  %2030 = vmatprep.subr.mxu0 0.0
  %2031 = vmatpush1.msra.mxu0 0.0
  %2032 = vmatprep.subr.mxu0 0.0
  %2033 = vmatpush1.msra.mxu0 0.0
  %2034 = vmatprep.subr.mxu0 0.0
  %2035 = vmatpush1.msra.mxu0 0.0
  %2036 = vmatprep.subr.mxu0 0.0
  %2037 = vmatpush1.msra.mxu0 0.0
  %2038 = vmatprep.subr.mxu0 0.0
  %2039 = vmatpush1.msra.mxu0 0.0
  %2040 = vmatprep.subr.mxu0 0.0
  %2041 = vmatpush1.msra.mxu0 0.0
  %2042 = vmatprep.subr.mxu0 0.0
  %2043 = vmatpush1.msra.mxu0 0.0
  %2044 = vmatprep.subr.mxu0 0.0
  %2045 = vmatpush1.msra.mxu0 0.0
  %2046 = vmatprep.subr.mxu0 0.0
  %2047 = vmatpush1.msra.mxu0 0.0
  %2048 = vmatprep.subr.mxu0 0.0
  %2049 = vmatpush1.msra.mxu0 0.0
  %2050 = vmatprep.subr.mxu0 0.0
  %2051 = vmatpush1.msra.mxu0 0.0
  %2052 = vmatprep.subr.mxu0 0.0
  %2053 = vmatpush1.msra.mxu0 0.0
  %2054 = vmatprep.subr.mxu0 0.0
  %2055 = vmatpush1.msra.mxu0 0.0
  %2056 = vmatprep.subr.mxu0 0.0
  %2057 = vmatpush1.msra.mxu0 0.0
  %2058 = vmatprep.subr.mxu0 0.0
  %2059 = vmatpush1.msra.mxu0 0.0
  %2060 = vmatprep.subr.mxu0 0.0
  %2061 = vmatpush1.msra.mxu0 0.0
  %2062 = vmatprep.subr.mxu0 0.0
  %2063 = vmatpush1.msra.mxu0 0.0
  %2064 = vmatprep.subr.mxu0 0.0
  %2065 = vmatpush1.msra.mxu0 0.0
  %2066 = vmatprep.subr.mxu0 0.0
  %2067 = vmatpush1.msra.mxu0 0.0
  %2068 = vmatprep.subr.mxu0 0.0
  %2069 = vmatpush1.msra.mxu0 0.0
  %2070 = vmatprep.subr.mxu0 0.0
  %2071 = vmatpush1.msra.mxu0 0.0
  %2072 = vmatprep.subr.mxu0 0.0
  %2073 = vmatpush1.msra.mxu0 0.0
  %2074 = vmatprep.subr.mxu0 0.0
  %2075 = vmatpush1.msra.mxu0 0.0
  %2076 = vmatprep.subr.mxu0 0.0
  %2077 = vmatpush1.msra.mxu0 0.0
  %2078 = vmatprep.subr.mxu0 0.0
  %2079 = vmatpush1.msra.mxu0 0.0
  %2080 = vmatprep.subr.mxu0 0.0
  %2081 = vmatpush1.msra.mxu0 0.0
  %2082 = vmatprep.subr.mxu0 0.0
  %2083 = vmatpush1.msra.mxu0 0.0
  %2084 = vmatprep.subr.mxu0 0.0
  %2085 = vmatpush1.msra.mxu0 0.0
  %2086 = vmatprep.mubr.f32.mxu0 0.0
  %2087 = vmatmul.mubr.f32.gmra.mrb[0].mxu0 %v1938
  %v2088 = vpop.f32.mrb[0].mxu0
  %v2089 = vadd.f32 0.0, %v2088
  %v2090 = vpop.f32.mrb[0].mxu0
  %2091 = vdwg.mxu0
  %v2092 = vadd.f32 %v2017, %v2089
  %v2093 = vmul.f32 %v2092, 0.5
  %v2094 = vtanh.pop %v2093
  %v2095 = vmul.f32 %v2094, 0.5
  %v2096 = vadd.f32 %v2095, 0.5
  %s2097 = sadd.s32 16, 64
  %s2098 = scalar_lea.vmem [#allocation3], %s2097
  %v2099 = vld [vmem:[%s2098] sm:$0xff]
  %v2100 = vld [vmem:[%s1430] sm:$0xff]
  %v2101 = vld [vmem:[%s1430 + $0x8] sm:$0xff]
  %v2102 = vld [vmem:[%s1430 + $0x10] sm:$0xff]
  %v2103 = vld [vmem:[%s1430 + $0x18] sm:$0xff]
  %2104 = vmatprep.subr.mxu0 0.0
  %2105 = vmatpush1.msra.mxu0 %v2100
  %2106 = vmatprep.subr.mxu0 0.0
  %2107 = vmatpush1.msra.mxu0 %v2101
  %2108 = vmatprep.subr.mxu0 0.0
  %2109 = vmatpush1.msra.mxu0 %v2102
  %2110 = vmatprep.subr.mxu0 0.0
  %2111 = vmatpush1.msra.mxu0 %v2103
  %2112 = vmatprep.subr.mxu0 0.0
  %2113 = vmatpush1.msra.mxu0 0.0
  %2114 = vmatprep.subr.mxu0 0.0
  %2115 = vmatpush1.msra.mxu0 0.0
  %2116 = vmatprep.subr.mxu0 0.0
  %2117 = vmatpush1.msra.mxu0 0.0
  %2118 = vmatprep.subr.mxu0 0.0
  %2119 = vmatpush1.msra.mxu0 0.0
  %2120 = vmatprep.subr.mxu0 0.0
  %2121 = vmatpush1.msra.mxu0 0.0
  %2122 = vmatprep.subr.mxu0 0.0
  %2123 = vmatpush1.msra.mxu0 0.0
  %2124 = vmatprep.subr.mxu0 0.0
  %2125 = vmatpush1.msra.mxu0 0.0
  %2126 = vmatprep.subr.mxu0 0.0
  %2127 = vmatpush1.msra.mxu0 0.0
  %2128 = vmatprep.subr.mxu0 0.0
  %2129 = vmatpush1.msra.mxu0 0.0
  %2130 = vmatprep.subr.mxu0 0.0
  %2131 = vmatpush1.msra.mxu0 0.0
  %2132 = vmatprep.subr.mxu0 0.0
  %2133 = vmatpush1.msra.mxu0 0.0
  %2134 = vmatprep.subr.mxu0 0.0
  %2135 = vmatpush1.msra.mxu0 0.0
  %2136 = vmatprep.subr.mxu0 0.0
  %2137 = vmatpush1.msra.mxu0 0.0
  %2138 = vmatprep.subr.mxu0 0.0
  %2139 = vmatpush1.msra.mxu0 0.0
  %2140 = vmatprep.subr.mxu0 0.0
  %2141 = vmatpush1.msra.mxu0 0.0
  %2142 = vmatprep.subr.mxu0 0.0
  %2143 = vmatpush1.msra.mxu0 0.0
  %2144 = vmatprep.subr.mxu0 0.0
  %2145 = vmatpush1.msra.mxu0 0.0
  %2146 = vmatprep.subr.mxu0 0.0
  %2147 = vmatpush1.msra.mxu0 0.0
  %2148 = vmatprep.subr.mxu0 0.0
  %2149 = vmatpush1.msra.mxu0 0.0
  %2150 = vmatprep.subr.mxu0 0.0
  %2151 = vmatpush1.msra.mxu0 0.0
  %2152 = vmatprep.subr.mxu0 0.0
  %2153 = vmatpush1.msra.mxu0 0.0
  %2154 = vmatprep.subr.mxu0 0.0
  %2155 = vmatpush1.msra.mxu0 0.0
  %2156 = vmatprep.subr.mxu0 0.0
  %2157 = vmatpush1.msra.mxu0 0.0
  %2158 = vmatprep.subr.mxu0 0.0
  %2159 = vmatpush1.msra.mxu0 0.0
  %2160 = vmatprep.subr.mxu0 0.0
  %2161 = vmatpush1.msra.mxu0 0.0
  %2162 = vmatprep.subr.mxu0 0.0
  %2163 = vmatpush1.msra.mxu0 0.0
  %2164 = vmatprep.subr.mxu0 0.0
  %2165 = vmatpush1.msra.mxu0 0.0
  %2166 = vmatprep.subr.mxu0 0.0
  %2167 = vmatpush1.msra.mxu0 0.0
  %2168 = vmatprep.mubr.f32.mxu0 0.0
  %2169 = vmatmul.mubr.f32.gmra.mrb[0].mxu0 %v1938
  %v2170 = vpop.f32.mrb[0].mxu0
  %v2171 = vadd.f32 0.0, %v2170
  %v2172 = vpop.f32.mrb[0].mxu0
  %2173 = vdwg.mxu0
  %v2174 = vadd.f32 %v2099, %v2171
  %v2175 = vtanh.pop %v2174
  %s2176 = sadd.s32 16, 96
  %s2177 = scalar_lea.vmem [#allocation3], %s2176
  %v2178 = vld [vmem:[%s2177] sm:$0xff]
  %v2179 = vld [vmem:[%s1510] sm:$0xff]
  %v2180 = vld [vmem:[%s1510 + $0x8] sm:$0xff]
  %v2181 = vld [vmem:[%s1510 + $0x10] sm:$0xff]
  %v2182 = vld [vmem:[%s1510 + $0x18] sm:$0xff]
  %2183 = vmatprep.subr.mxu0 0.0
  %2184 = vmatpush1.msra.mxu0 %v2179
  %2185 = vmatprep.subr.mxu0 0.0
  %2186 = vmatpush1.msra.mxu0 %v2180
  %2187 = vmatprep.subr.mxu0 0.0
  %2188 = vmatpush1.msra.mxu0 %v2181
  %2189 = vmatprep.subr.mxu0 0.0
  %2190 = vmatpush1.msra.mxu0 %v2182
  %2191 = vmatprep.subr.mxu0 0.0
  %2192 = vmatpush1.msra.mxu0 0.0
  %2193 = vmatprep.subr.mxu0 0.0
  %2194 = vmatpush1.msra.mxu0 0.0
  %2195 = vmatprep.subr.mxu0 0.0
  %2196 = vmatpush1.msra.mxu0 0.0
  %2197 = vmatprep.subr.mxu0 0.0
  %2198 = vmatpush1.msra.mxu0 0.0
  %2199 = vmatprep.subr.mxu0 0.0
  %2200 = vmatpush1.msra.mxu0 0.0
  %2201 = vmatprep.subr.mxu0 0.0
  %2202 = vmatpush1.msra.mxu0 0.0
  %2203 = vmatprep.subr.mxu0 0.0
  %2204 = vmatpush1.msra.mxu0 0.0
  %2205 = vmatprep.subr.mxu0 0.0
  %2206 = vmatpush1.msra.mxu0 0.0
  %2207 = vmatprep.subr.mxu0 0.0
  %2208 = vmatpush1.msra.mxu0 0.0
  %2209 = vmatprep.subr.mxu0 0.0
  %2210 = vmatpush1.msra.mxu0 0.0
  %2211 = vmatprep.subr.mxu0 0.0
  %2212 = vmatpush1.msra.mxu0 0.0
  %2213 = vmatprep.subr.mxu0 0.0
  %2214 = vmatpush1.msra.mxu0 0.0
  %2215 = vmatprep.subr.mxu0 0.0
  %2216 = vmatpush1.msra.mxu0 0.0
  %2217 = vmatprep.subr.mxu0 0.0
  %2218 = vmatpush1.msra.mxu0 0.0
  %2219 = vmatprep.subr.mxu0 0.0
  %2220 = vmatpush1.msra.mxu0 0.0
  %2221 = vmatprep.subr.mxu0 0.0
  %2222 = vmatpush1.msra.mxu0 0.0
  %2223 = vmatprep.subr.mxu0 0.0
  %2224 = vmatpush1.msra.mxu0 0.0
  %2225 = vmatprep.subr.mxu0 0.0
  %2226 = vmatpush1.msra.mxu0 0.0
  %2227 = vmatprep.subr.mxu0 0.0
  %2228 = vmatpush1.msra.mxu0 0.0
  %2229 = vmatprep.subr.mxu0 0.0
  %2230 = vmatpush1.msra.mxu0 0.0
  %2231 = vmatprep.subr.mxu0 0.0
  %2232 = vmatpush1.msra.mxu0 0.0
  %2233 = vmatprep.subr.mxu0 0.0
  %2234 = vmatpush1.msra.mxu0 0.0
  %2235 = vmatprep.subr.mxu0 0.0
  %2236 = vmatpush1.msra.mxu0 0.0
  %2237 = vmatprep.subr.mxu0 0.0
  %2238 = vmatpush1.msra.mxu0 0.0
  %2239 = vmatprep.subr.mxu0 0.0
  %2240 = vmatpush1.msra.mxu0 0.0
  %2241 = vmatprep.subr.mxu0 0.0
  %2242 = vmatpush1.msra.mxu0 0.0
  %2243 = vmatprep.subr.mxu0 0.0
  %2244 = vmatpush1.msra.mxu0 0.0
  %2245 = vmatprep.subr.mxu0 0.0
  %2246 = vmatpush1.msra.mxu0 0.0
  %2247 = vmatprep.mubr.f32.mxu0 0.0
  %2248 = vmatmul.mubr.f32.gmra.mrb[0].mxu0 %v1938
  %v2249 = vpop.f32.mrb[0].mxu0
  %v2250 = vadd.f32 0.0, %v2249
  %v2251 = vpop.f32.mrb[0].mxu0
  %2252 = vdwg.mxu0
  %v2253 = vadd.f32 %v2178, %v2250
  %v2254 = vmul.f32 %v2253, 0.5
  %v2255 = vtanh.pop %v2254
  %v2256 = vmul.f32 %v2255, 0.5
  %v2257 = vadd.f32 %v2256, 0.5
  %v2258 = vmul.f32 %v2096, %v1592
  %v2259 = vmul.f32 %v2014, %v2175
  %v2260 = vadd.f32 %v2258, %v2259
  %v2261 = vtanh.pop %v2260
  %v2262 = vmul.f32 %v2257, %v2261
  %s2263 = scalar_lea.vmem %s64, 16
  %2264 = vst.msk [vmem:[%s2263] sm:$0xff] %vm91, %v2262
  %s2265 = scalar_lea.vmem [#allocation2], 16
  %v2266 = vld [vmem:[%s2265] sm:$0xff]
  %v2267 = vld [vmem:[%s4] sm:$0xff]
  %v2268 = vld [vmem:[%s4 + $0x8] sm:$0xff]
  %v2269 = vld [vmem:[%s4 + $0x10] sm:$0xff]
  %v2270 = vld [vmem:[%s4 + $0x18] sm:$0xff]
  %v2272 = vsel %vm91, %v1928, 0
  %2274 = vmatprep.subr.mxu0 0.0
  %2275 = vmatpush1.msra.mxu0 %v2267
  %2276 = vmatprep.subr.mxu0 0.0
  %2277 = vmatpush1.msra.mxu0 %v2268
  %2278 = vmatprep.subr.mxu0 0.0
  %2279 = vmatpush1.msra.mxu0 %v2269
  %2280 = vmatprep.subr.mxu0 0.0
  %2281 = vmatpush1.msra.mxu0 %v2270
  %2282 = vmatprep.subr.mxu0 0.0
  %2283 = vmatpush1.msra.mxu0 0.0
  %2284 = vmatprep.subr.mxu0 0.0
  %2285 = vmatpush1.msra.mxu0 0.0
  %2286 = vmatprep.subr.mxu0 0.0
  %2287 = vmatpush1.msra.mxu0 0.0
  %2288 = vmatprep.subr.mxu0 0.0
  %2289 = vmatpush1.msra.mxu0 0.0
  %2290 = vmatprep.subr.mxu0 0.0
  %2291 = vmatpush1.msra.mxu0 0.0
  %2292 = vmatprep.subr.mxu0 0.0
  %2293 = vmatpush1.msra.mxu0 0.0
  %2294 = vmatprep.subr.mxu0 0.0
  %2295 = vmatpush1.msra.mxu0 0.0
  %2296 = vmatprep.subr.mxu0 0.0
  %2297 = vmatpush1.msra.mxu0 0.0
  %2298 = vmatprep.subr.mxu0 0.0
  %2299 = vmatpush1.msra.mxu0 0.0
  %2300 = vmatprep.subr.mxu0 0.0
  %2301 = vmatpush1.msra.mxu0 0.0
  %2302 = vmatprep.subr.mxu0 0.0
  %2303 = vmatpush1.msra.mxu0 0.0
  %2304 = vmatprep.subr.mxu0 0.0
  %2305 = vmatpush1.msra.mxu0 0.0
  %2306 = vmatprep.subr.mxu0 0.0
  %2307 = vmatpush1.msra.mxu0 0.0
  %2308 = vmatprep.subr.mxu0 0.0
  %2309 = vmatpush1.msra.mxu0 0.0
  %2310 = vmatprep.subr.mxu0 0.0
  %2311 = vmatpush1.msra.mxu0 0.0
  %2312 = vmatprep.subr.mxu0 0.0
  %2313 = vmatpush1.msra.mxu0 0.0
  %2314 = vmatprep.subr.mxu0 0.0
  %2315 = vmatpush1.msra.mxu0 0.0
  %2316 = vmatprep.subr.mxu0 0.0
  %2317 = vmatpush1.msra.mxu0 0.0
  %2318 = vmatprep.subr.mxu0 0.0
  %2319 = vmatpush1.msra.mxu0 0.0
  %2320 = vmatprep.subr.mxu0 0.0
  %2321 = vmatpush1.msra.mxu0 0.0
  %2322 = vmatprep.subr.mxu0 0.0
  %2323 = vmatpush1.msra.mxu0 0.0
  %2324 = vmatprep.subr.mxu0 0.0
  %2325 = vmatpush1.msra.mxu0 0.0
  %2326 = vmatprep.subr.mxu0 0.0
  %2327 = vmatpush1.msra.mxu0 0.0
  %2328 = vmatprep.subr.mxu0 0.0
  %2329 = vmatpush1.msra.mxu0 0.0
  %2330 = vmatprep.subr.mxu0 0.0
  %2331 = vmatpush1.msra.mxu0 0.0
  %2332 = vmatprep.subr.mxu0 0.0
  %2333 = vmatpush1.msra.mxu0 0.0
  %2334 = vmatprep.subr.mxu0 0.0
  %2335 = vmatpush1.msra.mxu0 0.0
  %2336 = vmatprep.subr.mxu0 0.0
  %2337 = vmatpush1.msra.mxu0 0.0
  %2338 = vmatprep.mubr.f32.mxu0 0.0
  %2339 = vmatmul.mubr.f32.gmra.mrb[0].mxu0 %v2272
  %v2340 = vpop.f32.mrb[0].mxu0
  %v2341 = vadd.f32 0.0, %v2340
  %v2342 = vpop.f32.mrb[0].mxu0
  %2343 = vdwg.mxu0
  %v2344 = vadd.f32 %v2266, %v2341
  %v2345 = vmul.f32 %v2344, 0.5
  %v2346 = vtanh.pop %v2345
  %v2347 = vmul.f32 %v2346, 0.5
  %v2348 = vadd.f32 %v2347, 0.5
  %s2349 = scalar_lea.vmem [#allocation2], %s2015
  %v2350 = vld [vmem:[%s2349] sm:$0xff]
  %v2351 = vld [vmem:[%s1011] sm:$0xff]
  %v2352 = vld [vmem:[%s1011 + $0x8] sm:$0xff]
  %v2353 = vld [vmem:[%s1011 + $0x10] sm:$0xff]
  %v2354 = vld [vmem:[%s1011 + $0x18] sm:$0xff]
  %2355 = vmatprep.subr.mxu0 0.0
  %2356 = vmatpush1.msra.mxu0 %v2351
  %2357 = vmatprep.subr.mxu0 0.0
  %2358 = vmatpush1.msra.mxu0 %v2352
  %2359 = vmatprep.subr.mxu0 0.0
  %2360 = vmatpush1.msra.mxu0 %v2353
  %2361 = vmatprep.subr.mxu0 0.0
  %2362 = vmatpush1.msra.mxu0 %v2354
  %2363 = vmatprep.subr.mxu0 0.0
  %2364 = vmatpush1.msra.mxu0 0.0
  %2365 = vmatprep.subr.mxu0 0.0
  %2366 = vmatpush1.msra.mxu0 0.0
  %2367 = vmatprep.subr.mxu0 0.0
  %2368 = vmatpush1.msra.mxu0 0.0
  %2369 = vmatprep.subr.mxu0 0.0
  %2370 = vmatpush1.msra.mxu0 0.0
  %2371 = vmatprep.subr.mxu0 0.0
  %2372 = vmatpush1.msra.mxu0 0.0
  %2373 = vmatprep.subr.mxu0 0.0
  %2374 = vmatpush1.msra.mxu0 0.0
  %2375 = vmatprep.subr.mxu0 0.0
  %2376 = vmatpush1.msra.mxu0 0.0
  %2377 = vmatprep.subr.mxu0 0.0
  %2378 = vmatpush1.msra.mxu0 0.0
  %2379 = vmatprep.subr.mxu0 0.0
  %2380 = vmatpush1.msra.mxu0 0.0
  %2381 = vmatprep.subr.mxu0 0.0
  %2382 = vmatpush1.msra.mxu0 0.0
  %2383 = vmatprep.subr.mxu0 0.0
  %2384 = vmatpush1.msra.mxu0 0.0
  %2385 = vmatprep.subr.mxu0 0.0
  %2386 = vmatpush1.msra.mxu0 0.0
  %2387 = vmatprep.subr.mxu0 0.0
  %2388 = vmatpush1.msra.mxu0 0.0
  %2389 = vmatprep.subr.mxu0 0.0
  %2390 = vmatpush1.msra.mxu0 0.0
  %2391 = vmatprep.subr.mxu0 0.0
  %2392 = vmatpush1.msra.mxu0 0.0
  %2393 = vmatprep.subr.mxu0 0.0
  %2394 = vmatpush1.msra.mxu0 0.0
  %2395 = vmatprep.subr.mxu0 0.0
  %2396 = vmatpush1.msra.mxu0 0.0
  %2397 = vmatprep.subr.mxu0 0.0
  %2398 = vmatpush1.msra.mxu0 0.0
  %2399 = vmatprep.subr.mxu0 0.0
  %2400 = vmatpush1.msra.mxu0 0.0
  %2401 = vmatprep.subr.mxu0 0.0
  %2402 = vmatpush1.msra.mxu0 0.0
  %2403 = vmatprep.subr.mxu0 0.0
  %2404 = vmatpush1.msra.mxu0 0.0
  %2405 = vmatprep.subr.mxu0 0.0
  %2406 = vmatpush1.msra.mxu0 0.0
  %2407 = vmatprep.subr.mxu0 0.0
  %2408 = vmatpush1.msra.mxu0 0.0
  %2409 = vmatprep.subr.mxu0 0.0
  %2410 = vmatpush1.msra.mxu0 0.0
  %2411 = vmatprep.subr.mxu0 0.0
  %2412 = vmatpush1.msra.mxu0 0.0
  %2413 = vmatprep.subr.mxu0 0.0
  %2414 = vmatpush1.msra.mxu0 0.0
  %2415 = vmatprep.subr.mxu0 0.0
  %2416 = vmatpush1.msra.mxu0 0.0
  %2417 = vmatprep.subr.mxu0 0.0
  %2418 = vmatpush1.msra.mxu0 0.0
  %2419 = vmatprep.mubr.f32.mxu0 0.0
  %2420 = vmatmul.mubr.f32.gmra.mrb[0].mxu0 %v2272
  %v2421 = vpop.f32.mrb[0].mxu0
  %v2422 = vadd.f32 0.0, %v2421
  %v2423 = vpop.f32.mrb[0].mxu0
  %2424 = vdwg.mxu0
  %v2425 = vadd.f32 %v2350, %v2422
  %v2426 = vmul.f32 %v2425, 0.5
  %v2427 = vtanh.pop %v2426
  %v2428 = vmul.f32 %v2427, 0.5
  %v2429 = vadd.f32 %v2428, 0.5
  %s2430 = scalar_lea.vmem [#allocation2], %s2097
  %v2431 = vld [vmem:[%s2430] sm:$0xff]
  %v2432 = vld [vmem:[%s1094] sm:$0xff]
  %v2433 = vld [vmem:[%s1094 + $0x8] sm:$0xff]
  %v2434 = vld [vmem:[%s1094 + $0x10] sm:$0xff]
  %v2435 = vld [vmem:[%s1094 + $0x18] sm:$0xff]
  %2436 = vmatprep.subr.mxu0 0.0
  %2437 = vmatpush1.msra.mxu0 %v2432
  %2438 = vmatprep.subr.mxu0 0.0
  %2439 = vmatpush1.msra.mxu0 %v2433
  %2440 = vmatprep.subr.mxu0 0.0
  %2441 = vmatpush1.msra.mxu0 %v2434
  %2442 = vmatprep.subr.mxu0 0.0
  %2443 = vmatpush1.msra.mxu0 %v2435
  %2444 = vmatprep.subr.mxu0 0.0
  %2445 = vmatpush1.msra.mxu0 0.0
  %2446 = vmatprep.subr.mxu0 0.0
  %2447 = vmatpush1.msra.mxu0 0.0
  %2448 = vmatprep.subr.mxu0 0.0
  %2449 = vmatpush1.msra.mxu0 0.0
  %2450 = vmatprep.subr.mxu0 0.0
  %2451 = vmatpush1.msra.mxu0 0.0
  %2452 = vmatprep.subr.mxu0 0.0
  %2453 = vmatpush1.msra.mxu0 0.0
  %2454 = vmatprep.subr.mxu0 0.0
  %2455 = vmatpush1.msra.mxu0 0.0
  %2456 = vmatprep.subr.mxu0 0.0
  %2457 = vmatpush1.msra.mxu0 0.0
  %2458 = vmatprep.subr.mxu0 0.0
  %2459 = vmatpush1.msra.mxu0 0.0
  %2460 = vmatprep.subr.mxu0 0.0
  %2461 = vmatpush1.msra.mxu0 0.0
  %2462 = vmatprep.subr.mxu0 0.0
  %2463 = vmatpush1.msra.mxu0 0.0
  %2464 = vmatprep.subr.mxu0 0.0
  %2465 = vmatpush1.msra.mxu0 0.0
  %2466 = vmatprep.subr.mxu0 0.0
  %2467 = vmatpush1.msra.mxu0 0.0
  %2468 = vmatprep.subr.mxu0 0.0
  %2469 = vmatpush1.msra.mxu0 0.0
  %2470 = vmatprep.subr.mxu0 0.0
  %2471 = vmatpush1.msra.mxu0 0.0
  %2472 = vmatprep.subr.mxu0 0.0
  %2473 = vmatpush1.msra.mxu0 0.0
  %2474 = vmatprep.subr.mxu0 0.0
  %2475 = vmatpush1.msra.mxu0 0.0
  %2476 = vmatprep.subr.mxu0 0.0
  %2477 = vmatpush1.msra.mxu0 0.0
  %2478 = vmatprep.subr.mxu0 0.0
  %2479 = vmatpush1.msra.mxu0 0.0
  %2480 = vmatprep.subr.mxu0 0.0
  %2481 = vmatpush1.msra.mxu0 0.0
  %2482 = vmatprep.subr.mxu0 0.0
  %2483 = vmatpush1.msra.mxu0 0.0
  %2484 = vmatprep.subr.mxu0 0.0
  %2485 = vmatpush1.msra.mxu0 0.0
  %2486 = vmatprep.subr.mxu0 0.0
  %2487 = vmatpush1.msra.mxu0 0.0
  %2488 = vmatprep.subr.mxu0 0.0
  %2489 = vmatpush1.msra.mxu0 0.0
  %2490 = vmatprep.subr.mxu0 0.0
  %2491 = vmatpush1.msra.mxu0 0.0
  %2492 = vmatprep.subr.mxu0 0.0
  %2493 = vmatpush1.msra.mxu0 0.0
  %2494 = vmatprep.subr.mxu0 0.0
  %2495 = vmatpush1.msra.mxu0 0.0
  %2496 = vmatprep.subr.mxu0 0.0
  %2497 = vmatpush1.msra.mxu0 0.0
  %2498 = vmatprep.subr.mxu0 0.0
  %2499 = vmatpush1.msra.mxu0 0.0
  %2500 = vmatprep.mubr.f32.mxu0 0.0
  %2501 = vmatmul.mubr.f32.gmra.mrb[0].mxu0 %v2272
  %v2502 = vpop.f32.mrb[0].mxu0
  %v2503 = vadd.f32 0.0, %v2502
  %v2504 = vpop.f32.mrb[0].mxu0
  %2505 = vdwg.mxu0
  %v2506 = vadd.f32 %v2431, %v2503
  %v2507 = vtanh.pop %v2506
  %s2508 = scalar_lea.vmem [#allocation2], %s2176
  %v2509 = vld [vmem:[%s2508] sm:$0xff]
  %v2510 = vld [vmem:[%s1174] sm:$0xff]
  %v2511 = vld [vmem:[%s1174 + $0x8] sm:$0xff]
  %v2512 = vld [vmem:[%s1174 + $0x10] sm:$0xff]
  %v2513 = vld [vmem:[%s1174 + $0x18] sm:$0xff]
  %2514 = vmatprep.subr.mxu0 0.0
  %2515 = vmatpush1.msra.mxu0 %v2510
  %2516 = vmatprep.subr.mxu0 0.0
  %2517 = vmatpush1.msra.mxu0 %v2511
  %2518 = vmatprep.subr.mxu0 0.0
  %2519 = vmatpush1.msra.mxu0 %v2512
  %2520 = vmatprep.subr.mxu0 0.0
  %2521 = vmatpush1.msra.mxu0 %v2513
  %2522 = vmatprep.subr.mxu0 0.0
  %2523 = vmatpush1.msra.mxu0 0.0
  %2524 = vmatprep.subr.mxu0 0.0
  %2525 = vmatpush1.msra.mxu0 0.0
  %2526 = vmatprep.subr.mxu0 0.0
  %2527 = vmatpush1.msra.mxu0 0.0
  %2528 = vmatprep.subr.mxu0 0.0
  %2529 = vmatpush1.msra.mxu0 0.0
  %2530 = vmatprep.subr.mxu0 0.0
  %2531 = vmatpush1.msra.mxu0 0.0
  %2532 = vmatprep.subr.mxu0 0.0
  %2533 = vmatpush1.msra.mxu0 0.0
  %2534 = vmatprep.subr.mxu0 0.0
  %2535 = vmatpush1.msra.mxu0 0.0
  %2536 = vmatprep.subr.mxu0 0.0
  %2537 = vmatpush1.msra.mxu0 0.0
  %2538 = vmatprep.subr.mxu0 0.0
  %2539 = vmatpush1.msra.mxu0 0.0
  %2540 = vmatprep.subr.mxu0 0.0
  %2541 = vmatpush1.msra.mxu0 0.0
  %2542 = vmatprep.subr.mxu0 0.0
  %2543 = vmatpush1.msra.mxu0 0.0
  %2544 = vmatprep.subr.mxu0 0.0
  %2545 = vmatpush1.msra.mxu0 0.0
  %2546 = vmatprep.subr.mxu0 0.0
  %2547 = vmatpush1.msra.mxu0 0.0
  %2548 = vmatprep.subr.mxu0 0.0
  %2549 = vmatpush1.msra.mxu0 0.0
  %2550 = vmatprep.subr.mxu0 0.0
  %2551 = vmatpush1.msra.mxu0 0.0
  %2552 = vmatprep.subr.mxu0 0.0
  %2553 = vmatpush1.msra.mxu0 0.0
  %2554 = vmatprep.subr.mxu0 0.0
  %2555 = vmatpush1.msra.mxu0 0.0
  %2556 = vmatprep.subr.mxu0 0.0
  %2557 = vmatpush1.msra.mxu0 0.0
  %2558 = vmatprep.subr.mxu0 0.0
  %2559 = vmatpush1.msra.mxu0 0.0
  %2560 = vmatprep.subr.mxu0 0.0
  %2561 = vmatpush1.msra.mxu0 0.0
  %2562 = vmatprep.subr.mxu0 0.0
  %2563 = vmatpush1.msra.mxu0 0.0
  %2564 = vmatprep.subr.mxu0 0.0
  %2565 = vmatpush1.msra.mxu0 0.0
  %2566 = vmatprep.subr.mxu0 0.0
  %2567 = vmatpush1.msra.mxu0 0.0
  %2568 = vmatprep.subr.mxu0 0.0
  %2569 = vmatpush1.msra.mxu0 0.0
  %2570 = vmatprep.subr.mxu0 0.0
  %2571 = vmatpush1.msra.mxu0 0.0
  %2572 = vmatprep.subr.mxu0 0.0
  %2573 = vmatpush1.msra.mxu0 0.0
  %2574 = vmatprep.subr.mxu0 0.0
  %2575 = vmatpush1.msra.mxu0 0.0
  %2576 = vmatprep.subr.mxu0 0.0
  %2577 = vmatpush1.msra.mxu0 0.0
  %2578 = vmatprep.mubr.f32.mxu0 0.0
  %2579 = vmatmul.mubr.f32.gmra.mrb[0].mxu0 %v2272
  %v2580 = vpop.f32.mrb[0].mxu0
  %v2581 = vadd.f32 0.0, %v2580
  %v2582 = vpop.f32.mrb[0].mxu0
  %2583 = vdwg.mxu0
  %v2584 = vadd.f32 %v2509, %v2581
  %v2585 = vmul.f32 %v2584, 0.5
  %v2586 = vtanh.pop %v2585
  %v2587 = vmul.f32 %v2586, 0.5
  %v2588 = vadd.f32 %v2587, 0.5
  %v2589 = vmul.f32 %v2429, %v1926
  %v2590 = vmul.f32 %v2348, %v2507
  %v2591 = vadd.f32 %v2589, %v2590
  %v2592 = vtanh.pop %v2591
  %v2593 = vmul.f32 %v2588, %v2592
  %s2594 = scalar_lea.vmem %s8, 16
  %2595 = vst.msk [vmem:[%s2594] sm:$0xff] %vm91, %v2593
  %s2596 = scalar_lea.vmem [#allocation3], 8
  %v2597 = vld [vmem:[%s2596] sm:$0xff]
  %v2598 = vld [vmem:[%s5] sm:$0xff]
  %v2599 = vld [vmem:[%s5 + $0x8] sm:$0xff]
  %v2600 = vld [vmem:[%s5 + $0x10] sm:$0xff]
  %v2601 = vld [vmem:[%s5 + $0x18] sm:$0xff]
  %v2603 = vsel %vm91, %v2262, 0
  %2605 = vmatprep.subr.mxu0 0.0
  %2606 = vmatpush1.msra.mxu0 %v2598
  %2607 = vmatprep.subr.mxu0 0.0
  %2608 = vmatpush1.msra.mxu0 %v2599
  %2609 = vmatprep.subr.mxu0 0.0
  %2610 = vmatpush1.msra.mxu0 %v2600
  %2611 = vmatprep.subr.mxu0 0.0
  %2612 = vmatpush1.msra.mxu0 %v2601
  %2613 = vmatprep.subr.mxu0 0.0
  %2614 = vmatpush1.msra.mxu0 0.0
  %2615 = vmatprep.subr.mxu0 0.0
  %2616 = vmatpush1.msra.mxu0 0.0
  %2617 = vmatprep.subr.mxu0 0.0
  %2618 = vmatpush1.msra.mxu0 0.0
  %2619 = vmatprep.subr.mxu0 0.0
  %2620 = vmatpush1.msra.mxu0 0.0
  %2621 = vmatprep.subr.mxu0 0.0
  %2622 = vmatpush1.msra.mxu0 0.0
  %2623 = vmatprep.subr.mxu0 0.0
  %2624 = vmatpush1.msra.mxu0 0.0
  %2625 = vmatprep.subr.mxu0 0.0
  %2626 = vmatpush1.msra.mxu0 0.0
  %2627 = vmatprep.subr.mxu0 0.0
  %2628 = vmatpush1.msra.mxu0 0.0
  %2629 = vmatprep.subr.mxu0 0.0
  %2630 = vmatpush1.msra.mxu0 0.0
  %2631 = vmatprep.subr.mxu0 0.0
  %2632 = vmatpush1.msra.mxu0 0.0
  %2633 = vmatprep.subr.mxu0 0.0
  %2634 = vmatpush1.msra.mxu0 0.0
  %2635 = vmatprep.subr.mxu0 0.0
  %2636 = vmatpush1.msra.mxu0 0.0
  %2637 = vmatprep.subr.mxu0 0.0
  %2638 = vmatpush1.msra.mxu0 0.0
  %2639 = vmatprep.subr.mxu0 0.0
  %2640 = vmatpush1.msra.mxu0 0.0
  %2641 = vmatprep.subr.mxu0 0.0
  %2642 = vmatpush1.msra.mxu0 0.0
  %2643 = vmatprep.subr.mxu0 0.0
  %2644 = vmatpush1.msra.mxu0 0.0
  %2645 = vmatprep.subr.mxu0 0.0
  %2646 = vmatpush1.msra.mxu0 0.0
  %2647 = vmatprep.subr.mxu0 0.0
  %2648 = vmatpush1.msra.mxu0 0.0
  %2649 = vmatprep.subr.mxu0 0.0
  %2650 = vmatpush1.msra.mxu0 0.0
  %2651 = vmatprep.subr.mxu0 0.0
  %2652 = vmatpush1.msra.mxu0 0.0
  %2653 = vmatprep.subr.mxu0 0.0
  %2654 = vmatpush1.msra.mxu0 0.0
  %2655 = vmatprep.subr.mxu0 0.0
  %2656 = vmatpush1.msra.mxu0 0.0
  %2657 = vmatprep.subr.mxu0 0.0
  %2658 = vmatpush1.msra.mxu0 0.0
  %2659 = vmatprep.subr.mxu0 0.0
  %2660 = vmatpush1.msra.mxu0 0.0
  %2661 = vmatprep.subr.mxu0 0.0
  %2662 = vmatpush1.msra.mxu0 0.0
  %2663 = vmatprep.subr.mxu0 0.0
  %2664 = vmatpush1.msra.mxu0 0.0
  %2665 = vmatprep.subr.mxu0 0.0
  %2666 = vmatpush1.msra.mxu0 0.0
  %2667 = vmatprep.subr.mxu0 0.0
  %2668 = vmatpush1.msra.mxu0 0.0
  %2669 = vmatprep.mubr.f32.mxu0 0.0
  %2670 = vmatmul.mubr.f32.gmra.mrb[0].mxu0 %v2603
  %v2671 = vpop.f32.mrb[0].mxu0
  %v2672 = vadd.f32 0.0, %v2671
  %v2673 = vpop.f32.mrb[0].mxu0
  %2674 = vdwg.mxu0
  %v2675 = vadd.f32 %v2597, %v2672
  %v2676 = vmul.f32 %v2675, 0.5
  %v2677 = vtanh.pop %v2676
  %v2678 = vmul.f32 %v2677, 0.5
  %v2679 = vadd.f32 %v2678, 0.5
  %s2680 = scalar_lea.vmem [#allocation3], %s1681
  %v2681 = vld [vmem:[%s2680] sm:$0xff]
  %v2682 = vld [vmem:[%s1347] sm:$0xff]
  %v2683 = vld [vmem:[%s1347 + $0x8] sm:$0xff]
  %v2684 = vld [vmem:[%s1347 + $0x10] sm:$0xff]
  %v2685 = vld [vmem:[%s1347 + $0x18] sm:$0xff]
  %2686 = vmatprep.subr.mxu0 0.0
  %2687 = vmatpush1.msra.mxu0 %v2682
  %2688 = vmatprep.subr.mxu0 0.0
  %2689 = vmatpush1.msra.mxu0 %v2683
  %2690 = vmatprep.subr.mxu0 0.0
  %2691 = vmatpush1.msra.mxu0 %v2684
  %2692 = vmatprep.subr.mxu0 0.0
  %2693 = vmatpush1.msra.mxu0 %v2685
  %2694 = vmatprep.subr.mxu0 0.0
  %2695 = vmatpush1.msra.mxu0 0.0
  %2696 = vmatprep.subr.mxu0 0.0
  %2697 = vmatpush1.msra.mxu0 0.0
  %2698 = vmatprep.subr.mxu0 0.0
  %2699 = vmatpush1.msra.mxu0 0.0
  %2700 = vmatprep.subr.mxu0 0.0
  %2701 = vmatpush1.msra.mxu0 0.0
  %2702 = vmatprep.subr.mxu0 0.0
  %2703 = vmatpush1.msra.mxu0 0.0
  %2704 = vmatprep.subr.mxu0 0.0
  %2705 = vmatpush1.msra.mxu0 0.0
  %2706 = vmatprep.subr.mxu0 0.0
  %2707 = vmatpush1.msra.mxu0 0.0
  %2708 = vmatprep.subr.mxu0 0.0
  %2709 = vmatpush1.msra.mxu0 0.0
  %2710 = vmatprep.subr.mxu0 0.0
  %2711 = vmatpush1.msra.mxu0 0.0
  %2712 = vmatprep.subr.mxu0 0.0
  %2713 = vmatpush1.msra.mxu0 0.0
  %2714 = vmatprep.subr.mxu0 0.0
  %2715 = vmatpush1.msra.mxu0 0.0
  %2716 = vmatprep.subr.mxu0 0.0
  %2717 = vmatpush1.msra.mxu0 0.0
  %2718 = vmatprep.subr.mxu0 0.0
  %2719 = vmatpush1.msra.mxu0 0.0
  %2720 = vmatprep.subr.mxu0 0.0
  %2721 = vmatpush1.msra.mxu0 0.0
  %2722 = vmatprep.subr.mxu0 0.0
  %2723 = vmatpush1.msra.mxu0 0.0
  %2724 = vmatprep.subr.mxu0 0.0
  %2725 = vmatpush1.msra.mxu0 0.0
  %2726 = vmatprep.subr.mxu0 0.0
  %2727 = vmatpush1.msra.mxu0 0.0
  %2728 = vmatprep.subr.mxu0 0.0
  %2729 = vmatpush1.msra.mxu0 0.0
  %2730 = vmatprep.subr.mxu0 0.0
  %2731 = vmatpush1.msra.mxu0 0.0
  %2732 = vmatprep.subr.mxu0 0.0
  %2733 = vmatpush1.msra.mxu0 0.0
  %2734 = vmatprep.subr.mxu0 0.0
  %2735 = vmatpush1.msra.mxu0 0.0
  %2736 = vmatprep.subr.mxu0 0.0
  %2737 = vmatpush1.msra.mxu0 0.0
  %2738 = vmatprep.subr.mxu0 0.0
  %2739 = vmatpush1.msra.mxu0 0.0
  %2740 = vmatprep.subr.mxu0 0.0
  %2741 = vmatpush1.msra.mxu0 0.0
  %2742 = vmatprep.subr.mxu0 0.0
  %2743 = vmatpush1.msra.mxu0 0.0
  %2744 = vmatprep.subr.mxu0 0.0
  %2745 = vmatpush1.msra.mxu0 0.0
  %2746 = vmatprep.subr.mxu0 0.0
  %2747 = vmatpush1.msra.mxu0 0.0
  %2748 = vmatprep.subr.mxu0 0.0
  %2749 = vmatpush1.msra.mxu0 0.0
  %2750 = vmatprep.mubr.f32.mxu0 0.0
  %2751 = vmatmul.mubr.f32.gmra.mrb[0].mxu0 %v2603
  %v2752 = vpop.f32.mrb[0].mxu0
  %v2753 = vadd.f32 0.0, %v2752
  %v2754 = vpop.f32.mrb[0].mxu0
  %2755 = vdwg.mxu0
  %v2756 = vadd.f32 %v2681, %v2753
  %v2757 = vmul.f32 %v2756, 0.5
  %v2758 = vtanh.pop %v2757
  %v2759 = vmul.f32 %v2758, 0.5
  %v2760 = vadd.f32 %v2759, 0.5
  %s2761 = scalar_lea.vmem [#allocation3], %s1763
  %v2762 = vld [vmem:[%s2761] sm:$0xff]
  %v2763 = vld [vmem:[%s1430] sm:$0xff]
  %v2764 = vld [vmem:[%s1430 + $0x8] sm:$0xff]
  %v2765 = vld [vmem:[%s1430 + $0x10] sm:$0xff]
  %v2766 = vld [vmem:[%s1430 + $0x18] sm:$0xff]
  %2767 = vmatprep.subr.mxu0 0.0
  %2768 = vmatpush1.msra.mxu0 %v2763
  %2769 = vmatprep.subr.mxu0 0.0
  %2770 = vmatpush1.msra.mxu0 %v2764
  %2771 = vmatprep.subr.mxu0 0.0
  %2772 = vmatpush1.msra.mxu0 %v2765
  %2773 = vmatprep.subr.mxu0 0.0
  %2774 = vmatpush1.msra.mxu0 %v2766
  %2775 = vmatprep.subr.mxu0 0.0
  %2776 = vmatpush1.msra.mxu0 0.0
  %2777 = vmatprep.subr.mxu0 0.0
  %2778 = vmatpush1.msra.mxu0 0.0
  %2779 = vmatprep.subr.mxu0 0.0
  %2780 = vmatpush1.msra.mxu0 0.0
  %2781 = vmatprep.subr.mxu0 0.0
  %2782 = vmatpush1.msra.mxu0 0.0
  %2783 = vmatprep.subr.mxu0 0.0
  %2784 = vmatpush1.msra.mxu0 0.0
  %2785 = vmatprep.subr.mxu0 0.0
  %2786 = vmatpush1.msra.mxu0 0.0
  %2787 = vmatprep.subr.mxu0 0.0
  %2788 = vmatpush1.msra.mxu0 0.0
  %2789 = vmatprep.subr.mxu0 0.0
  %2790 = vmatpush1.msra.mxu0 0.0
  %2791 = vmatprep.subr.mxu0 0.0
  %2792 = vmatpush1.msra.mxu0 0.0
  %2793 = vmatprep.subr.mxu0 0.0
  %2794 = vmatpush1.msra.mxu0 0.0
  %2795 = vmatprep.subr.mxu0 0.0
  %2796 = vmatpush1.msra.mxu0 0.0
  %2797 = vmatprep.subr.mxu0 0.0
  %2798 = vmatpush1.msra.mxu0 0.0
  %2799 = vmatprep.subr.mxu0 0.0
  %2800 = vmatpush1.msra.mxu0 0.0
  %2801 = vmatprep.subr.mxu0 0.0
  %2802 = vmatpush1.msra.mxu0 0.0
  %2803 = vmatprep.subr.mxu0 0.0
  %2804 = vmatpush1.msra.mxu0 0.0
  %2805 = vmatprep.subr.mxu0 0.0
  %2806 = vmatpush1.msra.mxu0 0.0
  %2807 = vmatprep.subr.mxu0 0.0
  %2808 = vmatpush1.msra.mxu0 0.0
  %2809 = vmatprep.subr.mxu0 0.0
  %2810 = vmatpush1.msra.mxu0 0.0
  %2811 = vmatprep.subr.mxu0 0.0
  %2812 = vmatpush1.msra.mxu0 0.0
  %2813 = vmatprep.subr.mxu0 0.0
  %2814 = vmatpush1.msra.mxu0 0.0
  %2815 = vmatprep.subr.mxu0 0.0
  %2816 = vmatpush1.msra.mxu0 0.0
  %2817 = vmatprep.subr.mxu0 0.0
  %2818 = vmatpush1.msra.mxu0 0.0
  %2819 = vmatprep.subr.mxu0 0.0
  %2820 = vmatpush1.msra.mxu0 0.0
  %2821 = vmatprep.subr.mxu0 0.0
  %2822 = vmatpush1.msra.mxu0 0.0
  %2823 = vmatprep.subr.mxu0 0.0
  %2824 = vmatpush1.msra.mxu0 0.0
  %2825 = vmatprep.subr.mxu0 0.0
  %2826 = vmatpush1.msra.mxu0 0.0
  %2827 = vmatprep.subr.mxu0 0.0
  %2828 = vmatpush1.msra.mxu0 0.0
  %2829 = vmatprep.subr.mxu0 0.0
  %2830 = vmatpush1.msra.mxu0 0.0
  %2831 = vmatprep.mubr.f32.mxu0 0.0
  %2832 = vmatmul.mubr.f32.gmra.mrb[0].mxu0 %v2603
  %v2833 = vpop.f32.mrb[0].mxu0
  %v2834 = vadd.f32 0.0, %v2833
  %v2835 = vpop.f32.mrb[0].mxu0
  %2836 = vdwg.mxu0
  %v2837 = vadd.f32 %v2762, %v2834
  %v2838 = vtanh.pop %v2837
  %s2839 = scalar_lea.vmem [#allocation3], %s1842
  %v2840 = vld [vmem:[%s2839] sm:$0xff]
  %v2841 = vld [vmem:[%s1510] sm:$0xff]
  %v2842 = vld [vmem:[%s1510 + $0x8] sm:$0xff]
  %v2843 = vld [vmem:[%s1510 + $0x10] sm:$0xff]
  %v2844 = vld [vmem:[%s1510 + $0x18] sm:$0xff]
  %2845 = vmatprep.subr.mxu0 0.0
  %2846 = vmatpush1.msra.mxu0 %v2841
  %2847 = vmatprep.subr.mxu0 0.0
  %2848 = vmatpush1.msra.mxu0 %v2842
  %2849 = vmatprep.subr.mxu0 0.0
  %2850 = vmatpush1.msra.mxu0 %v2843
  %2851 = vmatprep.subr.mxu0 0.0
  %2852 = vmatpush1.msra.mxu0 %v2844
  %2853 = vmatprep.subr.mxu0 0.0
  %2854 = vmatpush1.msra.mxu0 0.0
  %2855 = vmatprep.subr.mxu0 0.0
  %2856 = vmatpush1.msra.mxu0 0.0
  %2857 = vmatprep.subr.mxu0 0.0
  %2858 = vmatpush1.msra.mxu0 0.0
  %2859 = vmatprep.subr.mxu0 0.0
  %2860 = vmatpush1.msra.mxu0 0.0
  %2861 = vmatprep.subr.mxu0 0.0
  %2862 = vmatpush1.msra.mxu0 0.0
  %2863 = vmatprep.subr.mxu0 0.0
  %2864 = vmatpush1.msra.mxu0 0.0
  %2865 = vmatprep.subr.mxu0 0.0
  %2866 = vmatpush1.msra.mxu0 0.0
  %2867 = vmatprep.subr.mxu0 0.0
  %2868 = vmatpush1.msra.mxu0 0.0
  %2869 = vmatprep.subr.mxu0 0.0
  %2870 = vmatpush1.msra.mxu0 0.0
  %2871 = vmatprep.subr.mxu0 0.0
  %2872 = vmatpush1.msra.mxu0 0.0
  %2873 = vmatprep.subr.mxu0 0.0
  %2874 = vmatpush1.msra.mxu0 0.0
  %2875 = vmatprep.subr.mxu0 0.0
  %2876 = vmatpush1.msra.mxu0 0.0
  %2877 = vmatprep.subr.mxu0 0.0
  %2878 = vmatpush1.msra.mxu0 0.0
  %2879 = vmatprep.subr.mxu0 0.0
  %2880 = vmatpush1.msra.mxu0 0.0
  %2881 = vmatprep.subr.mxu0 0.0
  %2882 = vmatpush1.msra.mxu0 0.0
  %2883 = vmatprep.subr.mxu0 0.0
  %2884 = vmatpush1.msra.mxu0 0.0
  %2885 = vmatprep.subr.mxu0 0.0
  %2886 = vmatpush1.msra.mxu0 0.0
  %2887 = vmatprep.subr.mxu0 0.0
  %2888 = vmatpush1.msra.mxu0 0.0
  %2889 = vmatprep.subr.mxu0 0.0
  %2890 = vmatpush1.msra.mxu0 0.0
  %2891 = vmatprep.subr.mxu0 0.0
  %2892 = vmatpush1.msra.mxu0 0.0
  %2893 = vmatprep.subr.mxu0 0.0
  %2894 = vmatpush1.msra.mxu0 0.0
  %2895 = vmatprep.subr.mxu0 0.0
  %2896 = vmatpush1.msra.mxu0 0.0
  %2897 = vmatprep.subr.mxu0 0.0
  %2898 = vmatpush1.msra.mxu0 0.0
  %2899 = vmatprep.subr.mxu0 0.0
  %2900 = vmatpush1.msra.mxu0 0.0
  %2901 = vmatprep.subr.mxu0 0.0
  %2902 = vmatpush1.msra.mxu0 0.0
  %2903 = vmatprep.subr.mxu0 0.0
  %2904 = vmatpush1.msra.mxu0 0.0
  %2905 = vmatprep.subr.mxu0 0.0
  %2906 = vmatpush1.msra.mxu0 0.0
  %2907 = vmatprep.subr.mxu0 0.0
  %2908 = vmatpush1.msra.mxu0 0.0
  %2909 = vmatprep.mubr.f32.mxu0 0.0
  %2910 = vmatmul.mubr.f32.gmra.mrb[0].mxu0 %v2603
  %v2911 = vpop.f32.mrb[0].mxu0
  %v2912 = vadd.f32 0.0, %v2911
  %v2913 = vpop.f32.mrb[0].mxu0
  %2914 = vdwg.mxu0
  %v2915 = vadd.f32 %v2840, %v2912
  %v2916 = vmul.f32 %v2915, 0.5
  %v2917 = vtanh.pop %v2916
  %v2918 = vmul.f32 %v2917, 0.5
  %v2919 = vadd.f32 %v2918, 0.5
  %v2920 = vmul.f32 %v2760, %v2260
  %v2921 = vmul.f32 %v2679, %v2838
  %v2922 = vadd.f32 %v2920, %v2921
  %v2923 = vtanh.pop %v2922
  %v2924 = vmul.f32 %v2919, %v2923
  %s2925 = scalar_lea.vmem %s64, 8
  %2926 = vst.msk [vmem:[%s2925] sm:$0xff] %vm91, %v2924
  %s2927 = scalar_lea.vmem [#allocation2], 24
  %v2928 = vld [vmem:[%s2927] sm:$0xff]
  %v2929 = vld [vmem:[%s4] sm:$0xff]
  %v2930 = vld [vmem:[%s4 + $0x8] sm:$0xff]
  %v2931 = vld [vmem:[%s4 + $0x10] sm:$0xff]
  %v2932 = vld [vmem:[%s4 + $0x18] sm:$0xff]
  %v2934 = vsel %vm91, %v2593, 0
  %2936 = vmatprep.subr.mxu0 0.0
  %2937 = vmatpush1.msra.mxu0 %v2929
  %2938 = vmatprep.subr.mxu0 0.0
  %2939 = vmatpush1.msra.mxu0 %v2930
  %2940 = vmatprep.subr.mxu0 0.0
  %2941 = vmatpush1.msra.mxu0 %v2931
  %2942 = vmatprep.subr.mxu0 0.0
  %2943 = vmatpush1.msra.mxu0 %v2932
  %2944 = vmatprep.subr.mxu0 0.0
  %2945 = vmatpush1.msra.mxu0 0.0
  %2946 = vmatprep.subr.mxu0 0.0
  %2947 = vmatpush1.msra.mxu0 0.0
  %2948 = vmatprep.subr.mxu0 0.0
  %2949 = vmatpush1.msra.mxu0 0.0
  %2950 = vmatprep.subr.mxu0 0.0
  %2951 = vmatpush1.msra.mxu0 0.0
  %2952 = vmatprep.subr.mxu0 0.0
  %2953 = vmatpush1.msra.mxu0 0.0
  %2954 = vmatprep.subr.mxu0 0.0
  %2955 = vmatpush1.msra.mxu0 0.0
  %2956 = vmatprep.subr.mxu0 0.0
  %2957 = vmatpush1.msra.mxu0 0.0
  %2958 = vmatprep.subr.mxu0 0.0
  %2959 = vmatpush1.msra.mxu0 0.0
  %2960 = vmatprep.subr.mxu0 0.0
  %2961 = vmatpush1.msra.mxu0 0.0
  %2962 = vmatprep.subr.mxu0 0.0
  %2963 = vmatpush1.msra.mxu0 0.0
  %2964 = vmatprep.subr.mxu0 0.0
  %2965 = vmatpush1.msra.mxu0 0.0
  %2966 = vmatprep.subr.mxu0 0.0
  %2967 = vmatpush1.msra.mxu0 0.0
  %2968 = vmatprep.subr.mxu0 0.0
  %2969 = vmatpush1.msra.mxu0 0.0
  %2970 = vmatprep.subr.mxu0 0.0
  %2971 = vmatpush1.msra.mxu0 0.0
  %2972 = vmatprep.subr.mxu0 0.0
  %2973 = vmatpush1.msra.mxu0 0.0
  %2974 = vmatprep.subr.mxu0 0.0
  %2975 = vmatpush1.msra.mxu0 0.0
  %2976 = vmatprep.subr.mxu0 0.0
  %2977 = vmatpush1.msra.mxu0 0.0
  %2978 = vmatprep.subr.mxu0 0.0
  %2979 = vmatpush1.msra.mxu0 0.0
  %2980 = vmatprep.subr.mxu0 0.0
  %2981 = vmatpush1.msra.mxu0 0.0
  %2982 = vmatprep.subr.mxu0 0.0
  %2983 = vmatpush1.msra.mxu0 0.0
  %2984 = vmatprep.subr.mxu0 0.0
  %2985 = vmatpush1.msra.mxu0 0.0
  %2986 = vmatprep.subr.mxu0 0.0
  %2987 = vmatpush1.msra.mxu0 0.0
  %2988 = vmatprep.subr.mxu0 0.0
  %2989 = vmatpush1.msra.mxu0 0.0
  %2990 = vmatprep.subr.mxu0 0.0
  %2991 = vmatpush1.msra.mxu0 0.0
  %2992 = vmatprep.subr.mxu0 0.0
  %2993 = vmatpush1.msra.mxu0 0.0
  %2994 = vmatprep.subr.mxu0 0.0
  %2995 = vmatpush1.msra.mxu0 0.0
  %2996 = vmatprep.subr.mxu0 0.0
  %2997 = vmatpush1.msra.mxu0 0.0
  %2998 = vmatprep.subr.mxu0 0.0
  %2999 = vmatpush1.msra.mxu0 0.0
  %3000 = vmatprep.mubr.f32.mxu0 0.0
  %3001 = vmatmul.mubr.f32.gmra.mrb[0].mxu0 %v2934
  %v3002 = vpop.f32.mrb[0].mxu0
  %v3003 = vadd.f32 0.0, %v3002
  %v3004 = vpop.f32.mrb[0].mxu0
  %3005 = vdwg.mxu0
  %v3006 = vadd.f32 %v2928, %v3003
  %v3007 = vmul.f32 %v3006, 0.5
  %v3008 = vtanh.pop %v3007
  %v3009 = vmul.f32 %v3008, 0.5
  %v3010 = vadd.f32 %v3009, 0.5
  %s3011 = scalar_lea.vmem [#allocation2], %s1344
  %v3012 = vld [vmem:[%s3011] sm:$0xff]
  %v3013 = vld [vmem:[%s1011] sm:$0xff]
  %v3014 = vld [vmem:[%s1011 + $0x8] sm:$0xff]
  %v3015 = vld [vmem:[%s1011 + $0x10] sm:$0xff]
  %v3016 = vld [vmem:[%s1011 + $0x18] sm:$0xff]
  %3017 = vmatprep.subr.mxu0 0.0
  %3018 = vmatpush1.msra.mxu0 %v3013
  %3019 = vmatprep.subr.mxu0 0.0
  %3020 = vmatpush1.msra.mxu0 %v3014
  %3021 = vmatprep.subr.mxu0 0.0
  %3022 = vmatpush1.msra.mxu0 %v3015
  %3023 = vmatprep.subr.mxu0 0.0
  %3024 = vmatpush1.msra.mxu0 %v3016
  %3025 = vmatprep.subr.mxu0 0.0
  %3026 = vmatpush1.msra.mxu0 0.0
  %3027 = vmatprep.subr.mxu0 0.0
  %3028 = vmatpush1.msra.mxu0 0.0
  %3029 = vmatprep.subr.mxu0 0.0
  %3030 = vmatpush1.msra.mxu0 0.0
  %3031 = vmatprep.subr.mxu0 0.0
  %3032 = vmatpush1.msra.mxu0 0.0
  %3033 = vmatprep.subr.mxu0 0.0
  %3034 = vmatpush1.msra.mxu0 0.0
  %3035 = vmatprep.subr.mxu0 0.0
  %3036 = vmatpush1.msra.mxu0 0.0
  %3037 = vmatprep.subr.mxu0 0.0
  %3038 = vmatpush1.msra.mxu0 0.0
  %3039 = vmatprep.subr.mxu0 0.0
  %3040 = vmatpush1.msra.mxu0 0.0
  %3041 = vmatprep.subr.mxu0 0.0
  %3042 = vmatpush1.msra.mxu0 0.0
  %3043 = vmatprep.subr.mxu0 0.0
  %3044 = vmatpush1.msra.mxu0 0.0
  %3045 = vmatprep.subr.mxu0 0.0
  %3046 = vmatpush1.msra.mxu0 0.0
  %3047 = vmatprep.subr.mxu0 0.0
  %3048 = vmatpush1.msra.mxu0 0.0
  %3049 = vmatprep.subr.mxu0 0.0
  %3050 = vmatpush1.msra.mxu0 0.0
  %3051 = vmatprep.subr.mxu0 0.0
  %3052 = vmatpush1.msra.mxu0 0.0
  %3053 = vmatprep.subr.mxu0 0.0
  %3054 = vmatpush1.msra.mxu0 0.0
  %3055 = vmatprep.subr.mxu0 0.0
  %3056 = vmatpush1.msra.mxu0 0.0
  %3057 = vmatprep.subr.mxu0 0.0
  %3058 = vmatpush1.msra.mxu0 0.0
  %3059 = vmatprep.subr.mxu0 0.0
  %3060 = vmatpush1.msra.mxu0 0.0
  %3061 = vmatprep.subr.mxu0 0.0
  %3062 = vmatpush1.msra.mxu0 0.0
  %3063 = vmatprep.subr.mxu0 0.0
  %3064 = vmatpush1.msra.mxu0 0.0
  %3065 = vmatprep.subr.mxu0 0.0
  %3066 = vmatpush1.msra.mxu0 0.0
  %3067 = vmatprep.subr.mxu0 0.0
  %3068 = vmatpush1.msra.mxu0 0.0
  %3069 = vmatprep.subr.mxu0 0.0
  %3070 = vmatpush1.msra.mxu0 0.0
  %3071 = vmatprep.subr.mxu0 0.0
  %3072 = vmatpush1.msra.mxu0 0.0
  %3073 = vmatprep.subr.mxu0 0.0
  %3074 = vmatpush1.msra.mxu0 0.0
  %3075 = vmatprep.subr.mxu0 0.0
  %3076 = vmatpush1.msra.mxu0 0.0
  %3077 = vmatprep.subr.mxu0 0.0
  %3078 = vmatpush1.msra.mxu0 0.0
  %3079 = vmatprep.subr.mxu0 0.0
  %3080 = vmatpush1.msra.mxu0 0.0
  %3081 = vmatprep.mubr.f32.mxu0 0.0
  %3082 = vmatmul.mubr.f32.gmra.mrb[0].mxu0 %v2934
  %v3083 = vpop.f32.mrb[0].mxu0
  %v3084 = vadd.f32 0.0, %v3083
  %v3085 = vpop.f32.mrb[0].mxu0
  %3086 = vdwg.mxu0
  %v3087 = vadd.f32 %v3012, %v3084
  %v3088 = vmul.f32 %v3087, 0.5
  %v3089 = vtanh.pop %v3088
  %v3090 = vmul.f32 %v3089, 0.5
  %v3091 = vadd.f32 %v3090, 0.5
  %s3092 = scalar_lea.vmem [#allocation2], %s1427
  %v3093 = vld [vmem:[%s3092] sm:$0xff]
  %v3094 = vld [vmem:[%s1094] sm:$0xff]
  %v3095 = vld [vmem:[%s1094 + $0x8] sm:$0xff]
  %v3096 = vld [vmem:[%s1094 + $0x10] sm:$0xff]
  %v3097 = vld [vmem:[%s1094 + $0x18] sm:$0xff]
  %3098 = vmatprep.subr.mxu0 0.0
  %3099 = vmatpush1.msra.mxu0 %v3094
  %3100 = vmatprep.subr.mxu0 0.0
  %3101 = vmatpush1.msra.mxu0 %v3095
  %3102 = vmatprep.subr.mxu0 0.0
  %3103 = vmatpush1.msra.mxu0 %v3096
  %3104 = vmatprep.subr.mxu0 0.0
  %3105 = vmatpush1.msra.mxu0 %v3097
  %3106 = vmatprep.subr.mxu0 0.0
  %3107 = vmatpush1.msra.mxu0 0.0
  %3108 = vmatprep.subr.mxu0 0.0
  %3109 = vmatpush1.msra.mxu0 0.0
  %3110 = vmatprep.subr.mxu0 0.0
  %3111 = vmatpush1.msra.mxu0 0.0
  %3112 = vmatprep.subr.mxu0 0.0
  %3113 = vmatpush1.msra.mxu0 0.0
  %3114 = vmatprep.subr.mxu0 0.0
  %3115 = vmatpush1.msra.mxu0 0.0
  %3116 = vmatprep.subr.mxu0 0.0
  %3117 = vmatpush1.msra.mxu0 0.0
  %3118 = vmatprep.subr.mxu0 0.0
  %3119 = vmatpush1.msra.mxu0 0.0
  %3120 = vmatprep.subr.mxu0 0.0
  %3121 = vmatpush1.msra.mxu0 0.0
  %3122 = vmatprep.subr.mxu0 0.0
  %3123 = vmatpush1.msra.mxu0 0.0
  %3124 = vmatprep.subr.mxu0 0.0
  %3125 = vmatpush1.msra.mxu0 0.0
  %3126 = vmatprep.subr.mxu0 0.0
  %3127 = vmatpush1.msra.mxu0 0.0
  %3128 = vmatprep.subr.mxu0 0.0
  %3129 = vmatpush1.msra.mxu0 0.0
  %3130 = vmatprep.subr.mxu0 0.0
  %3131 = vmatpush1.msra.mxu0 0.0
  %3132 = vmatprep.subr.mxu0 0.0
  %3133 = vmatpush1.msra.mxu0 0.0
  %3134 = vmatprep.subr.mxu0 0.0
  %3135 = vmatpush1.msra.mxu0 0.0
  %3136 = vmatprep.subr.mxu0 0.0
  %3137 = vmatpush1.msra.mxu0 0.0
  %3138 = vmatprep.subr.mxu0 0.0
  %3139 = vmatpush1.msra.mxu0 0.0
  %3140 = vmatprep.subr.mxu0 0.0
  %3141 = vmatpush1.msra.mxu0 0.0
  %3142 = vmatprep.subr.mxu0 0.0
  %3143 = vmatpush1.msra.mxu0 0.0
  %3144 = vmatprep.subr.mxu0 0.0
  %3145 = vmatpush1.msra.mxu0 0.0
  %3146 = vmatprep.subr.mxu0 0.0
  %3147 = vmatpush1.msra.mxu0 0.0
  %3148 = vmatprep.subr.mxu0 0.0
  %3149 = vmatpush1.msra.mxu0 0.0
  %3150 = vmatprep.subr.mxu0 0.0
  %3151 = vmatpush1.msra.mxu0 0.0
  %3152 = vmatprep.subr.mxu0 0.0
  %3153 = vmatpush1.msra.mxu0 0.0
  %3154 = vmatprep.subr.mxu0 0.0
  %3155 = vmatpush1.msra.mxu0 0.0
  %3156 = vmatprep.subr.mxu0 0.0
  %3157 = vmatpush1.msra.mxu0 0.0
  %3158 = vmatprep.subr.mxu0 0.0
  %3159 = vmatpush1.msra.mxu0 0.0
  %3160 = vmatprep.subr.mxu0 0.0
  %3161 = vmatpush1.msra.mxu0 0.0
  %3162 = vmatprep.mubr.f32.mxu0 0.0
  %3163 = vmatmul.mubr.f32.gmra.mrb[0].mxu0 %v2934
  %v3164 = vpop.f32.mrb[0].mxu0
  %v3165 = vadd.f32 0.0, %v3164
  %v3166 = vpop.f32.mrb[0].mxu0
  %3167 = vdwg.mxu0
  %v3168 = vadd.f32 %v3093, %v3165
  %v3169 = vtanh.pop %v3168
  %s3170 = scalar_lea.vmem [#allocation2], %s1507
  %v3171 = vld [vmem:[%s3170] sm:$0xff]
  %v3172 = vld [vmem:[%s1174] sm:$0xff]
  %v3173 = vld [vmem:[%s1174 + $0x8] sm:$0xff]
  %v3174 = vld [vmem:[%s1174 + $0x10] sm:$0xff]
  %v3175 = vld [vmem:[%s1174 + $0x18] sm:$0xff]
  %3176 = vmatprep.subr.mxu0 0.0
  %3177 = vmatpush1.msra.mxu0 %v3172
  %3178 = vmatprep.subr.mxu0 0.0
  %3179 = vmatpush1.msra.mxu0 %v3173
  %3180 = vmatprep.subr.mxu0 0.0
  %3181 = vmatpush1.msra.mxu0 %v3174
  %3182 = vmatprep.subr.mxu0 0.0
  %3183 = vmatpush1.msra.mxu0 %v3175
  %3184 = vmatprep.subr.mxu0 0.0
  %3185 = vmatpush1.msra.mxu0 0.0
  %3186 = vmatprep.subr.mxu0 0.0
  %3187 = vmatpush1.msra.mxu0 0.0
  %3188 = vmatprep.subr.mxu0 0.0
  %3189 = vmatpush1.msra.mxu0 0.0
  %3190 = vmatprep.subr.mxu0 0.0
  %3191 = vmatpush1.msra.mxu0 0.0
  %3192 = vmatprep.subr.mxu0 0.0
  %3193 = vmatpush1.msra.mxu0 0.0
  %3194 = vmatprep.subr.mxu0 0.0
  %3195 = vmatpush1.msra.mxu0 0.0
  %3196 = vmatprep.subr.mxu0 0.0
  %3197 = vmatpush1.msra.mxu0 0.0
  %3198 = vmatprep.subr.mxu0 0.0
  %3199 = vmatpush1.msra.mxu0 0.0
  %3200 = vmatprep.subr.mxu0 0.0
  %3201 = vmatpush1.msra.mxu0 0.0
  %3202 = vmatprep.subr.mxu0 0.0
  %3203 = vmatpush1.msra.mxu0 0.0
  %3204 = vmatprep.subr.mxu0 0.0
  %3205 = vmatpush1.msra.mxu0 0.0
  %3206 = vmatprep.subr.mxu0 0.0
  %3207 = vmatpush1.msra.mxu0 0.0
  %3208 = vmatprep.subr.mxu0 0.0
  %3209 = vmatpush1.msra.mxu0 0.0
  %3210 = vmatprep.subr.mxu0 0.0
  %3211 = vmatpush1.msra.mxu0 0.0
  %3212 = vmatprep.subr.mxu0 0.0
  %3213 = vmatpush1.msra.mxu0 0.0
  %3214 = vmatprep.subr.mxu0 0.0
  %3215 = vmatpush1.msra.mxu0 0.0
  %3216 = vmatprep.subr.mxu0 0.0
  %3217 = vmatpush1.msra.mxu0 0.0
  %3218 = vmatprep.subr.mxu0 0.0
  %3219 = vmatpush1.msra.mxu0 0.0
  %3220 = vmatprep.subr.mxu0 0.0
  %3221 = vmatpush1.msra.mxu0 0.0
  %3222 = vmatprep.subr.mxu0 0.0
  %3223 = vmatpush1.msra.mxu0 0.0
  %3224 = vmatprep.subr.mxu0 0.0
  %3225 = vmatpush1.msra.mxu0 0.0
  %3226 = vmatprep.subr.mxu0 0.0
  %3227 = vmatpush1.msra.mxu0 0.0
  %3228 = vmatprep.subr.mxu0 0.0
  %3229 = vmatpush1.msra.mxu0 0.0
  %3230 = vmatprep.subr.mxu0 0.0
  %3231 = vmatpush1.msra.mxu0 0.0
  %3232 = vmatprep.subr.mxu0 0.0
  %3233 = vmatpush1.msra.mxu0 0.0
  %3234 = vmatprep.subr.mxu0 0.0
  %3235 = vmatpush1.msra.mxu0 0.0
  %3236 = vmatprep.subr.mxu0 0.0
  %3237 = vmatpush1.msra.mxu0 0.0
  %3238 = vmatprep.subr.mxu0 0.0
  %3239 = vmatpush1.msra.mxu0 0.0
  %3240 = vmatprep.mubr.f32.mxu0 0.0
  %3241 = vmatmul.mubr.f32.gmra.mrb[0].mxu0 %v2934
  %v3242 = vpop.f32.mrb[0].mxu0
  %v3243 = vadd.f32 0.0, %v3242
  %v3244 = vpop.f32.mrb[0].mxu0
  %3245 = vdwg.mxu0
  %v3246 = vadd.f32 %v3171, %v3243
  %v3247 = vmul.f32 %v3246, 0.5
  %v3248 = vtanh.pop %v3247
  %v3249 = vmul.f32 %v3248, 0.5
  %v3250 = vadd.f32 %v3249, 0.5
  %v3251 = vmul.f32 %v3091, %v2591
  %v3252 = vmul.f32 %v3010, %v3169
  %v3253 = vadd.f32 %v3251, %v3252
  %v3254 = vtanh.pop %v3253
  %v3255 = vmul.f32 %v3250, %v3254
  %s3256 = scalar_lea.vmem %s8, 24
  %3257 = vst.msk [vmem:[%s3256] sm:$0xff] %vm91, %v3255
  %v3258 = vld [vmem:[#allocation3] sm:$0xff]
  %v3259 = vld [vmem:[%s5] sm:$0xff]
  %v3260 = vld [vmem:[%s5 + $0x8] sm:$0xff]
  %v3261 = vld [vmem:[%s5 + $0x10] sm:$0xff]
  %v3262 = vld [vmem:[%s5 + $0x18] sm:$0xff]
  %v3264 = vsel %vm91, %v2924, 0
  %3266 = vmatprep.subr.mxu0 0.0
  %3267 = vmatpush1.msra.mxu0 %v3259
  %3268 = vmatprep.subr.mxu0 0.0
  %3269 = vmatpush1.msra.mxu0 %v3260
  %3270 = vmatprep.subr.mxu0 0.0
  %3271 = vmatpush1.msra.mxu0 %v3261
  %3272 = vmatprep.subr.mxu0 0.0
  %3273 = vmatpush1.msra.mxu0 %v3262
  %3274 = vmatprep.subr.mxu0 0.0
  %3275 = vmatpush1.msra.mxu0 0.0
  %3276 = vmatprep.subr.mxu0 0.0
  %3277 = vmatpush1.msra.mxu0 0.0
  %3278 = vmatprep.subr.mxu0 0.0
  %3279 = vmatpush1.msra.mxu0 0.0
  %3280 = vmatprep.subr.mxu0 0.0
  %3281 = vmatpush1.msra.mxu0 0.0
  %3282 = vmatprep.subr.mxu0 0.0
  %3283 = vmatpush1.msra.mxu0 0.0
  %3284 = vmatprep.subr.mxu0 0.0
  %3285 = vmatpush1.msra.mxu0 0.0
  %3286 = vmatprep.subr.mxu0 0.0
  %3287 = vmatpush1.msra.mxu0 0.0
  %3288 = vmatprep.subr.mxu0 0.0
  %3289 = vmatpush1.msra.mxu0 0.0
  %3290 = vmatprep.subr.mxu0 0.0
  %3291 = vmatpush1.msra.mxu0 0.0
  %3292 = vmatprep.subr.mxu0 0.0
  %3293 = vmatpush1.msra.mxu0 0.0
  %3294 = vmatprep.subr.mxu0 0.0
  %3295 = vmatpush1.msra.mxu0 0.0
  %3296 = vmatprep.subr.mxu0 0.0
  %3297 = vmatpush1.msra.mxu0 0.0
  %3298 = vmatprep.subr.mxu0 0.0
  %3299 = vmatpush1.msra.mxu0 0.0
  %3300 = vmatprep.subr.mxu0 0.0
  %3301 = vmatpush1.msra.mxu0 0.0
  %3302 = vmatprep.subr.mxu0 0.0
  %3303 = vmatpush1.msra.mxu0 0.0
  %3304 = vmatprep.subr.mxu0 0.0
  %3305 = vmatpush1.msra.mxu0 0.0
  %3306 = vmatprep.subr.mxu0 0.0
  %3307 = vmatpush1.msra.mxu0 0.0
  %3308 = vmatprep.subr.mxu0 0.0
  %3309 = vmatpush1.msra.mxu0 0.0
  %3310 = vmatprep.subr.mxu0 0.0
  %3311 = vmatpush1.msra.mxu0 0.0
  %3312 = vmatprep.subr.mxu0 0.0
  %3313 = vmatpush1.msra.mxu0 0.0
  %3314 = vmatprep.subr.mxu0 0.0
  %3315 = vmatpush1.msra.mxu0 0.0
  %3316 = vmatprep.subr.mxu0 0.0
  %3317 = vmatpush1.msra.mxu0 0.0
  %3318 = vmatprep.subr.mxu0 0.0
  %3319 = vmatpush1.msra.mxu0 0.0
  %3320 = vmatprep.subr.mxu0 0.0
  %3321 = vmatpush1.msra.mxu0 0.0
  %3322 = vmatprep.subr.mxu0 0.0
  %3323 = vmatpush1.msra.mxu0 0.0
  %3324 = vmatprep.subr.mxu0 0.0
  %3325 = vmatpush1.msra.mxu0 0.0
  %3326 = vmatprep.subr.mxu0 0.0
  %3327 = vmatpush1.msra.mxu0 0.0
  %3328 = vmatprep.subr.mxu0 0.0
  %3329 = vmatpush1.msra.mxu0 0.0
  %3330 = vmatprep.mubr.f32.mxu0 0.0
  %3331 = vmatmul.mubr.f32.gmra.mrb[0].mxu0 %v3264
  %v3332 = vpop.f32.mrb[0].mxu0
  %v3333 = vadd.f32 0.0, %v3332
  %v3334 = vpop.f32.mrb[0].mxu0
  %3335 = vdwg.mxu0
  %v3336 = vadd.f32 %v3258, %v3333
  %v3337 = vmul.f32 %v3336, 0.5
  %v3338 = vtanh.pop %v3337
  %v3339 = vmul.f32 %v3338, 0.5
  %v3340 = vadd.f32 %v3339, 0.5
  %s3341 = scalar_lea.vmem [#allocation3], %s1008
  %v3342 = vld [vmem:[%s3341] sm:$0xff]
  %v3343 = vld [vmem:[%s1347] sm:$0xff]
  %v3344 = vld [vmem:[%s1347 + $0x8] sm:$0xff]
  %v3345 = vld [vmem:[%s1347 + $0x10] sm:$0xff]
  %v3346 = vld [vmem:[%s1347 + $0x18] sm:$0xff]
  %3347 = vmatprep.subr.mxu0 0.0
  %3348 = vmatpush1.msra.mxu0 %v3343
  %3349 = vmatprep.subr.mxu0 0.0
  %3350 = vmatpush1.msra.mxu0 %v3344
  %3351 = vmatprep.subr.mxu0 0.0
  %3352 = vmatpush1.msra.mxu0 %v3345
  %3353 = vmatprep.subr.mxu0 0.0
  %3354 = vmatpush1.msra.mxu0 %v3346
  %3355 = vmatprep.subr.mxu0 0.0
  %3356 = vmatpush1.msra.mxu0 0.0
  %3357 = vmatprep.subr.mxu0 0.0
  %3358 = vmatpush1.msra.mxu0 0.0
  %3359 = vmatprep.subr.mxu0 0.0
  %3360 = vmatpush1.msra.mxu0 0.0
  %3361 = vmatprep.subr.mxu0 0.0
  %3362 = vmatpush1.msra.mxu0 0.0
  %3363 = vmatprep.subr.mxu0 0.0
  %3364 = vmatpush1.msra.mxu0 0.0
  %3365 = vmatprep.subr.mxu0 0.0
  %3366 = vmatpush1.msra.mxu0 0.0
  %3367 = vmatprep.subr.mxu0 0.0
  %3368 = vmatpush1.msra.mxu0 0.0
  %3369 = vmatprep.subr.mxu0 0.0
  %3370 = vmatpush1.msra.mxu0 0.0
  %3371 = vmatprep.subr.mxu0 0.0
  %3372 = vmatpush1.msra.mxu0 0.0
  %3373 = vmatprep.subr.mxu0 0.0
  %3374 = vmatpush1.msra.mxu0 0.0
  %3375 = vmatprep.subr.mxu0 0.0
  %3376 = vmatpush1.msra.mxu0 0.0
  %3377 = vmatprep.subr.mxu0 0.0
  %3378 = vmatpush1.msra.mxu0 0.0
  %3379 = vmatprep.subr.mxu0 0.0
  %3380 = vmatpush1.msra.mxu0 0.0
  %3381 = vmatprep.subr.mxu0 0.0
  %3382 = vmatpush1.msra.mxu0 0.0
  %3383 = vmatprep.subr.mxu0 0.0
  %3384 = vmatpush1.msra.mxu0 0.0
  %3385 = vmatprep.subr.mxu0 0.0
  %3386 = vmatpush1.msra.mxu0 0.0
  %3387 = vmatprep.subr.mxu0 0.0
  %3388 = vmatpush1.msra.mxu0 0.0
  %3389 = vmatprep.subr.mxu0 0.0
  %3390 = vmatpush1.msra.mxu0 0.0
  %3391 = vmatprep.subr.mxu0 0.0
  %3392 = vmatpush1.msra.mxu0 0.0
  %3393 = vmatprep.subr.mxu0 0.0
  %3394 = vmatpush1.msra.mxu0 0.0
  %3395 = vmatprep.subr.mxu0 0.0
  %3396 = vmatpush1.msra.mxu0 0.0
  %3397 = vmatprep.subr.mxu0 0.0
  %3398 = vmatpush1.msra.mxu0 0.0
  %3399 = vmatprep.subr.mxu0 0.0
  %3400 = vmatpush1.msra.mxu0 0.0
  %3401 = vmatprep.subr.mxu0 0.0
  %3402 = vmatpush1.msra.mxu0 0.0
  %3403 = vmatprep.subr.mxu0 0.0
  %3404 = vmatpush1.msra.mxu0 0.0
  %3405 = vmatprep.subr.mxu0 0.0
  %3406 = vmatpush1.msra.mxu0 0.0
  %3407 = vmatprep.subr.mxu0 0.0
  %3408 = vmatpush1.msra.mxu0 0.0
  %3409 = vmatprep.subr.mxu0 0.0
  %3410 = vmatpush1.msra.mxu0 0.0
  %3411 = vmatprep.mubr.f32.mxu0 0.0
  %3412 = vmatmul.mubr.f32.gmra.mrb[0].mxu0 %v3264
  %v3413 = vpop.f32.mrb[0].mxu0
  %v3414 = vadd.f32 0.0, %v3413
  %v3415 = vpop.f32.mrb[0].mxu0
  %3416 = vdwg.mxu0
  %v3417 = vadd.f32 %v3342, %v3414
  %v3418 = vmul.f32 %v3417, 0.5
  %v3419 = vtanh.pop %v3418
  %v3420 = vmul.f32 %v3419, 0.5
  %v3421 = vadd.f32 %v3420, 0.5
  %s3422 = scalar_lea.vmem [#allocation3], %s1091
  %v3423 = vld [vmem:[%s3422] sm:$0xff]
  %v3424 = vld [vmem:[%s1430] sm:$0xff]
  %v3425 = vld [vmem:[%s1430 + $0x8] sm:$0xff]
  %v3426 = vld [vmem:[%s1430 + $0x10] sm:$0xff]
  %v3427 = vld [vmem:[%s1430 + $0x18] sm:$0xff]
  %3428 = vmatprep.subr.mxu0 0.0
  %3429 = vmatpush1.msra.mxu0 %v3424
  %3430 = vmatprep.subr.mxu0 0.0
  %3431 = vmatpush1.msra.mxu0 %v3425
  %3432 = vmatprep.subr.mxu0 0.0
  %3433 = vmatpush1.msra.mxu0 %v3426
  %3434 = vmatprep.subr.mxu0 0.0
  %3435 = vmatpush1.msra.mxu0 %v3427
  %3436 = vmatprep.subr.mxu0 0.0
  %3437 = vmatpush1.msra.mxu0 0.0
  %3438 = vmatprep.subr.mxu0 0.0
  %3439 = vmatpush1.msra.mxu0 0.0
  %3440 = vmatprep.subr.mxu0 0.0
  %3441 = vmatpush1.msra.mxu0 0.0
  %3442 = vmatprep.subr.mxu0 0.0
  %3443 = vmatpush1.msra.mxu0 0.0
  %3444 = vmatprep.subr.mxu0 0.0
  %3445 = vmatpush1.msra.mxu0 0.0
  %3446 = vmatprep.subr.mxu0 0.0
  %3447 = vmatpush1.msra.mxu0 0.0
  %3448 = vmatprep.subr.mxu0 0.0
  %3449 = vmatpush1.msra.mxu0 0.0
  %3450 = vmatprep.subr.mxu0 0.0
  %3451 = vmatpush1.msra.mxu0 0.0
  %3452 = vmatprep.subr.mxu0 0.0
  %3453 = vmatpush1.msra.mxu0 0.0
  %3454 = vmatprep.subr.mxu0 0.0
  %3455 = vmatpush1.msra.mxu0 0.0
  %3456 = vmatprep.subr.mxu0 0.0
  %3457 = vmatpush1.msra.mxu0 0.0
  %3458 = vmatprep.subr.mxu0 0.0
  %3459 = vmatpush1.msra.mxu0 0.0
  %3460 = vmatprep.subr.mxu0 0.0
  %3461 = vmatpush1.msra.mxu0 0.0
  %3462 = vmatprep.subr.mxu0 0.0
  %3463 = vmatpush1.msra.mxu0 0.0
  %3464 = vmatprep.subr.mxu0 0.0
  %3465 = vmatpush1.msra.mxu0 0.0
  %3466 = vmatprep.subr.mxu0 0.0
  %3467 = vmatpush1.msra.mxu0 0.0
  %3468 = vmatprep.subr.mxu0 0.0
  %3469 = vmatpush1.msra.mxu0 0.0
  %3470 = vmatprep.subr.mxu0 0.0
  %3471 = vmatpush1.msra.mxu0 0.0
  %3472 = vmatprep.subr.mxu0 0.0
  %3473 = vmatpush1.msra.mxu0 0.0
  %3474 = vmatprep.subr.mxu0 0.0
  %3475 = vmatpush1.msra.mxu0 0.0
  %3476 = vmatprep.subr.mxu0 0.0
  %3477 = vmatpush1.msra.mxu0 0.0
  %3478 = vmatprep.subr.mxu0 0.0
  %3479 = vmatpush1.msra.mxu0 0.0
  %3480 = vmatprep.subr.mxu0 0.0
  %3481 = vmatpush1.msra.mxu0 0.0
  %3482 = vmatprep.subr.mxu0 0.0
  %3483 = vmatpush1.msra.mxu0 0.0
  %3484 = vmatprep.subr.mxu0 0.0
  %3485 = vmatpush1.msra.mxu0 0.0
  %3486 = vmatprep.subr.mxu0 0.0
  %3487 = vmatpush1.msra.mxu0 0.0
  %3488 = vmatprep.subr.mxu0 0.0
  %3489 = vmatpush1.msra.mxu0 0.0
  %3490 = vmatprep.subr.mxu0 0.0
  %3491 = vmatpush1.msra.mxu0 0.0
  %3492 = vmatprep.mubr.f32.mxu0 0.0
  %3493 = vmatmul.mubr.f32.gmra.mrb[0].mxu0 %v3264
  %v3494 = vpop.f32.mrb[0].mxu0
  %v3495 = vadd.f32 0.0, %v3494
  %v3496 = vpop.f32.mrb[0].mxu0
  %3497 = vdwg.mxu0
  %v3498 = vadd.f32 %v3423, %v3495
  %v3499 = vtanh.pop %v3498
  %s3500 = scalar_lea.vmem [#allocation3], %s1171
  %v3501 = vld [vmem:[%s3500] sm:$0xff]
  %v3502 = vld [vmem:[%s1510] sm:$0xff]
  %v3503 = vld [vmem:[%s1510 + $0x8] sm:$0xff]
  %v3504 = vld [vmem:[%s1510 + $0x10] sm:$0xff]
  %v3505 = vld [vmem:[%s1510 + $0x18] sm:$0xff]
  %3506 = vmatprep.subr.mxu0 0.0
  %3507 = vmatpush1.msra.mxu0 %v3502
  %3508 = vmatprep.subr.mxu0 0.0
  %3509 = vmatpush1.msra.mxu0 %v3503
  %3510 = vmatprep.subr.mxu0 0.0
  %3511 = vmatpush1.msra.mxu0 %v3504
  %3512 = vmatprep.subr.mxu0 0.0
  %3513 = vmatpush1.msra.mxu0 %v3505
  %3514 = vmatprep.subr.mxu0 0.0
  %3515 = vmatpush1.msra.mxu0 0.0
  %3516 = vmatprep.subr.mxu0 0.0
  %3517 = vmatpush1.msra.mxu0 0.0
  %3518 = vmatprep.subr.mxu0 0.0
  %3519 = vmatpush1.msra.mxu0 0.0
  %3520 = vmatprep.subr.mxu0 0.0
  %3521 = vmatpush1.msra.mxu0 0.0
  %3522 = vmatprep.subr.mxu0 0.0
  %3523 = vmatpush1.msra.mxu0 0.0
  %3524 = vmatprep.subr.mxu0 0.0
  %3525 = vmatpush1.msra.mxu0 0.0
  %3526 = vmatprep.subr.mxu0 0.0
  %3527 = vmatpush1.msra.mxu0 0.0
  %3528 = vmatprep.subr.mxu0 0.0
  %3529 = vmatpush1.msra.mxu0 0.0
  %3530 = vmatprep.subr.mxu0 0.0
  %3531 = vmatpush1.msra.mxu0 0.0
  %3532 = vmatprep.subr.mxu0 0.0
  %3533 = vmatpush1.msra.mxu0 0.0
  %3534 = vmatprep.subr.mxu0 0.0
  %3535 = vmatpush1.msra.mxu0 0.0
  %3536 = vmatprep.subr.mxu0 0.0
  %3537 = vmatpush1.msra.mxu0 0.0
  %3538 = vmatprep.subr.mxu0 0.0
  %3539 = vmatpush1.msra.mxu0 0.0
  %3540 = vmatprep.subr.mxu0 0.0
  %3541 = vmatpush1.msra.mxu0 0.0
  %3542 = vmatprep.subr.mxu0 0.0
  %3543 = vmatpush1.msra.mxu0 0.0
  %3544 = vmatprep.subr.mxu0 0.0
  %3545 = vmatpush1.msra.mxu0 0.0
  %3546 = vmatprep.subr.mxu0 0.0
  %3547 = vmatpush1.msra.mxu0 0.0
  %3548 = vmatprep.subr.mxu0 0.0
  %3549 = vmatpush1.msra.mxu0 0.0
  %3550 = vmatprep.subr.mxu0 0.0
  %3551 = vmatpush1.msra.mxu0 0.0
  %3552 = vmatprep.subr.mxu0 0.0
  %3553 = vmatpush1.msra.mxu0 0.0
  %3554 = vmatprep.subr.mxu0 0.0
  %3555 = vmatpush1.msra.mxu0 0.0
  %3556 = vmatprep.subr.mxu0 0.0
  %3557 = vmatpush1.msra.mxu0 0.0
  %3558 = vmatprep.subr.mxu0 0.0
  %3559 = vmatpush1.msra.mxu0 0.0
  %3560 = vmatprep.subr.mxu0 0.0
  %3561 = vmatpush1.msra.mxu0 0.0
  %3562 = vmatprep.subr.mxu0 0.0
  %3563 = vmatpush1.msra.mxu0 0.0
  %3564 = vmatprep.subr.mxu0 0.0
  %3565 = vmatpush1.msra.mxu0 0.0
  %3566 = vmatprep.subr.mxu0 0.0
  %3567 = vmatpush1.msra.mxu0 0.0
  %3568 = vmatprep.subr.mxu0 0.0
  %3569 = vmatpush1.msra.mxu0 0.0
  %3570 = vmatprep.mubr.f32.mxu0 0.0
  %3571 = vmatmul.mubr.f32.gmra.mrb[0].mxu0 %v3264
  %v3572 = vpop.f32.mrb[0].mxu0
  %v3573 = vadd.f32 0.0, %v3572
  %v3574 = vpop.f32.mrb[0].mxu0
  %3575 = vdwg.mxu0
  %v3576 = vadd.f32 %v3501, %v3573
  %v3577 = vmul.f32 %v3576, 0.5
  %v3578 = vtanh.pop %v3577
  %v3579 = vmul.f32 %v3578, 0.5
  %v3580 = vadd.f32 %v3579, 0.5
  %v3581 = vmul.f32 %v3421, %v2922
  %v3582 = vmul.f32 %v3340, %v3499
  %v3583 = vadd.f32 %v3581, %v3582
  %v3584 = vtanh.pop %v3583
  %v3585 = vmul.f32 %v3580, %v3584
  %3586 = vst.msk [vmem:[%s64] sm:$0xff] %vm91, %v3585
  %3587 = vst.msk [vmem:[#allocation4] sm:$0xff] %vm91, %v3255
  %3588 = vst.msk [vmem:[#allocation5] sm:$0xff] %vm91, %v3253
  %3589 = vst.msk [vmem:[#allocation6] sm:$0xff] %vm91, %v3585
  %3590 = vst.msk [vmem:[#allocation7] sm:$0xff] %vm91, %v3583
  %s3591 = ssub.s32 0, 0
  %s3592 = smul.u32 4, %s3591
  %p3593 = scmp.lt.s32.totalorder %s3592, 3
  %s3594 = scalar_select %p3593, %s3592, 3
  %s3595 = smul.addr %s3594, 8
  %s3596 = scalar_lea.vmem %s9, %s3595
  // Predicated region
  $region38: #{pblstm_forward.1} parent=0 // pred_check
    _
  $region39: #{pblstm_forward.1} parent=0 // pred_check_branch
    %3598 = sbr.rel (0) target = $region41
  $region40: #{pblstm_forward.1} parent=0 // pred_region
    _
  $region41: #{pblstm_forward.1} parent=0 // pred_fallthru
    _
  // Predicated region
  $region42: #{pblstm_forward.1} parent=0 // pred_check
    _
  $region43: #{pblstm_forward.1} parent=0 // pred_check_branch
    %3600 = sbr.rel (0) target = $region45
  $region44: #{pblstm_forward.1} parent=0 // pred_region
    %s3601 = ssub.s32 0, 0
    %s3602 = smul.u32 4, %s3601
  $region45: #{pblstm_forward.1} parent=0 // pred_fallthru
    _
  // Predicated region
  $region46: #{pblstm_forward.1} parent=0 // pred_check
    _
  $region47: #{pblstm_forward.1} parent=0 // pred_check_branch
    %3604 = sbr.rel (0) target = $region49
  $region48: #{pblstm_forward.1} parent=0 // pred_region
    _
  $region49: #{pblstm_forward.1} parent=0 // pred_fallthru
    _
  // Predicated region
  $region50: #{pblstm_forward.1} parent=0 // pred_check
    _
  $region51: #{pblstm_forward.1} parent=0 // pred_check_branch
    %3606 = sbr.rel (0) target = $region53
  $region52: #{pblstm_forward.1} parent=0 // pred_region
    %s3607 = ssub.s32 0, 0
    %s3608 = smul.u32 4, %s3607
    %p3609 = scmp.lt.s32.totalorder %s3608, 3
    %s3610 = scalar_select %p3609, %s3608, 3
    %s3611 = smul.addr %s3610, 8
    %s3612 = scalar_lea.vmem %s9, %s3611
  $region53: #{pblstm_forward.1} parent=0 // pred_fallthru
    _

</llo_original>
